<compile_context>
chip_gen: v7x
topology: tpu7x:2x2x1
jax: 0.10.0
libtpu: 0.0.40
codegen_flags: <defaults>
</compile_context>

<pallas_src>
import functools

import jax
import jax.numpy as jnp
from jax.experimental import pallas as pl
from jax.experimental.pallas import tpu as pltpu

EPS = 1e-5      # nn.BatchNorm3d default eps
IEPS = 0.1      # bn_ieps passed by IConvMod
SLOPE = 0.01    # nn.LeakyReLU default negative_slope

_VMEM_LIMIT = 48 * 1024 * 1024   # explicit scoped-VMEM cap (safe on v5e/v6e/v7x)


# ----------------------------- conv3d kernels -----------------------------

def _conv_taps(x_refs, w_ref):
    """3x3x3 conv on one (n, d) output slab.

    x_refs: three depth-tap refs, each block (1, 1, H+2, W+2, Cin) bf16.
    w_ref:  (3, 3, 3, Cin, Cout) bf16 (resident in VMEM).
    Returns the (H*W, Cout) float32 accumulator.
    """
    Hp, Wp, Cin = x_refs[0].shape[2], x_refs[0].shape[3], x_refs[0].shape[4]
    H, W = Hp - 2, Wp - 2
    Cout = w_ref.shape[-1]
    acc = jnp.zeros((H * W, Cout), jnp.float32)
    for kd in range(3):
        xs = x_refs[kd][0, 0]                                  # (Hp, Wp, Cin) bf16
        for kh in range(3):
            for kw in range(3):
                patch = xs[kh:kh + H, kw:kw + W, :].reshape(H * W, Cin)
                acc = acc + jnp.dot(patch, w_ref[kd, kh, kw],
                                    preferred_element_type=jnp.float32)
    return acc


def _conv_kernel(x0_ref, x1_ref, x2_ref, w_ref, o_ref):
    o_ref[0, 0] = _conv_taps((x0_ref, x1_ref, x2_ref), w_ref)


def _conv_skip_kernel(x0_ref, x1_ref, x2_ref, w_ref, s_ref, o_ref):
    # Residual (RevBlock) addition fused into the conv epilogue.
    o_ref[0, 0] = s_ref[0, 0] + _conv_taps((x0_ref, x1_ref, x2_ref), w_ref)


def conv3d_same(x, w, skip=None):
    """3x3x3 'same' conv, stride 1, no bias (cross-correlation, as torch Conv3d),
    with an optional fused residual add.

    x:    (N, D, H, W, Cin) float32
    w:    (Cout, Cin, 3, 3, 3) float32 (torch layout)
    skip: optional (N, D, H, W, Cout) float32, added to the conv output.
    Returns (N, D, H, W, Cout) float32.
    """
    N, D, H, W, Cin = x.shape
    Cout = w.shape[0]
    Hp, Wp = H + 2, W + 2

    # bf16 operands for the MXU (f32 accumulation inside the kernel).
    xp = jnp.pad(x.astype(jnp.bfloat16),
                 ((0, 0), (1, 1), (1, 1), (1, 1), (0, 0)))        # (N, D+2, Hp, Wp, Cin)
    w_t = jnp.transpose(w, (2, 3, 4, 1, 0)).astype(jnp.bfloat16)  # (3, 3, 3, Cin, Cout)

    in_specs = [
        pl.BlockSpec((1, 1, Hp, Wp, Cin), lambda n, d: (n, d, 0, 0, 0)),
        pl.BlockSpec((1, 1, Hp, Wp, Cin), lambda n, d: (n, d + 1, 0, 0, 0)),
        pl.BlockSpec((1, 1, Hp, Wp, Cin), lambda n, d: (n, d + 2, 0, 0, 0)),
        pl.BlockSpec((3, 3, 3, Cin, Cout), lambda n, d: (0, 0, 0, 0, 0)),
    ]
    operands = [xp, xp, xp, w_t]
    kernel = _conv_kernel
    if skip is not None:
        in_specs.append(pl.BlockSpec((1, 1, H * W, Cout), lambda n, d: (n, d, 0, 0)))
        operands.append(skip.reshape(N, D, H * W, Cout).astype(jnp.float32))
        kernel = _conv_skip_kernel

    out = pl.pallas_call(
        kernel,
        out_shape=jax.ShapeDtypeStruct((N, D, H * W, Cout), jnp.float32),
        grid=(N, D),
        in_specs=in_specs,
        out_specs=pl.BlockSpec((1, 1, H * W, Cout), lambda n, d: (n, d, 0, 0)),
        compiler_params=pltpu.CompilerParams(
            dimension_semantics=("parallel", "parallel"),
            vmem_limit_bytes=_VMEM_LIMIT),
    )(*operands)
    return out.reshape(N, D, H, W, Cout)


# ------------------- batchnorm (i_forward) + LeakyReLU --------------------

def _bn_stats_kernel(x_ref, s_ref):
    """Accumulate per-channel sum (row 0) and sum of squares (row 1)."""
    @pl.when(pl.program_id(0) == 0)
    def _init():
        s_ref[...] = jnp.zeros_like(s_ref)
    x = x_ref[...]
    s_ref[0:1, :] = s_ref[0:1, :] + jnp.sum(x, axis=0, keepdims=True)
    s_ref[1:2, :] = s_ref[1:2, :] + jnp.sum(x * x, axis=0, keepdims=True)


def _bn_apply_kernel(x_ref, scale_ref, shift_ref, o_ref, *, slope):
    y = x_ref[...] * scale_ref[...] + shift_ref[...]
    o_ref[...] = jnp.where(y >= 0.0, y, slope * y)          # fused LeakyReLU


def _row_tile(rows, chans):
    """Row tile for the flattened (rows, chans) view: aim for ~2 MiB f32 per
    tile, prefer a divisor of `rows` (no padding), else a power-of-two tile
    with zero-padded rows.  Returns (tile, padded_rows)."""
    cap = max(1024, (2 * 1024 * 1024) // (4 * max(chans, 1)))
    if rows <= cap:
        return rows, rows                      # single block == full dims (legal)
    tile = 1 << (cap.bit_length() - 1)         # largest power of two <= cap
    t = tile
    while t >= 8:
        if rows % t == 0:
            return t, rows                     # exact tiling, no padding
        t //= 2
    return tile, ((rows + tile - 1) // tile) * tile


def bn_act(x, weight, bias):
    """IBatchNorm3d.i_forward (batch stats, |w|+ieps scale, bias) + LeakyReLU.
    Two pipelined passes over the flattened (N*D*H*W, C) view."""
    N, D, H, W, C = x.shape
    R = N * D * H * W
    x2 = x.reshape(R, C)
    tr, rp = _row_tile(R, C)
    if rp != R:
        x2 = jnp.pad(x2, ((0, rp - R), (0, 0)))   # zero rows don't disturb the sums
    nblk = rp // tr

    sums = pl.pallas_call(
        _bn_stats_kernel,
        out_shape=jax.ShapeDtypeStruct((2, C), jnp.float32),
        grid=(nblk,),
        in_specs=[pl.BlockSpec((tr, C), lambda i: (i, 0))],
        out_specs=pl.BlockSpec((2, C), lambda i: (0, 0)),
        compiler_params=pltpu.CompilerParams(
            dimension_semantics=("arbitrary",), vmem_limit_bytes=_VMEM_LIMIT),
    )(x2)

    # tiny per-channel math in plain JAX (C elements)
    mean = sums[0] / R
    var = jnp.maximum(sums[1] / R - mean * mean, 0.0)   # biased var (training BN)
    scale = (jnp.abs(weight) + IEPS) * jax.lax.rsqrt(var + EPS)
    shift = bias - mean * scale

    y2 = pl.pallas_call(
        functools.partial(_bn_apply_kernel, slope=SLOPE),
        out_shape=jax.ShapeDtypeStruct((rp, C), jnp.float32),
        grid=(nblk,),
        in_specs=[pl.BlockSpec((tr, C), lambda i: (i, 0)),
                  pl.BlockSpec((1, C), lambda i: (0, 0)),
                  pl.BlockSpec((1, C), lambda i: (0, 0))],
        out_specs=pl.BlockSpec((tr, C), lambda i: (i, 0)),
        compiler_params=pltpu.CompilerParams(
            dimension_semantics=("parallel",), vmem_limit_bytes=_VMEM_LIMIT),
    )(x2, scale.reshape(1, C).astype(jnp.float32),
      shift.reshape(1, C).astype(jnp.float32))
    if rp != R:
        y2 = y2[:R]
    return y2.reshape(N, D, H, W, C)


# ------------------------------ module glue --------------------------------

def residual_conv_mod(z_pair, p):
    """ResidualConvMod (nlayer=3) on channel-split halves:
    [IConv3d, IBatchNorm3d, ILeakyReLU, IConv3d].  Each IConv3d is a RevBlock
    over quarter-channel Conv3d's; the residual adds are fused into the conv
    kernels, and the per-channel BN is applied per half (no concat needed)."""
    z1, z2 = z_pair
    q = z1.shape[-1]
    # IConv3d #1 (RevBlock coupling)
    a1 = conv3d_same(z2, p["iconv1_f_w"], skip=z1)
    a2 = conv3d_same(a1, p["iconv1_g_w"], skip=z2)
    # IBatchNorm3d(C/2) + ILeakyReLU, per channel-half
    a1 = bn_act(a1, p["bn_w"][:q], p["bn_b"][:q])
    a2 = bn_act(a2, p["bn_w"][q:], p["bn_b"][q:])
    # IConv3d #2
    b1 = conv3d_same(a2, p["iconv2_f_w"], skip=a1)
    b2 = conv3d_same(b1, p["iconv2_g_w"], skip=a2)
    return b1, b2


def iconv_mod_forward(x_ncdhw, params):
    """IConvMod.forward.  x: (N, Cin, D, H, W) -> (N, Cout, D, H, W)."""
    x = jnp.transpose(x_ncdhw, (0, 2, 3, 4, 1))            # NDHWC
    x = conv3d_same(x, params["conv0_w"])                  # conv[0]
    x = bn_act(x, params["bn0_w"], params["bn0_b"])        # bn[0] + activation
    C = x.shape[-1]
    q = C // 4
    # ISkip(skip_invert=True): outer RevBlock over two ResidualConvMod(C/2).
    # Channel quarters are kept as separate arrays; single concat at the end.
    # TODO(synk): RevBlock class is not in the provided source; using the standard
    # RevNet coupling y1 = x1 + f(x2), y2 = x2 + g(y1), out = concat(y1, y2).
    q0, q1, q2, q3 = (x[..., i * q:(i + 1) * q] for i in range(4))
    f0, f1 = residual_conv_mod((q2, q3), params["res_f"])
    y1a, y1b = q0 + f0, q1 + f1
    g0, g1 = residual_conv_mod((y1a, y1b), params["res_g"])
    y2a, y2b = q2 + g0, q3 + g1
    x = jnp.concatenate([y1a, y1b, y2a, y2b], axis=-1)     # single concat
    x = bn_act(x, params["bn1_w"], params["bn1_b"])        # bn[-1] + activation
    return jnp.transpose(x, (0, 4, 1, 2, 3))               # back to NCDHW


# ------------------------- deterministic params ---------------------------

def init_params(key, in_channels, out_channels):
    C = out_channels
    assert C % 4 == 0, "out_channels must be divisible by 4 for the nested RevBlocks"
    C2 = C // 2
    keys = iter(jax.random.split(key, 20))

    def conv_w(kk, cout, cin):
        return 0.1 * jax.random.normal(kk, (cout, cin, 3, 3, 3), jnp.float32)

    def res_params(c2):
        c4 = c2 // 2
        kb = next(keys)
        return {
            "iconv1_f_w": conv_w(next(keys), c4, c4),
            "iconv1_g_w": conv_w(next(keys), c4, c4),
            "bn_w": 1.0 + 0.1 * jax.random.normal(kb, (c2,), jnp.float32),
            "bn_b": 0.1 * jax.random.normal(jax.random.fold_in(kb, 1), (c2,), jnp.float32),
            "iconv2_f_w": conv_w(next(keys), c4, c4),
            "iconv2_g_w": conv_w(next(keys), c4, c4),
        }

    return {
        "conv0_w": conv_w(next(keys), C, in_channels),
        "bn0_w": 1.0 + 0.1 * jax.random.normal(next(keys), (C,), jnp.float32),
        "bn0_b": 0.1 * jax.random.normal(next(keys), (C,), jnp.float32),
        "res_f": res_params(C2),
        "res_g": res_params(C2),
        "bn1_w": 1.0 + 0.1 * jax.random.normal(next(keys), (C,), jnp.float32),
        "bn1_b": 0.1 * jax.random.normal(next(keys), (C,), jnp.float32),
    }


if __name__ == "__main__":
    key = jax.random.PRNGKey(0)
    kx, kp = jax.random.split(key)

    N, Cin, Cout, D, H, W = 2, 4, 8, 8, 8, 8
    x = jax.random.normal(kx, (N, Cin, D, H, W), jnp.float32)
    params = init_params(kp, Cin, Cout)

    # light self-checks of the two kernel families (loose conv tol: bf16 operands)
    xt = jax.random.normal(jax.random.PRNGKey(1), (N, D, H, W, Cin), jnp.float32)
    wt = 0.1 * jax.random.normal(jax.random.PRNGKey(2), (Cout, Cin, 3, 3, 3), jnp.float32)
    got = jax.jit(conv3d_same)(xt, wt)
    want = jax.lax.conv_general_dilated(
        xt, jnp.transpose(wt, (2, 3, 4, 1, 0)), (1, 1, 1), "SAME",
        dimension_numbers=("NDHWC", "DHWIO", "NDHWC"))
    assert float(jnp.max(jnp.abs(got - want))) < 0.08, "conv kernel mismatch"

    bw = 1.0 + 0.1 * jax.random.normal(jax.random.PRNGKey(3), (Cin,), jnp.float32)
    bb = 0.1 * jax.random.normal(jax.random.PRNGKey(4), (Cin,), jnp.float32)
    got_bn = jax.jit(bn_act)(xt, bw, bb)
    x2 = xt.reshape(-1, Cin)
    m = x2.mean(0)
    v = ((x2 - m) ** 2).mean(0)
    ref_bn = (x2 - m) * ((jnp.abs(bw) + IEPS) / jnp.sqrt(v + EPS)) + bb
    ref_bn = jnp.where(ref_bn >= 0.0, ref_bn, SLOPE * ref_bn).reshape(xt.shape)
    assert float(jnp.max(jnp.abs(got_bn - ref_bn))) < 2e-3, "bn kernel mismatch"

    fwd = jax.jit(iconv_mod_forward)
    y = fwd(x, params)
    jax.block_until_ready(y)
    assert y.shape == (N, Cout, D, H, W), y.shape
    assert bool(jnp.all(jnp.isfinite(y)))
    print("KERNEL_OK")
</pallas_src>

<mosaic_0001>
module attributes {stable_mosaic.version = 11 : i64} {
  func.func @_conv_kernel(%arg0: i32, %arg1: i32, %arg2: memref<1x1x10x10x4xbf16, #tpu.memory_space<vmem>>, %arg3: memref<1x1x10x10x4xbf16, #tpu.memory_space<vmem>>, %arg4: memref<1x1x10x10x4xbf16, #tpu.memory_space<vmem>>, %arg5: memref<3x3x3x4x8xbf16, #tpu.memory_space<vmem>>, %arg6: memref<1x1x64x8xf32, #tpu.memory_space<vmem>>) attributes {dimension_semantics = [#tpu.dimension_semantics<parallel>, #tpu.dimension_semantics<parallel>], iteration_bounds = array<i64: 2, 8>, scalar_prefetch = 0 : i64, scratch_operands = 0 : i64, tpu.core_type = #tpu.core_type<tc>, window_params = [{transform_indices = @transform_0, window_bounds = array<i64: 1, 1, 10, 10, 4>}, {transform_indices = @transform_1, window_bounds = array<i64: 1, 1, 10, 10, 4>}, {transform_indices = @transform_2, window_bounds = array<i64: 1, 1, 10, 10, 4>}, {pipeline_mode = #tpu.pipeline_mode<synchronous>, transform_indices = @transform_3, window_bounds = array<i64: 3, 3, 3, 4, 8>}, {transform_indices = @transform_4, window_bounds = array<i64: 1, 1, 64, 8>}]} {
    %cst = arith.constant 0.000000e+00 : f32
    %0 = vector.broadcast %cst : f32 to vector<64x8xf32>
    %c0 = arith.constant 0 : index
    %c0_0 = arith.constant 0 : index
    %c0_1 = arith.constant 0 : index
    %c0_2 = arith.constant 0 : index
    %c0_3 = arith.constant 0 : index
    %1 = vector.load %arg2[%c0, %c0_0, %c0_1, %c0_2, %c0_3] : memref<1x1x10x10x4xbf16, #tpu.memory_space<vmem>>, vector<1x1x10x10x4xbf16>
    %2 = vector.shape_cast %1 : vector<1x1x10x10x4xbf16> to vector<10x10x4xbf16>
    %3 = vector.extract_strided_slice %2 {offsets = [0, 0, 0], sizes = [8, 8, 4], strides = [1, 1, 1]} : vector<10x10x4xbf16> to vector<8x8x4xbf16>
    %4 = vector.shape_cast %3 : vector<8x8x4xbf16> to vector<64x4xbf16>
    %c0_4 = arith.constant 0 : index
    %c0_5 = arith.constant 0 : index
    %c0_6 = arith.constant 0 : index
    %c0_7 = arith.constant 0 : index
    %c0_8 = arith.constant 0 : index
    %5 = vector.load %arg5[%c0_4, %c0_5, %c0_6, %c0_7, %c0_8] : memref<3x3x3x4x8xbf16, #tpu.memory_space<vmem>>, vector<1x1x1x4x8xbf16>
    %6 = vector.shape_cast %5 : vector<1x1x1x4x8xbf16> to vector<4x8xbf16>
    %cst_9 = arith.constant dense<0.000000e+00> : vector<64x8xf32>
    %7 = tpu.matmul %4, %6, %cst_9 {dimension_numbers = #tpu.dot_dimension_numbers<[1], [0], [0], [1], [0, 0, 1, 1], [], []>} : vector<64x4xbf16>, vector<4x8xbf16>, vector<64x8xf32> -> vector<64x8xf32>
    %8 = arith.addf %0, %7 : vector<64x8xf32>
    %9 = vector.extract_strided_slice %2 {offsets = [0, 1, 0], sizes = [8, 8, 4], strides = [1, 1, 1]} : vector<10x10x4xbf16> to vector<8x8x4xbf16>
    %10 = vector.shape_cast %9 : vector<8x8x4xbf16> to vector<64x4xbf16>
    %c0_10 = arith.constant 0 : index
    %c0_11 = arith.constant 0 : index
    %c1 = arith.constant 1 : index
    %c0_12 = arith.constant 0 : index
    %c0_13 = arith.constant 0 : index
    %11 = vector.load %arg5[%c0_10, %c0_11, %c1, %c0_12, %c0_13] : memref<3x3x3x4x8xbf16, #tpu.memory_space<vmem>>, vector<1x1x1x4x8xbf16>
    %12 = vector.shape_cast %11 : vector<1x1x1x4x8xbf16> to vector<4x8xbf16>
    %cst_14 = arith.constant dense<0.000000e+00> : vector<64x8xf32>
    %13 = tpu.matmul %10, %12, %cst_14 {dimension_numbers = #tpu.dot_dimension_numbers<[1], [0], [0], [1], [0, 0, 1, 1], [], []>} : vector<64x4xbf16>, vector<4x8xbf16>, vector<64x8xf32> -> vector<64x8xf32>
    %14 = arith.addf %8, %13 : vector<64x8xf32>
    %15 = vector.extract_strided_slice %2 {offsets = [0, 2, 0], sizes = [8, 8, 4], strides = [1, 1, 1]} : vector<10x10x4xbf16> to vector<8x8x4xbf16>
    %16 = vector.shape_cast %15 : vector<8x8x4xbf16> to vector<64x4xbf16>
    %c0_15 = arith.constant 0 : index
    %c0_16 = arith.constant 0 : index
    %c2 = arith.constant 2 : index
    %c0_17 = arith.constant 0 : index
    %c0_18 = arith.constant 0 : index
    %17 = vector.load %arg5[%c0_15, %c0_16, %c2, %c0_17, %c0_18] : memref<3x3x3x4x8xbf16, #tpu.memory_space<vmem>>, vector<1x1x1x4x8xbf16>
    %18 = vector.shape_cast %17 : vector<1x1x1x4x8xbf16> to vector<4x8xbf16>
    %cst_19 = arith.constant dense<0.000000e+00> : vector<64x8xf32>
    %19 = tpu.matmul %16, %18, %cst_19 {dimension_numbers = #tpu.dot_dimension_numbers<[1], [0], [0], [1], [0, 0, 1, 1], [], []>} : vector<64x4xbf16>, vector<4x8xbf16>, vector<64x8xf32> -> vector<64x8xf32>
    %20 = arith.addf %14, %19 : vector<64x8xf32>
    %21 = vector.extract_strided_slice %2 {offsets = [1, 0, 0], sizes = [8, 8, 4], strides = [1, 1, 1]} : vector<10x10x4xbf16> to vector<8x8x4xbf16>
    %22 = vector.shape_cast %21 : vector<8x8x4xbf16> to vector<64x4xbf16>
    %c0_20 = arith.constant 0 : index
    %c1_21 = arith.constant 1 : index
    %c0_22 = arith.constant 0 : index
    %c0_23 = arith.constant 0 : index
    %c0_24 = arith.constant 0 : index
    %23 = vector.load %arg5[%c0_20, %c1_21, %c0_22, %c0_23, %c0_24] : memref<3x3x3x4x8xbf16, #tpu.memory_space<vmem>>, vector<1x1x1x4x8xbf16>
    %24 = vector.shape_cast %23 : vector<1x1x1x4x8xbf16> to vector<4x8xbf16>
    %cst_25 = arith.constant dense<0.000000e+00> : vector<64x8xf32>
    %25 = tpu.matmul %22, %24, %cst_25 {dimension_numbers = #tpu.dot_dimension_numbers<[1], [0], [0], [1], [0, 0, 1, 1], [], []>} : vector<64x4xbf16>, vector<4x8xbf16>, vector<64x8xf32> -> vector<64x8xf32>
    %26 = arith.addf %20, %25 : vector<64x8xf32>
    %27 = vector.extract_strided_slice %2 {offsets = [1, 1, 0], sizes = [8, 8, 4], strides = [1, 1, 1]} : vector<10x10x4xbf16> to vector<8x8x4xbf16>
    %28 = vector.shape_cast %27 : vector<8x8x4xbf16> to vector<64x4xbf16>
    %c0_26 = arith.constant 0 : index
    %c1_27 = arith.constant 1 : index
    %c1_28 = arith.constant 1 : index
    %c0_29 = arith.constant 0 : index
    %c0_30 = arith.constant 0 : index
    %29 = vector.load %arg5[%c0_26, %c1_27, %c1_28, %c0_29, %c0_30] : memref<3x3x3x4x8xbf16, #tpu.memory_space<vmem>>, vector<1x1x1x4x8xbf16>
    %30 = vector.shape_cast %29 : vector<1x1x1x4x8xbf16> to vector<4x8xbf16>
    %cst_31 = arith.constant dense<0.000000e+00> : vector<64x8xf32>
    %31 = tpu.matmul %28, %30, %cst_31 {dimension_numbers = #tpu.dot_dimension_numbers<[1], [0], [0], [1], [0, 0, 1, 1], [], []>} : vector<64x4xbf16>, vector<4x8xbf16>, vector<64x8xf32> -> vector<64x8xf32>
    %32 = arith.addf %26, %31 : vector<64x8xf32>
    %33 = vector.extract_strided_slice %2 {offsets = [1, 2, 0], sizes = [8, 8, 4], strides = [1, 1, 1]} : vector<10x10x4xbf16> to vector<8x8x4xbf16>
    %34 = vector.shape_cast %33 : vector<8x8x4xbf16> to vector<64x4xbf16>
    %c0_32 = arith.constant 0 : index
    %c1_33 = arith.constant 1 : index
    %c2_34 = arith.constant 2 : index
    %c0_35 = arith.constant 0 : index
    %c0_36 = arith.constant 0 : index
    %35 = vector.load %arg5[%c0_32, %c1_33, %c2_34, %c0_35, %c0_36] : memref<3x3x3x4x8xbf16, #tpu.memory_space<vmem>>, vector<1x1x1x4x8xbf16>
    %36 = vector.shape_cast %35 : vector<1x1x1x4x8xbf16> to vector<4x8xbf16>
    %cst_37 = arith.constant dense<0.000000e+00> : vector<64x8xf32>
    %37 = tpu.matmul %34, %36, %cst_37 {dimension_numbers = #tpu.dot_dimension_numbers<[1], [0], [0], [1], [0, 0, 1, 1], [], []>} : vector<64x4xbf16>, vector<4x8xbf16>, vector<64x8xf32> -> vector<64x8xf32>
    %38 = arith.addf %32, %37 : vector<64x8xf32>
    %39 = vector.extract_strided_slice %2 {offsets = [2, 0, 0], sizes = [8, 8, 4], strides = [1, 1, 1]} : vector<10x10x4xbf16> to vector<8x8x4xbf16>
    %40 = vector.shape_cast %39 : vector<8x8x4xbf16> to vector<64x4xbf16>
    %c0_38 = arith.constant 0 : index
    %c2_39 = arith.constant 2 : index
    %c0_40 = arith.constant 0 : index
    %c0_41 = arith.constant 0 : index
    %c0_42 = arith.constant 0 : index
    %41 = vector.load %arg5[%c0_38, %c2_39, %c0_40, %c0_41, %c0_42] : memref<3x3x3x4x8xbf16, #tpu.memory_space<vmem>>, vector<1x1x1x4x8xbf16>
    %42 = vector.shape_cast %41 : vector<1x1x1x4x8xbf16> to vector<4x8xbf16>
    %cst_43 = arith.constant dense<0.000000e+00> : vector<64x8xf32>
    %43 = tpu.matmul %40, %42, %cst_43 {dimension_numbers = #tpu.dot_dimension_numbers<[1], [0], [0], [1], [0, 0, 1, 1], [], []>} : vector<64x4xbf16>, vector<4x8xbf16>, vector<64x8xf32> -> vector<64x8xf32>
    %44 = arith.addf %38, %43 : vector<64x8xf32>
    %45 = vector.extract_strided_slice %2 {offsets = [2, 1, 0], sizes = [8, 8, 4], strides = [1, 1, 1]} : vector<10x10x4xbf16> to vector<8x8x4xbf16>
    %46 = vector.shape_cast %45 : vector<8x8x4xbf16> to vector<64x4xbf16>
    %c0_44 = arith.constant 0 : index
    %c2_45 = arith.constant 2 : index
    %c1_46 = arith.constant 1 : index
    %c0_47 = arith.constant 0 : index
    %c0_48 = arith.constant 0 : index
    %47 = vector.load %arg5[%c0_44, %c2_45, %c1_46, %c0_47, %c0_48] : memref<3x3x3x4x8xbf16, #tpu.memory_space<vmem>>, vector<1x1x1x4x8xbf16>
    %48 = vector.shape_cast %47 : vector<1x1x1x4x8xbf16> to vector<4x8xbf16>
    %cst_49 = arith.constant dense<0.000000e+00> : vector<64x8xf32>
    %49 = tpu.matmul %46, %48, %cst_49 {dimension_numbers = #tpu.dot_dimension_numbers<[1], [0], [0], [1], [0, 0, 1, 1], [], []>} : vector<64x4xbf16>, vector<4x8xbf16>, vector<64x8xf32> -> vector<64x8xf32>
    %50 = arith.addf %44, %49 : vector<64x8xf32>
    %51 = vector.extract_strided_slice %2 {offsets = [2, 2, 0], sizes = [8, 8, 4], strides = [1, 1, 1]} : vector<10x10x4xbf16> to vector<8x8x4xbf16>
    %52 = vector.shape_cast %51 : vector<8x8x4xbf16> to vector<64x4xbf16>
    %c0_50 = arith.constant 0 : index
    %c2_51 = arith.constant 2 : index
    %c2_52 = arith.constant 2 : index
    %c0_53 = arith.constant 0 : index
    %c0_54 = arith.constant 0 : index
    %53 = vector.load %arg5[%c0_50, %c2_51, %c2_52, %c0_53, %c0_54] : memref<3x3x3x4x8xbf16, #tpu.memory_space<vmem>>, vector<1x1x1x4x8xbf16>
    %54 = vector.shape_cast %53 : vector<1x1x1x4x8xbf16> to vector<4x8xbf16>
    %cst_55 = arith.constant dense<0.000000e+00> : vector<64x8xf32>
    %55 = tpu.matmul %52, %54, %cst_55 {dimension_numbers = #tpu.dot_dimension_numbers<[1], [0], [0], [1], [0, 0, 1, 1], [], []>} : vector<64x4xbf16>, vector<4x8xbf16>, vector<64x8xf32> -> vector<64x8xf32>
    %56 = arith.addf %50, %55 : vector<64x8xf32>
    %c0_56 = arith.constant 0 : index
    %c0_57 = arith.constant 0 : index
    %c0_58 = arith.constant 0 : index
    %c0_59 = arith.constant 0 : index
    %c0_60 = arith.constant 0 : index
    %57 = vector.load %arg3[%c0_56, %c0_57, %c0_58, %c0_59, %c0_60] : memref<1x1x10x10x4xbf16, #tpu.memory_space<vmem>>, vector<1x1x10x10x4xbf16>
    %58 = vector.shape_cast %57 : vector<1x1x10x10x4xbf16> to vector<10x10x4xbf16>
    %59 = vector.extract_strided_slice %58 {offsets = [0, 0, 0], sizes = [8, 8, 4], strides = [1, 1, 1]} : vector<10x10x4xbf16> to vector<8x8x4xbf16>
    %60 = vector.shape_cast %59 : vector<8x8x4xbf16> to vector<64x4xbf16>
    %c1_61 = arith.constant 1 : index
    %c0_62 = arith.constant 0 : index
    %c0_63 = arith.constant 0 : index
    %c0_64 = arith.constant 0 : index
    %c0_65 = arith.constant 0 : index
    %61 = vector.load %arg5[%c1_61, %c0_62, %c0_63, %c0_64, %c0_65] : memref<3x3x3x4x8xbf16, #tpu.memory_space<vmem>>, vector<1x1x1x4x8xbf16>
    %62 = vector.shape_cast %61 : vector<1x1x1x4x8xbf16> to vector<4x8xbf16>
    %cst_66 = arith.constant dense<0.000000e+00> : vector<64x8xf32>
    %63 = tpu.matmul %60, %62, %cst_66 {dimension_numbers = #tpu.dot_dimension_numbers<[1], [0], [0], [1], [0, 0, 1, 1], [], []>} : vector<64x4xbf16>, vector<4x8xbf16>, vector<64x8xf32> -> vector<64x8xf32>
    %64 = arith.addf %56, %63 : vector<64x8xf32>
    %65 = vector.extract_strided_slice %58 {offsets = [0, 1, 0], sizes = [8, 8, 4], strides = [1, 1, 1]} : vector<10x10x4xbf16> to vector<8x8x4xbf16>
    %66 = vector.shape_cast %65 : vector<8x8x4xbf16> to vector<64x4xbf16>
    %c1_67 = arith.constant 1 : index
    %c0_68 = arith.constant 0 : index
    %c1_69 = arith.constant 1 : index
    %c0_70 = arith.constant 0 : index
    %c0_71 = arith.constant 0 : index
    %67 = vector.load %arg5[%c1_67, %c0_68, %c1_69, %c0_70, %c0_71] : memref<3x3x3x4x8xbf16, #tpu.memory_space<vmem>>, vector<1x1x1x4x8xbf16>
    %68 = vector.shape_cast %67 : vector<1x1x1x4x8xbf16> to vector<4x8xbf16>
    %cst_72 = arith.constant dense<0.000000e+00> : vector<64x8xf32>
    %69 = tpu.matmul %66, %68, %cst_72 {dimension_numbers = #tpu.dot_dimension_numbers<[1], [0], [0], [1], [0, 0, 1, 1], [], []>} : vector<64x4xbf16>, vector<4x8xbf16>, vector<64x8xf32> -> vector<64x8xf32>
    %70 = arith.addf %64, %69 : vector<64x8xf32>
    %71 = vector.extract_strided_slice %58 {offsets = [0, 2, 0], sizes = [8, 8, 4], strides = [1, 1, 1]} : vector<10x10x4xbf16> to vector<8x8x4xbf16>
    %72 = vector.shape_cast %71 : vector<8x8x4xbf16> to vector<64x4xbf16>
    %c1_73 = arith.constant 1 : index
    %c0_74 = arith.constant 0 : index
    %c2_75 = arith.constant 2 : index
    %c0_76 = arith.constant 0 : index
    %c0_77 = arith.constant 0 : index
    %73 = vector.load %arg5[%c1_73, %c0_74, %c2_75, %c0_76, %c0_77] : memref<3x3x3x4x8xbf16, #tpu.memory_space<vmem>>, vector<1x1x1x4x8xbf16>
    %74 = vector.shape_cast %73 : vector<1x1x1x4x8xbf16> to vector<4x8xbf16>
    %cst_78 = arith.constant dense<0.000000e+00> : vector<64x8xf32>
    %75 = tpu.matmul %72, %74, %cst_78 {dimension_numbers = #tpu.dot_dimension_numbers<[1], [0], [0], [1], [0, 0, 1, 1], [], []>} : vector<64x4xbf16>, vector<4x8xbf16>, vector<64x8xf32> -> vector<64x8xf32>
    %76 = arith.addf %70, %75 : vector<64x8xf32>
    %77 = vector.extract_strided_slice %58 {offsets = [1, 0, 0], sizes = [8, 8, 4], strides = [1, 1, 1]} : vector<10x10x4xbf16> to vector<8x8x4xbf16>
    %78 = vector.shape_cast %77 : vector<8x8x4xbf16> to vector<64x4xbf16>
    %c1_79 = arith.constant 1 : index
    %c1_80 = arith.constant 1 : index
    %c0_81 = arith.constant 0 : index
    %c0_82 = arith.constant 0 : index
    %c0_83 = arith.constant 0 : index
    %79 = vector.load %arg5[%c1_79, %c1_80, %c0_81, %c0_82, %c0_83] : memref<3x3x3x4x8xbf16, #tpu.memory_space<vmem>>, vector<1x1x1x4x8xbf16>
    %80 = vector.shape_cast %79 : vector<1x1x1x4x8xbf16> to vector<4x8xbf16>
    %cst_84 = arith.constant dense<0.000000e+00> : vector<64x8xf32>
    %81 = tpu.matmul %78, %80, %cst_84 {dimension_numbers = #tpu.dot_dimension_numbers<[1], [0], [0], [1], [0, 0, 1, 1], [], []>} : vector<64x4xbf16>, vector<4x8xbf16>, vector<64x8xf32> -> vector<64x8xf32>
    %82 = arith.addf %76, %81 : vector<64x8xf32>
    %83 = vector.extract_strided_slice %58 {offsets = [1, 1, 0], sizes = [8, 8, 4], strides = [1, 1, 1]} : vector<10x10x4xbf16> to vector<8x8x4xbf16>
    %84 = vector.shape_cast %83 : vector<8x8x4xbf16> to vector<64x4xbf16>
    %c1_85 = arith.constant 1 : index
    %c1_86 = arith.constant 1 : index
    %c1_87 = arith.constant 1 : index
    %c0_88 = arith.constant 0 : index
    %c0_89 = arith.constant 0 : index
    %85 = vector.load %arg5[%c1_85, %c1_86, %c1_87, %c0_88, %c0_89] : memref<3x3x3x4x8xbf16, #tpu.memory_space<vmem>>, vector<1x1x1x4x8xbf16>
    %86 = vector.shape_cast %85 : vector<1x1x1x4x8xbf16> to vector<4x8xbf16>
    %cst_90 = arith.constant dense<0.000000e+00> : vector<64x8xf32>
    %87 = tpu.matmul %84, %86, %cst_90 {dimension_numbers = #tpu.dot_dimension_numbers<[1], [0], [0], [1], [0, 0, 1, 1], [], []>} : vector<64x4xbf16>, vector<4x8xbf16>, vector<64x8xf32> -> vector<64x8xf32>
    %88 = arith.addf %82, %87 : vector<64x8xf32>
    %89 = vector.extract_strided_slice %58 {offsets = [1, 2, 0], sizes = [8, 8, 4], strides = [1, 1, 1]} : vector<10x10x4xbf16> to vector<8x8x4xbf16>
    %90 = vector.shape_cast %89 : vector<8x8x4xbf16> to vector<64x4xbf16>
    %c1_91 = arith.constant 1 : index
    %c1_92 = arith.constant 1 : index
    %c2_93 = arith.constant 2 : index
    %c0_94 = arith.constant 0 : index
    %c0_95 = arith.constant 0 : index
    %91 = vector.load %arg5[%c1_91, %c1_92, %c2_93, %c0_94, %c0_95] : memref<3x3x3x4x8xbf16, #tpu.memory_space<vmem>>, vector<1x1x1x4x8xbf16>
    %92 = vector.shape_cast %91 : vector<1x1x1x4x8xbf16> to vector<4x8xbf16>
    %cst_96 = arith.constant dense<0.000000e+00> : vector<64x8xf32>
    %93 = tpu.matmul %90, %92, %cst_96 {dimension_numbers = #tpu.dot_dimension_numbers<[1], [0], [0], [1], [0, 0, 1, 1], [], []>} : vector<64x4xbf16>, vector<4x8xbf16>, vector<64x8xf32> -> vector<64x8xf32>
    %94 = arith.addf %88, %93 : vector<64x8xf32>
    %95 = vector.extract_strided_slice %58 {offsets = [2, 0, 0], sizes = [8, 8, 4], strides = [1, 1, 1]} : vector<10x10x4xbf16> to vector<8x8x4xbf16>
    %96 = vector.shape_cast %95 : vector<8x8x4xbf16> to vector<64x4xbf16>
    %c1_97 = arith.constant 1 : index
    %c2_98 = arith.constant 2 : index
    %c0_99 = arith.constant 0 : index
    %c0_100 = arith.constant 0 : index
    %c0_101 = arith.constant 0 : index
    %97 = vector.load %arg5[%c1_97, %c2_98, %c0_99, %c0_100, %c0_101] : memref<3x3x3x4x8xbf16, #tpu.memory_space<vmem>>, vector<1x1x1x4x8xbf16>
    %98 = vector.shape_cast %97 : vector<1x1x1x4x8xbf16> to vector<4x8xbf16>
    %cst_102 = arith.constant dense<0.000000e+00> : vector<64x8xf32>
    %99 = tpu.matmul %96, %98, %cst_102 {dimension_numbers = #tpu.dot_dimension_numbers<[1], [0], [0], [1], [0, 0, 1, 1], [], []>} : vector<64x4xbf16>, vector<4x8xbf16>, vector<64x8xf32> -> vector<64x8xf32>
    %100 = arith.addf %94, %99 : vector<64x8xf32>
    %101 = vector.extract_strided_slice %58 {offsets = [2, 1, 0], sizes = [8, 8, 4], strides = [1, 1, 1]} : vector<10x10x4xbf16> to vector<8x8x4xbf16>
    %102 = vector.shape_cast %101 : vector<8x8x4xbf16> to vector<64x4xbf16>
    %c1_103 = arith.constant 1 : index
    %c2_104 = arith.constant 2 : index
    %c1_105 = arith.constant 1 : index
    %c0_106 = arith.constant 0 : index
    %c0_107 = arith.constant 0 : index
    %103 = vector.load %arg5[%c1_103, %c2_104, %c1_105, %c0_106, %c0_107] : memref<3x3x3x4x8xbf16, #tpu.memory_space<vmem>>, vector<1x1x1x4x8xbf16>
    %104 = vector.shape_cast %103 : vector<1x1x1x4x8xbf16> to vector<4x8xbf16>
    %cst_108 = arith.constant dense<0.000000e+00> : vector<64x8xf32>
    %105 = tpu.matmul %102, %104, %cst_108 {dimension_numbers = #tpu.dot_dimension_numbers<[1], [0], [0], [1], [0, 0, 1, 1], [], []>} : vector<64x4xbf16>, vector<4x8xbf16>, vector<64x8xf32> -> vector<64x8xf32>
    %106 = arith.addf %100, %105 : vector<64x8xf32>
    %107 = vector.extract_strided_slice %58 {offsets = [2, 2, 0], sizes = [8, 8, 4], strides = [1, 1, 1]} : vector<10x10x4xbf16> to vector<8x8x4xbf16>
    %108 = vector.shape_cast %107 : vector<8x8x4xbf16> to vector<64x4xbf16>
    %c1_109 = arith.constant 1 : index
    %c2_110 = arith.constant 2 : index
    %c2_111 = arith.constant 2 : index
    %c0_112 = arith.constant 0 : index
    %c0_113 = arith.constant 0 : index
    %109 = vector.load %arg5[%c1_109, %c2_110, %c2_111, %c0_112, %c0_113] : memref<3x3x3x4x8xbf16, #tpu.memory_space<vmem>>, vector<1x1x1x4x8xbf16>
    %110 = vector.shape_cast %109 : vector<1x1x1x4x8xbf16> to vector<4x8xbf16>
    %cst_114 = arith.constant dense<0.000000e+00> : vector<64x8xf32>
    %111 = tpu.matmul %108, %110, %cst_114 {dimension_numbers = #tpu.dot_dimension_numbers<[1], [0], [0], [1], [0, 0, 1, 1], [], []>} : vector<64x4xbf16>, vector<4x8xbf16>, vector<64x8xf32> -> vector<64x8xf32>
    %112 = arith.addf %106, %111 : vector<64x8xf32>
    %c0_115 = arith.constant 0 : index
    %c0_116 = arith.constant 0 : index
    %c0_117 = arith.constant 0 : index
    %c0_118 = arith.constant 0 : index
    %c0_119 = arith.constant 0 : index
    %113 = vector.load %arg4[%c0_115, %c0_116, %c0_117, %c0_118, %c0_119] : memref<1x1x10x10x4xbf16, #tpu.memory_space<vmem>>, vector<1x1x10x10x4xbf16>
    %114 = vector.shape_cast %113 : vector<1x1x10x10x4xbf16> to vector<10x10x4xbf16>
    %115 = vector.extract_strided_slice %114 {offsets = [0, 0, 0], sizes = [8, 8, 4], strides = [1, 1, 1]} : vector<10x10x4xbf16> to vector<8x8x4xbf16>
    %116 = vector.shape_cast %115 : vector<8x8x4xbf16> to vector<64x4xbf16>
    %c2_120 = arith.constant 2 : index
    %c0_121 = arith.constant 0 : index
    %c0_122 = arith.constant 0 : index
    %c0_123 = arith.constant 0 : index
    %c0_124 = arith.constant 0 : index
    %117 = vector.load %arg5[%c2_120, %c0_121, %c0_122, %c0_123, %c0_124] : memref<3x3x3x4x8xbf16, #tpu.memory_space<vmem>>, vector<1x1x1x4x8xbf16>
    %118 = vector.shape_cast %117 : vector<1x1x1x4x8xbf16> to vector<4x8xbf16>
    %cst_125 = arith.constant dense<0.000000e+00> : vector<64x8xf32>
    %119 = tpu.matmul %116, %118, %cst_125 {dimension_numbers = #tpu.dot_dimension_numbers<[1], [0], [0], [1], [0, 0, 1, 1], [], []>} : vector<64x4xbf16>, vector<4x8xbf16>, vector<64x8xf32> -> vector<64x8xf32>
    %120 = arith.addf %112, %119 : vector<64x8xf32>
    %121 = vector.extract_strided_slice %114 {offsets = [0, 1, 0], sizes = [8, 8, 4], strides = [1, 1, 1]} : vector<10x10x4xbf16> to vector<8x8x4xbf16>
    %122 = vector.shape_cast %121 : vector<8x8x4xbf16> to vector<64x4xbf16>
    %c2_126 = arith.constant 2 : index
    %c0_127 = arith.constant 0 : index
    %c1_128 = arith.constant 1 : index
    %c0_129 = arith.constant 0 : index
    %c0_130 = arith.constant 0 : index
    %123 = vector.load %arg5[%c2_126, %c0_127, %c1_128, %c0_129, %c0_130] : memref<3x3x3x4x8xbf16, #tpu.memory_space<vmem>>, vector<1x1x1x4x8xbf16>
    %124 = vector.shape_cast %123 : vector<1x1x1x4x8xbf16> to vector<4x8xbf16>
    %cst_131 = arith.constant dense<0.000000e+00> : vector<64x8xf32>
    %125 = tpu.matmul %122, %124, %cst_131 {dimension_numbers = #tpu.dot_dimension_numbers<[1], [0], [0], [1], [0, 0, 1, 1], [], []>} : vector<64x4xbf16>, vector<4x8xbf16>, vector<64x8xf32> -> vector<64x8xf32>
    %126 = arith.addf %120, %125 : vector<64x8xf32>
    %127 = vector.extract_strided_slice %114 {offsets = [0, 2, 0], sizes = [8, 8, 4], strides = [1, 1, 1]} : vector<10x10x4xbf16> to vector<8x8x4xbf16>
    %128 = vector.shape_cast %127 : vector<8x8x4xbf16> to vector<64x4xbf16>
    %c2_132 = arith.constant 2 : index
    %c0_133 = arith.constant 0 : index
    %c2_134 = arith.constant 2 : index
    %c0_135 = arith.constant 0 : index
    %c0_136 = arith.constant 0 : index
    %129 = vector.load %arg5[%c2_132, %c0_133, %c2_134, %c0_135, %c0_136] : memref<3x3x3x4x8xbf16, #tpu.memory_space<vmem>>, vector<1x1x1x4x8xbf16>
    %130 = vector.shape_cast %129 : vector<1x1x1x4x8xbf16> to vector<4x8xbf16>
    %cst_137 = arith.constant dense<0.000000e+00> : vector<64x8xf32>
    %131 = tpu.matmul %128, %130, %cst_137 {dimension_numbers = #tpu.dot_dimension_numbers<[1], [0], [0], [1], [0, 0, 1, 1], [], []>} : vector<64x4xbf16>, vector<4x8xbf16>, vector<64x8xf32> -> vector<64x8xf32>
    %132 = arith.addf %126, %131 : vector<64x8xf32>
    %133 = vector.extract_strided_slice %114 {offsets = [1, 0, 0], sizes = [8, 8, 4], strides = [1, 1, 1]} : vector<10x10x4xbf16> to vector<8x8x4xbf16>
    %134 = vector.shape_cast %133 : vector<8x8x4xbf16> to vector<64x4xbf16>
    %c2_138 = arith.constant 2 : index
    %c1_139 = arith.constant 1 : index
    %c0_140 = arith.constant 0 : index
    %c0_141 = arith.constant 0 : index
    %c0_142 = arith.constant 0 : index
    %135 = vector.load %arg5[%c2_138, %c1_139, %c0_140, %c0_141, %c0_142] : memref<3x3x3x4x8xbf16, #tpu.memory_space<vmem>>, vector<1x1x1x4x8xbf16>
    %136 = vector.shape_cast %135 : vector<1x1x1x4x8xbf16> to vector<4x8xbf16>
    %cst_143 = arith.constant dense<0.000000e+00> : vector<64x8xf32>
    %137 = tpu.matmul %134, %136, %cst_143 {dimension_numbers = #tpu.dot_dimension_numbers<[1], [0], [0], [1], [0, 0, 1, 1], [], []>} : vector<64x4xbf16>, vector<4x8xbf16>, vector<64x8xf32> -> vector<64x8xf32>
    %138 = arith.addf %132, %137 : vector<64x8xf32>
    %139 = vector.extract_strided_slice %114 {offsets = [1, 1, 0], sizes = [8, 8, 4], strides = [1, 1, 1]} : vector<10x10x4xbf16> to vector<8x8x4xbf16>
    %140 = vector.shape_cast %139 : vector<8x8x4xbf16> to vector<64x4xbf16>
    %c2_144 = arith.constant 2 : index
    %c1_145 = arith.constant 1 : index
    %c1_146 = arith.constant 1 : index
    %c0_147 = arith.constant 0 : index
    %c0_148 = arith.constant 0 : index
    %141 = vector.load %arg5[%c2_144, %c1_145, %c1_146, %c0_147, %c0_148] : memref<3x3x3x4x8xbf16, #tpu.memory_space<vmem>>, vector<1x1x1x4x8xbf16>
    %142 = vector.shape_cast %141 : vector<1x1x1x4x8xbf16> to vector<4x8xbf16>
    %cst_149 = arith.constant dense<0.000000e+00> : vector<64x8xf32>
    %143 = tpu.matmul %140, %142, %cst_149 {dimension_numbers = #tpu.dot_dimension_numbers<[1], [0], [0], [1], [0, 0, 1, 1], [], []>} : vector<64x4xbf16>, vector<4x8xbf16>, vector<64x8xf32> -> vector<64x8xf32>
    %144 = arith.addf %138, %143 : vector<64x8xf32>
    %145 = vector.extract_strided_slice %114 {offsets = [1, 2, 0], sizes = [8, 8, 4], strides = [1, 1, 1]} : vector<10x10x4xbf16> to vector<8x8x4xbf16>
    %146 = vector.shape_cast %145 : vector<8x8x4xbf16> to vector<64x4xbf16>
    %c2_150 = arith.constant 2 : index
    %c1_151 = arith.constant 1 : index
    %c2_152 = arith.constant 2 : index
    %c0_153 = arith.constant 0 : index
    %c0_154 = arith.constant 0 : index
    %147 = vector.load %arg5[%c2_150, %c1_151, %c2_152, %c0_153, %c0_154] : memref<3x3x3x4x8xbf16, #tpu.memory_space<vmem>>, vector<1x1x1x4x8xbf16>
    %148 = vector.shape_cast %147 : vector<1x1x1x4x8xbf16> to vector<4x8xbf16>
    %cst_155 = arith.constant dense<0.000000e+00> : vector<64x8xf32>
    %149 = tpu.matmul %146, %148, %cst_155 {dimension_numbers = #tpu.dot_dimension_numbers<[1], [0], [0], [1], [0, 0, 1, 1], [], []>} : vector<64x4xbf16>, vector<4x8xbf16>, vector<64x8xf32> -> vector<64x8xf32>
    %150 = arith.addf %144, %149 : vector<64x8xf32>
    %151 = vector.extract_strided_slice %114 {offsets = [2, 0, 0], sizes = [8, 8, 4], strides = [1, 1, 1]} : vector<10x10x4xbf16> to vector<8x8x4xbf16>
    %152 = vector.shape_cast %151 : vector<8x8x4xbf16> to vector<64x4xbf16>
    %c2_156 = arith.constant 2 : index
    %c2_157 = arith.constant 2 : index
    %c0_158 = arith.constant 0 : index
    %c0_159 = arith.constant 0 : index
    %c0_160 = arith.constant 0 : index
    %153 = vector.load %arg5[%c2_156, %c2_157, %c0_158, %c0_159, %c0_160] : memref<3x3x3x4x8xbf16, #tpu.memory_space<vmem>>, vector<1x1x1x4x8xbf16>
    %154 = vector.shape_cast %153 : vector<1x1x1x4x8xbf16> to vector<4x8xbf16>
    %cst_161 = arith.constant dense<0.000000e+00> : vector<64x8xf32>
    %155 = tpu.matmul %152, %154, %cst_161 {dimension_numbers = #tpu.dot_dimension_numbers<[1], [0], [0], [1], [0, 0, 1, 1], [], []>} : vector<64x4xbf16>, vector<4x8xbf16>, vector<64x8xf32> -> vector<64x8xf32>
    %156 = arith.addf %150, %155 : vector<64x8xf32>
    %157 = vector.extract_strided_slice %114 {offsets = [2, 1, 0], sizes = [8, 8, 4], strides = [1, 1, 1]} : vector<10x10x4xbf16> to vector<8x8x4xbf16>
    %158 = vector.shape_cast %157 : vector<8x8x4xbf16> to vector<64x4xbf16>
    %c2_162 = arith.constant 2 : index
    %c2_163 = arith.constant 2 : index
    %c1_164 = arith.constant 1 : index
    %c0_165 = arith.constant 0 : index
    %c0_166 = arith.constant 0 : index
    %159 = vector.load %arg5[%c2_162, %c2_163, %c1_164, %c0_165, %c0_166] : memref<3x3x3x4x8xbf16, #tpu.memory_space<vmem>>, vector<1x1x1x4x8xbf16>
    %160 = vector.shape_cast %159 : vector<1x1x1x4x8xbf16> to vector<4x8xbf16>
    %cst_167 = arith.constant dense<0.000000e+00> : vector<64x8xf32>
    %161 = tpu.matmul %158, %160, %cst_167 {dimension_numbers = #tpu.dot_dimension_numbers<[1], [0], [0], [1], [0, 0, 1, 1], [], []>} : vector<64x4xbf16>, vector<4x8xbf16>, vector<64x8xf32> -> vector<64x8xf32>
    %162 = arith.addf %156, %161 : vector<64x8xf32>
    %163 = vector.extract_strided_slice %114 {offsets = [2, 2, 0], sizes = [8, 8, 4], strides = [1, 1, 1]} : vector<10x10x4xbf16> to vector<8x8x4xbf16>
    %164 = vector.shape_cast %163 : vector<8x8x4xbf16> to vector<64x4xbf16>
    %c2_168 = arith.constant 2 : index
    %c2_169 = arith.constant 2 : index
    %c2_170 = arith.constant 2 : index
    %c0_171 = arith.constant 0 : index
    %c0_172 = arith.constant 0 : index
    %165 = vector.load %arg5[%c2_168, %c2_169, %c2_170, %c0_171, %c0_172] : memref<3x3x3x4x8xbf16, #tpu.memory_space<vmem>>, vector<1x1x1x4x8xbf16>
    %166 = vector.shape_cast %165 : vector<1x1x1x4x8xbf16> to vector<4x8xbf16>
    %cst_173 = arith.constant dense<0.000000e+00> : vector<64x8xf32>
    %167 = tpu.matmul %164, %166, %cst_173 {dimension_numbers = #tpu.dot_dimension_numbers<[1], [0], [0], [1], [0, 0, 1, 1], [], []>} : vector<64x4xbf16>, vector<4x8xbf16>, vector<64x8xf32> -> vector<64x8xf32>
    %168 = arith.addf %162, %167 : vector<64x8xf32>
    %c0_174 = arith.constant 0 : index
    %c0_175 = arith.constant 0 : index
    %c0_176 = arith.constant 0 : index
    %c0_177 = arith.constant 0 : index
    %169 = vector.load %arg6[%c0_174, %c0_175, %c0_176, %c0_177] : memref<1x1x64x8xf32, #tpu.memory_space<vmem>>, vector<1x1x64x8xf32>
    %170 = vector.shape_cast %169 : vector<1x1x64x8xf32> to vector<64x8xf32>
    %171 = vector.shape_cast %168 : vector<64x8xf32> to vector<1x1x64x8xf32>
    tpu.vector_store %arg6[%c0_174, %c0_175, %c0_176, %c0_177], %171 {strides = array<i32>} : memref<1x1x64x8xf32, #tpu.memory_space<vmem>>, vector<1x1x64x8xf32>,
    return
  }
  func.func @transform_0(%arg0: i32, %arg1: i32) -> (i32, i32, i32, i32, i32) {
    %c0_i32 = arith.constant 0 : i32
    %c0_i32_0 = arith.constant 0 : i32
    %c0_i32_1 = arith.constant 0 : i32
    %c0_i32_2 = arith.constant 0 : i32
    return %arg0, %arg1, %c0_i32, %c0_i32_0, %c0_i32_1 : i32, i32, i32, i32, i32
  }
  func.func @transform_1(%arg0: i32, %arg1: i32) -> (i32, i32, i32, i32, i32) {
    %c1_i32 = arith.constant 1 : i32
    %0 = arith.addi %arg1, %c1_i32 : i32
    %c0_i32 = arith.constant 0 : i32
    %c0_i32_0 = arith.constant 0 : i32
    %c0_i32_1 = arith.constant 0 : i32
    %c0_i32_2 = arith.constant 0 : i32
    return %arg0, %0, %c0_i32, %c0_i32_0, %c0_i32_1 : i32, i32, i32, i32, i32
  }
  func.func @transform_2(%arg0: i32, %arg1: i32) -> (i32, i32, i32, i32, i32) {
    %c2_i32 = arith.constant 2 : i32
    %0 = arith.addi %arg1, %c2_i32 : i32
    %c0_i32 = arith.constant 0 : i32
    %c0_i32_0 = arith.constant 0 : i32
    %c0_i32_1 = arith.constant 0 : i32
    %c0_i32_2 = arith.constant 0 : i32
    return %arg0, %0, %c0_i32, %c0_i32_0, %c0_i32_1 : i32, i32, i32, i32, i32
  }
  func.func @transform_3(%arg0: i32, %arg1: i32) -> (i32, i32, i32, i32, i32) {
    %c0_i32 = arith.constant 0 : i32
    %c0_i32_0 = arith.constant 0 : i32
    %c0_i32_1 = arith.constant 0 : i32
    %c0_i32_2 = arith.constant 0 : i32
    %c0_i32_3 = arith.constant 0 : i32
    %c0_i32_4 = arith.constant 0 : i32
    return %c0_i32, %c0_i32_0, %c0_i32_1, %c0_i32_2, %c0_i32_3 : i32, i32, i32, i32, i32
  }
  func.func @transform_4(%arg0: i32, %arg1: i32) -> (i32, i32, i32, i32) {
    %c0_i32 = arith.constant 0 : i32
    %c0_i32_0 = arith.constant 0 : i32
    %c0_i32_1 = arith.constant 0 : i32
    return %arg0, %arg1, %c0_i32, %c0_i32_0 : i32, i32, i32, i32
  }
}

</mosaic_0001>

<llo_original>
// kernel: conv3d_same.1
$region0: #{conv3d_same.1}
  #allocation0 [shape = 'u32[]', space=smem, size = 0x4, offset = 0x4, fixed_abs, tag = 'smem constant byte address 0x4 - core index']
  #allocation1 [shape = 'u32[144,128]{1,0:T(1,128)}', space=vmem, size = 0x12000, scoped, tag = 'internal scratch']
  %s0 = inlined_call_operand.vmem [shape: bf16[2,10,10,10,4], index: 0, kind: input, shape index: {}, may-alias: {0,1,2}]
  %s1 = inlined_call_operand.vmem [shape: bf16[2,10,10,10,4], index: 1, kind: input, shape index: {}, may-alias: {0,1,2}]
  %s2 = inlined_call_operand.vmem [shape: bf16[2,10,10,10,4], index: 2, kind: input, shape index: {}, may-alias: {0,1,2}]
  %s3 = inlined_call_operand.vmem [shape: bf16[3,3,3,4,8], index: 3, kind: input, shape index: {}]
  %s4 = inlined_call_operand.hbm [shape: f32[2,8,64,8], index: 4, kind: output, shape index: {}]
  %s5 = sld [smem:[#allocation0]]
  $region49: #{conv3d_same.1} parent=0
    _
  %s7 = ssub.s32 1, %s5
  %s8 = scalar_select 0, %s7, %s5
  $region1: #{conv3d_same.1} parent=0
    #allocation2 [shape = 'u8[65536]{0}', space=vmem, size = 0x10000, scoped, tag = 'output window, operand 0']
    #allocation3 [shape = 's32[2]{0}', space=sflag, size = 0x8, scoped, tag = 'scoped memory for conv3d_same.1']
    %9 = vsyncpa [#allocation3], 0
    %s10 = scalar_lea.sflag [#allocation3], 1
    %11 = vsyncpa %s10, 0
    loop: start=0, step=1, limit=18
    $region2: #{conv3d_same.1} parent=1 // loop_pre_header
      _
    $region3: #{conv3d_same.1} parent=1 // loop_header
      %s13 = sphi 0, %s17
      %p14 = scmp.ge.s32.totalorder %s13, 18
      %s20 = sphi 0, %s32
      %s21 = sphi 0, %s28
      %s22 = sphi 0, %s20
      %s23 = sphi 0, %s21
      %s24 = sphi 0, %s22
      %s25 = sphi 0, %s23
      %s37 = sphi 0, %s39
      %s40 = sphi 0, %s37
      %s41 = sphi 0, %s40
      %s57 = sphi 0, %s41
      %s67 = sphi 0, %s69
      %s70 = sphi 0, %s67
      %s71 = sphi 0, %s70
      %s87 = sphi 0, %s71
      %s97 = sphi 0, %s99
      %s100 = sphi 0, %s97
      %s101 = sphi 0, %s100
      %s117 = sphi 0, %s101
      %s121 = sphi 0, %s121
      %s123 = sphi 0, %s121
      %s124 = sphi 0, %s123
      %s138 = sphi 0, %s124
      %s146 = sphi 0, %s148
      %s149 = sphi 0, %s146
      %s150 = sphi 0, %s149
      %s166 = sphi 0, %s150
    $region4: #{conv3d_same.1} parent=1 // loop_header_branch
      %16 = sbr.rel (%p14) target = $region8
    $region5: #{conv3d_same.1} parent=1 // loop_body
      %s18 = ssub.s32 %s13, 1
      %s19 = ssub.s32 %s13, 2
      %s26 = sadd.s32 1, %s21
      %p27 = scmp.ge.s32.totalorder %s26, 8
      %s28 = scalar_select %p27, 0, %s26
      %s29 = sadd.s32 1, %s20
      %s30 = scalar_select %p27, %s29, %s20
      %p31 = scmp.ge.s32.totalorder %s30, 2
      %s32 = scalar_select %p31, 0, %s30
      %s33 = ssub.s32 %s20, %s32
      %s34 = ssub.s32 %s21, %s28
      %s35 = sor.u32 %s33, %s34
      %p36 = scmp.eq.s32.totalorder %s35, 0
      %s38 = sadd.s32 %s37, 1
      %s39 = scalar_select %p36, %s37, %s38
      %p42 = pneg %p36
      %p43 = scmp.eq.s32.totalorder %s13, 15
      %p44 = por %p42, %p43
      %p45 = scmp.ne.s32.totalorder %s37, %s40
      %p46 = scmp.eq.s32.totalorder %s13, 0
      %p47 = por %p45, %p46
      %p48 = scmp.ne.s32.totalorder %s37, %s40
      %p49 = scmp.eq.s32.totalorder %s18, 15
      %p50 = por %p48, %p49
      %p51 = scmp.ne.s32.totalorder %s40, %s41
      %p52 = scmp.eq.s32.totalorder %s18, 0
      %p53 = por %p51, %p52
      %p54 = scmp.ne.s32.totalorder %s40, %s41
      %p55 = scmp.eq.s32.totalorder %s19, 15
      %p56 = por %p54, %p55
      %p58 = scmp.ne.s32.totalorder %s41, %s57
      %p59 = scmp.eq.s32.totalorder %s19, 0
      %p60 = por %p58, %p59
      %s61 = sadd.s32 %s21, 1
      %s62 = sadd.s32 %s28, 1
      %s63 = ssub.s32 %s20, %s32
      %s64 = ssub.s32 %s61, %s62
      %s65 = sor.u32 %s63, %s64
      %p66 = scmp.eq.s32.totalorder %s65, 0
      %s68 = sadd.s32 %s67, 1
      %s69 = scalar_select %p66, %s67, %s68
      %p72 = pneg %p66
      %p73 = scmp.eq.s32.totalorder %s13, 15
      %p74 = por %p72, %p73
      %p75 = scmp.ne.s32.totalorder %s67, %s70
      %p76 = scmp.eq.s32.totalorder %s13, 0
      %p77 = por %p75, %p76
      %p78 = scmp.ne.s32.totalorder %s67, %s70
      %p79 = scmp.eq.s32.totalorder %s18, 15
      %p80 = por %p78, %p79
      %p81 = scmp.ne.s32.totalorder %s70, %s71
      %p82 = scmp.eq.s32.totalorder %s18, 0
      %p83 = por %p81, %p82
      %p84 = scmp.ne.s32.totalorder %s70, %s71
      %p85 = scmp.eq.s32.totalorder %s19, 15
      %p86 = por %p84, %p85
      %p88 = scmp.ne.s32.totalorder %s71, %s87
      %p89 = scmp.eq.s32.totalorder %s19, 0
      %p90 = por %p88, %p89
      %s91 = sadd.s32 %s21, 2
      %s92 = sadd.s32 %s28, 2
      %s93 = ssub.s32 %s20, %s32
      %s94 = ssub.s32 %s91, %s92
      %s95 = sor.u32 %s93, %s94
      %p96 = scmp.eq.s32.totalorder %s95, 0
      %s98 = sadd.s32 %s97, 1
      %s99 = scalar_select %p96, %s97, %s98
      %p102 = pneg %p96
      %p103 = scmp.eq.s32.totalorder %s13, 15
      %p104 = por %p102, %p103
      %p105 = scmp.ne.s32.totalorder %s97, %s100
      %p106 = scmp.eq.s32.totalorder %s13, 0
      %p107 = por %p105, %p106
      %p108 = scmp.ne.s32.totalorder %s97, %s100
      %p109 = scmp.eq.s32.totalorder %s18, 15
      %p110 = por %p108, %p109
      %p111 = scmp.ne.s32.totalorder %s100, %s101
      %p112 = scmp.eq.s32.totalorder %s18, 0
      %p113 = por %p111, %p112
      %p114 = scmp.ne.s32.totalorder %s100, %s101
      %p115 = scmp.eq.s32.totalorder %s19, 15
      %p116 = por %p114, %p115
      %p118 = scmp.ne.s32.totalorder %s101, %s117
      %p119 = scmp.eq.s32.totalorder %s19, 0
      %p120 = por %p118, %p119
      %s122 = sadd.s32 %s121, 1
      %p125 = scmp.eq.s32.totalorder %s13, 15
      %p126 = scmp.ne.s32.totalorder %s121, %s123
      %p127 = scmp.eq.s32.totalorder %s13, 0
      %p128 = por %p126, %p127
      %p129 = scmp.ne.s32.totalorder %s121, %s123
      %p130 = scmp.eq.s32.totalorder %s18, 15
      %p131 = por %p129, %p130
      %p132 = scmp.ne.s32.totalorder %s123, %s124
      %p133 = scmp.eq.s32.totalorder %s18, 0
      %p134 = por %p132, %p133
      %p135 = scmp.ne.s32.totalorder %s123, %s124
      %p136 = scmp.eq.s32.totalorder %s19, 15
      %p137 = por %p135, %p136
      %p139 = scmp.ne.s32.totalorder %s124, %s138
      %p140 = scmp.eq.s32.totalorder %s19, 0
      %p141 = por %p139, %p140
      %s142 = ssub.s32 %s20, %s32
      %s143 = ssub.s32 %s21, %s28
      %s144 = sor.u32 %s142, %s143
      %p145 = scmp.eq.s32.totalorder %s144, 0
      %s147 = sadd.s32 %s146, 1
      %s148 = scalar_select %p145, %s146, %s147
      %p151 = pneg %p145
      %p152 = scmp.eq.s32.totalorder %s13, 15
      %p153 = por %p151, %p152
      %p154 = scmp.ne.s32.totalorder %s146, %s149
      %p155 = scmp.eq.s32.totalorder %s13, 0
      %p156 = por %p154, %p155
      %p157 = scmp.ne.s32.totalorder %s146, %s149
      %p158 = scmp.eq.s32.totalorder %s18, 15
      %p159 = por %p157, %p158
      %p160 = scmp.ne.s32.totalorder %s149, %s150
      %p161 = scmp.eq.s32.totalorder %s18, 0
      %p162 = por %p160, %p161
      %p163 = scmp.ne.s32.totalorder %s149, %s150
      %p164 = scmp.eq.s32.totalorder %s19, 15
      %p165 = por %p163, %p164
      %p167 = scmp.ne.s32.totalorder %s150, %s166
      %p168 = scmp.eq.s32.totalorder %s19, 0
      %p169 = por %p167, %p168
      %p170 = scmp.le.s32.totalorder 1, %s13
      %p171 = scmp.lt.s32.totalorder %s13, 17
      %p172 = pnand %p170, %p171
      %p173 = pneg %p172
      // Predicated region
      $region9: #{conv3d_same.1} parent=5 // pred_check
        _
      $region10: #{conv3d_same.1} parent=5 // pred_check_branch
        %175 = sbr.rel (%p172) target = $region12
      $region11: #{conv3d_same.1} parent=5 // pred_region
        %s176 = ssub.s32 %s13, 1
        // Predicated region
        $region13: #{conv3d_same.1} parent=11 // pred_check
          %p177 = pneg %p134
        $region14: #{conv3d_same.1} parent=11 // pred_check_branch
          %179 = sbr.rel (%p177) target = $region16
        $region15: #{conv3d_same.1} parent=11 // pred_region
          _
        $region16: #{conv3d_same.1} parent=11 // pred_fallthru
          _
      $region12: #{conv3d_same.1} parent=5 // pred_fallthru
        _
      %p180 = scmp.lt.s32.totalorder %s13, 16
      // Predicated region
      $region17: #{conv3d_same.1} parent=5 // pred_check
        %p181 = pneg %p180
      $region18: #{conv3d_same.1} parent=5 // pred_check_branch
        %183 = sbr.rel (%p181) target = $region20
      $region19: #{conv3d_same.1} parent=5 // pred_region
        // Predicated region
        $region21: #{conv3d_same.1} parent=19 // pred_check
          %p184 = pneg %p47
        $region22: #{conv3d_same.1} parent=19 // pred_check_branch
          %186 = sbr.rel (%p184) target = $region24
        $region23: #{conv3d_same.1} parent=19 // pred_region
          %p187 = scmp.lt.s32.totalorder %s20, 1
          %s188 = scalar_select %p187, %s20, 1
          %p189 = scmp.lt.s32.totalorder %s21, 9
          %s190 = scalar_select %p189, %s21, 9
          %s191 = smul.addr %s190, 20
          %s192 = smul.addr %s188, 200
          %s193 = sadd.s32 %s191, %s192
          %s194 = smul.addr %s193, 4
          %s195 = scalar_lea.vmem %s0, %s194
        $region24: #{conv3d_same.1} parent=19 // pred_fallthru
          _
        // Predicated region
        $region25: #{conv3d_same.1} parent=19 // pred_check
          %p196 = pneg %p77
        $region26: #{conv3d_same.1} parent=19 // pred_check_branch
          %198 = sbr.rel (%p196) target = $region28
        $region27: #{conv3d_same.1} parent=19 // pred_region
          %s199 = sadd.s32 %s21, 1
          %p200 = scmp.lt.s32.totalorder %s20, 1
          %s201 = scalar_select %p200, %s20, 1
          %p202 = scmp.lt.s32.totalorder %s199, 9
          %s203 = scalar_select %p202, %s199, 9
          %s204 = smul.addr %s203, 20
          %s205 = smul.addr %s201, 200
          %s206 = sadd.s32 %s204, %s205
          %s207 = smul.addr %s206, 4
          %s208 = scalar_lea.vmem %s1, %s207
          %s209 = sadd.s32 %s21, 1
        $region28: #{conv3d_same.1} parent=19 // pred_fallthru
          _
        // Predicated region
        $region29: #{conv3d_same.1} parent=19 // pred_check
          %p210 = pneg %p107
        $region30: #{conv3d_same.1} parent=19 // pred_check_branch
          %212 = sbr.rel (%p210) target = $region32
        $region31: #{conv3d_same.1} parent=19 // pred_region
          %s213 = sadd.s32 %s21, 2
          %p214 = scmp.lt.s32.totalorder %s20, 1
          %s215 = scalar_select %p214, %s20, 1
          %p216 = scmp.lt.s32.totalorder %s213, 9
          %s217 = scalar_select %p216, %s213, 9
          %s218 = smul.addr %s217, 20
          %s219 = smul.addr %s215, 200
          %s220 = sadd.s32 %s218, %s219
          %s221 = smul.addr %s220, 4
          %s222 = scalar_lea.vmem %s2, %s221
          %s223 = sadd.s32 %s21, 2
        $region32: #{conv3d_same.1} parent=19 // pred_fallthru
          _
      $region20: #{conv3d_same.1} parent=5 // pred_fallthru
        _
      %p224 = scmp.le.s32.totalorder 1, %s13
      %p225 = scmp.lt.s32.totalorder %s13, 17
      %p226 = pnand %p224, %p225
      %p227 = pneg %p226
      // Predicated region
      $region33: #{conv3d_same.1} parent=5 // pred_check
        _
      $region34: #{conv3d_same.1} parent=5 // pred_check_branch
        %229 = sbr.rel (%p226) target = $region36
      $region35: #{conv3d_same.1} parent=5 // pred_region
        %s230 = ssub.s32 %s13, 1
        %p231 = scmp.lt.s32.totalorder %s22, 1
        %s232 = scalar_select %p231, %s22, 1
        %p233 = scmp.lt.s32.totalorder %s23, 9
        %s234 = scalar_select %p233, %s23, 9
        %s235 = smul.addr %s234, 20
        %s236 = smul.addr %s232, 200
        %s237 = sadd.s32 %s235, %s236
        %s238 = smul.addr %s237, 4
        %s239 = scalar_lea.vmem %s0, %s238
        %p240 = pneg %p53
        %p241 = pneg %p50
        %s242 = sadd.s32 %s23, 1
        %p243 = scmp.lt.s32.totalorder %s22, 1
        %s244 = scalar_select %p243, %s22, 1
        %p245 = scmp.lt.s32.totalorder %s242, 9
        %s246 = scalar_select %p245, %s242, 9
        %s247 = smul.addr %s246, 20
        %s248 = smul.addr %s244, 200
        %s249 = sadd.s32 %s247, %s248
        %s250 = smul.addr %s249, 4
        %s251 = scalar_lea.vmem %s1, %s250
        %p252 = pneg %p83
        %p253 = pneg %p80
        %s254 = sadd.s32 %s23, 2
        %p255 = scmp.lt.s32.totalorder %s22, 1
        %s256 = scalar_select %p255, %s22, 1
        %p257 = scmp.lt.s32.totalorder %s254, 9
        %s258 = scalar_select %p257, %s254, 9
        %s259 = smul.addr %s258, 20
        %s260 = smul.addr %s256, 200
        %s261 = sadd.s32 %s259, %s260
        %s262 = smul.addr %s261, 4
        %s263 = scalar_lea.vmem %s2, %s262
        %p264 = pneg %p113
        %p265 = pneg %p110
        %p266 = pneg %p134
        %p267 = pneg %p131
        %p268 = pneg %p162
        %p269 = pneg %p159
        %s270 = sand.u32 %s149, 1
        %s271 = scalar_lea.sflag [#allocation3], %s270
        %s272 = sand.u32 %s149, 1
        %s273 = smul.addr %s272, 64
        %s274 = scalar_lea.vmem [#allocation2], %s273
        %p275 = scmp.lt.s32.totalorder %s22, 1
        %s276 = scalar_select %p275, %s22, 1
        %p277 = scmp.lt.s32.totalorder %s23, 9
        %s278 = scalar_select %p277, %s23, 9
        %s279 = smul.addr %s278, 20
        %s280 = smul.addr %s276, 200
        %s281 = sadd.s32 %s279, %s280
        %s282 = smul.addr %s281, 4
        %s283 = scalar_lea.vmem %s0, %s282
        %s284 = sadd.s32 %s23, 1
        %p285 = scmp.lt.s32.totalorder %s22, 1
        %s286 = scalar_select %p285, %s22, 1
        %p287 = scmp.lt.s32.totalorder %s284, 9
        %s288 = scalar_select %p287, %s284, 9
        %s289 = smul.addr %s288, 20
        %s290 = smul.addr %s286, 200
        %s291 = sadd.s32 %s289, %s290
        %s292 = smul.addr %s291, 4
        %s293 = scalar_lea.vmem %s1, %s292
        %s294 = sadd.s32 %s23, 1
        %s295 = sadd.s32 %s23, 2
        %p296 = scmp.lt.s32.totalorder %s22, 1
        %s297 = scalar_select %p296, %s22, 1
        %p298 = scmp.lt.s32.totalorder %s295, 9
        %s299 = scalar_select %p298, %s295, 9
        %s300 = smul.addr %s299, 20
        %s301 = smul.addr %s297, 200
        %s302 = sadd.s32 %s300, %s301
        %s303 = smul.addr %s302, 4
        %s304 = scalar_lea.vmem %s2, %s303
        %s305 = sadd.s32 %s23, 2
        %v307 = vld [vmem:[%s283] sm:$0xf]
        %v308 = vld [vmem:[%s283 + $0x4] sm:$0x1]
        %v309 = vld [vmem:[%s283 + $0x8] sm:$0xf]
        %v310 = vld [vmem:[%s283 + $0xc] sm:$0x1]
        %v311 = vld [vmem:[%s283 + $0x10] sm:$0xf]
        %v312 = vld [vmem:[%s283 + $0x14] sm:$0x1]
        %v313 = vld [vmem:[%s283 + $0x18] sm:$0xf]
        %v314 = vld [vmem:[%s283 + $0x1c] sm:$0x1]
        %v315 = vld [vmem:[%s283 + $0x20] sm:$0xf]
        %v316 = vld [vmem:[%s283 + $0x24] sm:$0x1]
        %v317 = vld [vmem:[%s283 + $0x28] sm:$0xf]
        %v318 = vld [vmem:[%s283 + $0x2c] sm:$0x1]
        %v319 = vld [vmem:[%s283 + $0x30] sm:$0xf]
        %v320 = vld [vmem:[%s283 + $0x34] sm:$0x1]
        %v321 = vld [vmem:[%s283 + $0x38] sm:$0xf]
        %v322 = vld [vmem:[%s283 + $0x3c] sm:$0x1]
        %v323 = vld [vmem:[%s283 + $0x40] sm:$0xf]
        %v324 = vld [vmem:[%s283 + $0x44] sm:$0x1]
        %v325 = vld [vmem:[%s283 + $0x48] sm:$0xf]
        %v326 = vld [vmem:[%s283 + $0x4c] sm:$0x1]
        %v327 = vld [vmem:[%s3] sm:$0x3]
        %vm328 = vsmask.f32 3328
        %vm329 = vsmask.f32 7440
        %vm330 = vmor %vm328, %vm329
        %v332 = vshrl.u32 %v307, 16
        %v334 = vrot.slane %v332, 4
        %v335 = vshll.u32 %v307, 16
        %v337 = vrot.slane %v335, 5
        %v338 = vor.u32 %v334, %v337
        %v339 = vrot.slane %v338, 4
        %v341 = vshll.u32 %v308, 16
        %v343 = vrot.slane %v341, 5
        %v344 = vsel %vm330, %v339, %v343
        %v346 = vshrl.u32 %v309, 16
        %v348 = vrot.slane %v346, 4
        %v349 = vshll.u32 %v309, 16
        %v351 = vrot.slane %v349, 5
        %v352 = vor.u32 %v348, %v351
        %v353 = vrot.slane %v352, 4
        %v355 = vshll.u32 %v310, 16
        %v357 = vrot.slane %v355, 5
        %v358 = vsel %vm330, %v353, %v357
        %v360 = vshrl.u32 %v311, 16
        %v362 = vrot.slane %v360, 4
        %v363 = vshll.u32 %v311, 16
        %v365 = vrot.slane %v363, 5
        %v366 = vor.u32 %v362, %v365
        %v367 = vrot.slane %v366, 4
        %v369 = vshll.u32 %v312, 16
        %v371 = vrot.slane %v369, 5
        %v372 = vsel %vm330, %v367, %v371
        %v374 = vshrl.u32 %v313, 16
        %v376 = vrot.slane %v374, 4
        %v377 = vshll.u32 %v313, 16
        %v379 = vrot.slane %v377, 5
        %v380 = vor.u32 %v376, %v379
        %v381 = vrot.slane %v380, 4
        %v383 = vshll.u32 %v314, 16
        %v385 = vrot.slane %v383, 5
        %v386 = vsel %vm330, %v381, %v385
        %v388 = vshrl.u32 %v315, 16
        %v390 = vrot.slane %v388, 4
        %v391 = vshll.u32 %v315, 16
        %v393 = vrot.slane %v391, 5
        %v394 = vor.u32 %v390, %v393
        %v395 = vrot.slane %v394, 4
        %v397 = vshll.u32 %v316, 16
        %v399 = vrot.slane %v397, 5
        %v400 = vsel %vm330, %v395, %v399
        %v402 = vshrl.u32 %v317, 16
        %v404 = vrot.slane %v402, 4
        %v405 = vshll.u32 %v317, 16
        %v407 = vrot.slane %v405, 5
        %v408 = vor.u32 %v404, %v407
        %v409 = vrot.slane %v408, 4
        %v411 = vshll.u32 %v318, 16
        %v413 = vrot.slane %v411, 5
        %v414 = vsel %vm330, %v409, %v413
        %v416 = vshrl.u32 %v319, 16
        %v418 = vrot.slane %v416, 4
        %v419 = vshll.u32 %v319, 16
        %v421 = vrot.slane %v419, 5
        %v422 = vor.u32 %v418, %v421
        %v423 = vrot.slane %v422, 4
        %v425 = vshll.u32 %v320, 16
        %v427 = vrot.slane %v425, 5
        %v428 = vsel %vm330, %v423, %v427
        %v430 = vshrl.u32 %v321, 16
        %v432 = vrot.slane %v430, 4
        %v433 = vshll.u32 %v321, 16
        %v435 = vrot.slane %v433, 5
        %v436 = vor.u32 %v432, %v435
        %v437 = vrot.slane %v436, 4
        %v439 = vshll.u32 %v322, 16
        %v441 = vrot.slane %v439, 5
        %v442 = vsel %vm330, %v437, %v441
        %s443 = scalar_lea.vmem %s3, 2
        %v444 = vld [vmem:[%s443] sm:$0x3]
        %v445 = vunpack.c.l.b16 %v344
        %v446 = vunpack.c.l.b16 %v358
        %v447 = vunpack.c.l.b16 %v372
        %v448 = vunpack.c.l.b16 %v386
        %v449 = vunpack.c.l.b16 %v400
        %v450 = vunpack.c.l.b16 %v414
        %v451 = vunpack.c.l.b16 %v428
        %v452 = vunpack.c.l.b16 %v442
        %v453 = vpack.c.b16 %v446, %v445
        %v454 = vpack.c.b16 %v448, %v447
        %v455 = vpack.c.b16 %v450, %v449
        %v456 = vpack.c.b16 %v452, %v451
        %vm457 = vcmask 31744
        %v459 = vsel %vm457, %v453, 0
        %v462 = vsel %vm457, %v454, 0
        %v465 = vsel %vm457, %v455, 0
        %v468 = vsel %vm457, %v456, 0
        %vm470 = vcmask 1041408
        %v472 = vsel %vm470, %v444, 0
        %474 = vmatprep.subr.bf16.mxu0 0
        %475 = vmatpush1.bf16.msra.mxu0 %v472
        %476 = vmatprep.subr.bf16.mxu0 0
        %477 = vmatpush1.bf16.msra.mxu0 0
        %478 = vmatprep.subr.bf16.mxu0 0
        %479 = vmatpush1.bf16.msra.mxu0 0
        %480 = vmatprep.subr.bf16.mxu0 0
        %481 = vmatpush1.bf16.msra.mxu0 0
        %482 = vmatprep.subr.bf16.mxu0 0
        %483 = vmatpush1.bf16.msra.mxu0 0
        %484 = vmatprep.subr.bf16.mxu0 0
        %485 = vmatpush1.bf16.msra.mxu0 0
        %486 = vmatprep.subr.bf16.mxu0 0
        %487 = vmatpush1.bf16.msra.mxu0 0
        %488 = vmatprep.subr.bf16.mxu0 0
        %489 = vmatpush1.bf16.msra.mxu0 0
        %490 = vmatprep.subr.bf16.mxu0 0
        %491 = vmatpush1.bf16.msra.mxu0 0
        %492 = vmatprep.subr.bf16.mxu0 0
        %493 = vmatpush1.bf16.msra.mxu0 0
        %494 = vmatprep.subr.bf16.mxu0 0
        %495 = vmatpush1.bf16.msra.mxu0 0
        %496 = vmatprep.subr.bf16.mxu0 0
        %497 = vmatpush1.bf16.msra.mxu0 0
        %498 = vmatprep.subr.bf16.mxu0 0
        %499 = vmatpush1.bf16.msra.mxu0 0
        %500 = vmatprep.subr.bf16.mxu0 0
        %501 = vmatpush1.bf16.msra.mxu0 0
        %502 = vmatprep.subr.bf16.mxu0 0
        %503 = vmatpush1.bf16.msra.mxu0 0
        %504 = vmatprep.subr.bf16.mxu0 0
        %505 = vmatpush1.bf16.msra.mxu0 0
        %506 = vmatprep.mubr.bf16.mxu0 0
        %507 = vmatmul.mubr.bf16.gmra.mrb[0].mxu0 %v459
        %v508 = vpop.f32.mrb[0].mxu0
        %v509 = vadd.f32 0.0, %v508
        %v510 = vpop.f32.mrb[0].mxu0
        %v511 = vpop.f32.mrb[0].mxu0
        %v512 = vadd.f32 0.0, %v511
        %v513 = vpop.f32.mrb[0].mxu0
        %514 = vmatprep.mubr.bf16.mxu0 0
        %515 = vmatmul.mubr.bf16.gmra.mrb[0].mxu0 %v462
        %v516 = vpop.f32.mrb[0].mxu0
        %v517 = vadd.f32 0.0, %v516
        %v518 = vpop.f32.mrb[0].mxu0
        %v519 = vpop.f32.mrb[0].mxu0
        %v520 = vadd.f32 0.0, %v519
        %v521 = vpop.f32.mrb[0].mxu0
        %522 = vmatprep.mubr.bf16.mxu0 0
        %523 = vmatmul.mubr.bf16.gmra.mrb[0].mxu0 %v465
        %v524 = vpop.f32.mrb[0].mxu0
        %v525 = vadd.f32 0.0, %v524
        %v526 = vpop.f32.mrb[0].mxu0
        %v527 = vpop.f32.mrb[0].mxu0
        %v528 = vadd.f32 0.0, %v527
        %v529 = vpop.f32.mrb[0].mxu0
        %530 = vmatprep.mubr.bf16.mxu0 0
        %531 = vmatmul.mubr.bf16.gmra.mrb[0].mxu0 %v468
        %v532 = vpop.f32.mrb[0].mxu0
        %v533 = vadd.f32 0.0, %v532
        %v534 = vpop.f32.mrb[0].mxu0
        %v535 = vpop.f32.mrb[0].mxu0
        %v536 = vadd.f32 0.0, %v535
        %v537 = vpop.f32.mrb[0].mxu0
        %538 = vdwg.mxu0
        %v547 = vunpack.c.l.b16 %v307
        %v548 = vunpack.c.l.b16 %v309
        %v549 = vunpack.c.l.b16 %v311
        %v550 = vunpack.c.l.b16 %v313
        %v551 = vunpack.c.l.b16 %v315
        %v552 = vunpack.c.l.b16 %v317
        %v553 = vunpack.c.l.b16 %v319
        %v554 = vunpack.c.l.b16 %v321
        %v555 = vpack.c.b16 %v548, %v547
        %v556 = vpack.c.b16 %v550, %v549
        %v557 = vpack.c.b16 %v552, %v551
        %v558 = vpack.c.b16 %v554, %v553
        %v560 = vsel %vm457, %v555, 0
        %v563 = vsel %vm457, %v556, 0
        %v566 = vsel %vm457, %v557, 0
        %v569 = vsel %vm457, %v558, 0
        %v572 = vsel %vm470, %v327, 0
        %574 = vmatprep.subr.bf16.mxu0 0
        %575 = vmatpush1.bf16.msra.mxu0 %v572
        %576 = vmatprep.subr.bf16.mxu0 0
        %577 = vmatpush1.bf16.msra.mxu0 0
        %578 = vmatprep.subr.bf16.mxu0 0
        %579 = vmatpush1.bf16.msra.mxu0 0
        %580 = vmatprep.subr.bf16.mxu0 0
        %581 = vmatpush1.bf16.msra.mxu0 0
        %582 = vmatprep.subr.bf16.mxu0 0
        %583 = vmatpush1.bf16.msra.mxu0 0
        %584 = vmatprep.subr.bf16.mxu0 0
        %585 = vmatpush1.bf16.msra.mxu0 0
        %586 = vmatprep.subr.bf16.mxu0 0
        %587 = vmatpush1.bf16.msra.mxu0 0
        %588 = vmatprep.subr.bf16.mxu0 0
        %589 = vmatpush1.bf16.msra.mxu0 0
        %590 = vmatprep.subr.bf16.mxu0 0
        %591 = vmatpush1.bf16.msra.mxu0 0
        %592 = vmatprep.subr.bf16.mxu0 0
        %593 = vmatpush1.bf16.msra.mxu0 0
        %594 = vmatprep.subr.bf16.mxu0 0
        %595 = vmatpush1.bf16.msra.mxu0 0
        %596 = vmatprep.subr.bf16.mxu0 0
        %597 = vmatpush1.bf16.msra.mxu0 0
        %598 = vmatprep.subr.bf16.mxu0 0
        %599 = vmatpush1.bf16.msra.mxu0 0
        %600 = vmatprep.subr.bf16.mxu0 0
        %601 = vmatpush1.bf16.msra.mxu0 0
        %602 = vmatprep.subr.bf16.mxu0 0
        %603 = vmatpush1.bf16.msra.mxu0 0
        %604 = vmatprep.subr.bf16.mxu0 0
        %605 = vmatpush1.bf16.msra.mxu0 0
        %606 = vmatprep.mubr.bf16.mxu0 0
        %607 = vmatmul.mubr.bf16.gmra.mrb[0].mxu0 %v560
        %v608 = vpop.f32.mrb[0].mxu0
        %v609 = vadd.f32 %v509, %v608
        %v610 = vpop.f32.mrb[0].mxu0
        %v611 = vpop.f32.mrb[0].mxu0
        %v612 = vadd.f32 %v512, %v611
        %v613 = vpop.f32.mrb[0].mxu0
        %614 = vmatprep.mubr.bf16.mxu0 0
        %615 = vmatmul.mubr.bf16.gmra.mrb[0].mxu0 %v563
        %v616 = vpop.f32.mrb[0].mxu0
        %v617 = vadd.f32 %v517, %v616
        %v618 = vpop.f32.mrb[0].mxu0
        %v619 = vpop.f32.mrb[0].mxu0
        %v620 = vadd.f32 %v520, %v619
        %v621 = vpop.f32.mrb[0].mxu0
        %622 = vmatprep.mubr.bf16.mxu0 0
        %623 = vmatmul.mubr.bf16.gmra.mrb[0].mxu0 %v566
        %v624 = vpop.f32.mrb[0].mxu0
        %v625 = vadd.f32 %v525, %v624
        %v626 = vpop.f32.mrb[0].mxu0
        %v627 = vpop.f32.mrb[0].mxu0
        %v628 = vadd.f32 %v528, %v627
        %v629 = vpop.f32.mrb[0].mxu0
        %630 = vmatprep.mubr.bf16.mxu0 0
        %631 = vmatmul.mubr.bf16.gmra.mrb[0].mxu0 %v569
        %v632 = vpop.f32.mrb[0].mxu0
        %v633 = vadd.f32 %v533, %v632
        %v634 = vpop.f32.mrb[0].mxu0
        %v635 = vpop.f32.mrb[0].mxu0
        %v636 = vadd.f32 %v536, %v635
        %v637 = vpop.f32.mrb[0].mxu0
        %638 = vdwg.mxu0
        %vm647 = vcmask 1042432
        %vm648 = vcmask 1046532
        %vm649 = vmor %vm647, %vm648
        %v650 = vrot.slane %v307, 5
        %v651 = vrot.slane %v650, 4
        %v652 = vrot.slane %v308, 5
        %v653 = vsel %vm649, %v651, %v652
        %v654 = vrot.slane %v309, 5
        %v655 = vrot.slane %v654, 4
        %v656 = vrot.slane %v310, 5
        %v657 = vsel %vm649, %v655, %v656
        %v658 = vrot.slane %v311, 5
        %v659 = vrot.slane %v658, 4
        %v660 = vrot.slane %v312, 5
        %v661 = vsel %vm649, %v659, %v660
        %v662 = vrot.slane %v313, 5
        %v663 = vrot.slane %v662, 4
        %v664 = vrot.slane %v314, 5
        %v665 = vsel %vm649, %v663, %v664
        %v666 = vrot.slane %v315, 5
        %v667 = vrot.slane %v666, 4
        %v668 = vrot.slane %v316, 5
        %v669 = vsel %vm649, %v667, %v668
        %v670 = vrot.slane %v317, 5
        %v671 = vrot.slane %v670, 4
        %v672 = vrot.slane %v318, 5
        %v673 = vsel %vm649, %v671, %v672
        %v674 = vrot.slane %v319, 5
        %v675 = vrot.slane %v674, 4
        %v676 = vrot.slane %v320, 5
        %v677 = vsel %vm649, %v675, %v676
        %v678 = vrot.slane %v321, 5
        %v679 = vrot.slane %v678, 4
        %v680 = vrot.slane %v322, 5
        %v681 = vsel %vm649, %v679, %v680
        %s682 = scalar_lea.vmem %s3, 4
        %v683 = vld [vmem:[%s682] sm:$0x3]
        %v684 = vunpack.c.l.b16 %v653
        %v685 = vunpack.c.l.b16 %v657
        %v686 = vunpack.c.l.b16 %v661
        %v687 = vunpack.c.l.b16 %v665
        %v688 = vunpack.c.l.b16 %v669
        %v689 = vunpack.c.l.b16 %v673
        %v690 = vunpack.c.l.b16 %v677
        %v691 = vunpack.c.l.b16 %v681
        %v692 = vpack.c.b16 %v685, %v684
        %v693 = vpack.c.b16 %v687, %v686
        %v694 = vpack.c.b16 %v689, %v688
        %v695 = vpack.c.b16 %v691, %v690
        %v697 = vsel %vm457, %v692, 0
        %v700 = vsel %vm457, %v693, 0
        %v703 = vsel %vm457, %v694, 0
        %v706 = vsel %vm457, %v695, 0
        %v709 = vsel %vm470, %v683, 0
        %711 = vmatprep.subr.bf16.mxu0 0
        %712 = vmatpush1.bf16.msra.mxu0 %v709
        %713 = vmatprep.subr.bf16.mxu0 0
        %714 = vmatpush1.bf16.msra.mxu0 0
        %715 = vmatprep.subr.bf16.mxu0 0
        %716 = vmatpush1.bf16.msra.mxu0 0
        %717 = vmatprep.subr.bf16.mxu0 0
        %718 = vmatpush1.bf16.msra.mxu0 0
        %719 = vmatprep.subr.bf16.mxu0 0
        %720 = vmatpush1.bf16.msra.mxu0 0
        %721 = vmatprep.subr.bf16.mxu0 0
        %722 = vmatpush1.bf16.msra.mxu0 0
        %723 = vmatprep.subr.bf16.mxu0 0
        %724 = vmatpush1.bf16.msra.mxu0 0
        %725 = vmatprep.subr.bf16.mxu0 0
        %726 = vmatpush1.bf16.msra.mxu0 0
        %727 = vmatprep.subr.bf16.mxu0 0
        %728 = vmatpush1.bf16.msra.mxu0 0
        %729 = vmatprep.subr.bf16.mxu0 0
        %730 = vmatpush1.bf16.msra.mxu0 0
        %731 = vmatprep.subr.bf16.mxu0 0
        %732 = vmatpush1.bf16.msra.mxu0 0
        %733 = vmatprep.subr.bf16.mxu0 0
        %734 = vmatpush1.bf16.msra.mxu0 0
        %735 = vmatprep.subr.bf16.mxu0 0
        %736 = vmatpush1.bf16.msra.mxu0 0
        %737 = vmatprep.subr.bf16.mxu0 0
        %738 = vmatpush1.bf16.msra.mxu0 0
        %739 = vmatprep.subr.bf16.mxu0 0
        %740 = vmatpush1.bf16.msra.mxu0 0
        %741 = vmatprep.subr.bf16.mxu0 0
        %742 = vmatpush1.bf16.msra.mxu0 0
        %743 = vmatprep.mubr.bf16.mxu0 0
        %744 = vmatmul.mubr.bf16.gmra.mrb[0].mxu0 %v697
        %v745 = vpop.f32.mrb[0].mxu0
        %v746 = vadd.f32 0.0, %v745
        %v747 = vpop.f32.mrb[0].mxu0
        %v748 = vpop.f32.mrb[0].mxu0
        %v749 = vadd.f32 0.0, %v748
        %v750 = vpop.f32.mrb[0].mxu0
        %751 = vmatprep.mubr.bf16.mxu0 0
        %752 = vmatmul.mubr.bf16.gmra.mrb[0].mxu0 %v700
        %v753 = vpop.f32.mrb[0].mxu0
        %v754 = vadd.f32 0.0, %v753
        %v755 = vpop.f32.mrb[0].mxu0
        %v756 = vpop.f32.mrb[0].mxu0
        %v757 = vadd.f32 0.0, %v756
        %v758 = vpop.f32.mrb[0].mxu0
        %759 = vmatprep.mubr.bf16.mxu0 0
        %760 = vmatmul.mubr.bf16.gmra.mrb[0].mxu0 %v703
        %v761 = vpop.f32.mrb[0].mxu0
        %v762 = vadd.f32 0.0, %v761
        %v763 = vpop.f32.mrb[0].mxu0
        %v764 = vpop.f32.mrb[0].mxu0
        %v765 = vadd.f32 0.0, %v764
        %v766 = vpop.f32.mrb[0].mxu0
        %767 = vmatprep.mubr.bf16.mxu0 0
        %768 = vmatmul.mubr.bf16.gmra.mrb[0].mxu0 %v706
        %v769 = vpop.f32.mrb[0].mxu0
        %v770 = vadd.f32 0.0, %v769
        %v771 = vpop.f32.mrb[0].mxu0
        %v772 = vpop.f32.mrb[0].mxu0
        %v773 = vadd.f32 0.0, %v772
        %v774 = vpop.f32.mrb[0].mxu0
        %775 = vdwg.mxu0
        %v776 = vadd.f32 %v609, %v746
        %v777 = vadd.f32 %v612, %v749
        %v778 = vadd.f32 %v617, %v754
        %v779 = vadd.f32 %v620, %v757
        %v780 = vadd.f32 %v625, %v762
        %v781 = vadd.f32 %v628, %v765
        %v782 = vadd.f32 %v633, %v770
        %v783 = vadd.f32 %v636, %v773
        %s784 = scalar_lea.vmem %s3, 6
        %v785 = vld [vmem:[%s784] sm:$0x3]
        %v787 = vunpack.c.l.b16 %v323
        %v788 = vpack.c.b16 %v549, %v548
        %v789 = vpack.c.b16 %v551, %v550
        %v790 = vpack.c.b16 %v553, %v552
        %v791 = vpack.c.b16 %v787, %v554
        %v793 = vsel %vm457, %v788, 0
        %v796 = vsel %vm457, %v789, 0
        %v799 = vsel %vm457, %v790, 0
        %v802 = vsel %vm457, %v791, 0
        %v805 = vsel %vm470, %v785, 0
        %807 = vmatprep.subr.bf16.mxu0 0
        %808 = vmatpush1.bf16.msra.mxu0 %v805
        %809 = vmatprep.subr.bf16.mxu0 0
        %810 = vmatpush1.bf16.msra.mxu0 0
        %811 = vmatprep.subr.bf16.mxu0 0
        %812 = vmatpush1.bf16.msra.mxu0 0
        %813 = vmatprep.subr.bf16.mxu0 0
        %814 = vmatpush1.bf16.msra.mxu0 0
        %815 = vmatprep.subr.bf16.mxu0 0
        %816 = vmatpush1.bf16.msra.mxu0 0
        %817 = vmatprep.subr.bf16.mxu0 0
        %818 = vmatpush1.bf16.msra.mxu0 0
        %819 = vmatprep.subr.bf16.mxu0 0
        %820 = vmatpush1.bf16.msra.mxu0 0
        %821 = vmatprep.subr.bf16.mxu0 0
        %822 = vmatpush1.bf16.msra.mxu0 0
        %823 = vmatprep.subr.bf16.mxu0 0
        %824 = vmatpush1.bf16.msra.mxu0 0
        %825 = vmatprep.subr.bf16.mxu0 0
        %826 = vmatpush1.bf16.msra.mxu0 0
        %827 = vmatprep.subr.bf16.mxu0 0
        %828 = vmatpush1.bf16.msra.mxu0 0
        %829 = vmatprep.subr.bf16.mxu0 0
        %830 = vmatpush1.bf16.msra.mxu0 0
        %831 = vmatprep.subr.bf16.mxu0 0
        %832 = vmatpush1.bf16.msra.mxu0 0
        %833 = vmatprep.subr.bf16.mxu0 0
        %834 = vmatpush1.bf16.msra.mxu0 0
        %835 = vmatprep.subr.bf16.mxu0 0
        %836 = vmatpush1.bf16.msra.mxu0 0
        %837 = vmatprep.subr.bf16.mxu0 0
        %838 = vmatpush1.bf16.msra.mxu0 0
        %839 = vmatprep.mubr.bf16.mxu0 0
        %840 = vmatmul.mubr.bf16.gmra.mrb[0].mxu0 %v793
        %v841 = vpop.f32.mrb[0].mxu0
        %v842 = vadd.f32 0.0, %v841
        %v843 = vpop.f32.mrb[0].mxu0
        %v844 = vpop.f32.mrb[0].mxu0
        %v845 = vadd.f32 0.0, %v844
        %v846 = vpop.f32.mrb[0].mxu0
        %847 = vmatprep.mubr.bf16.mxu0 0
        %848 = vmatmul.mubr.bf16.gmra.mrb[0].mxu0 %v796
        %v849 = vpop.f32.mrb[0].mxu0
        %v850 = vadd.f32 0.0, %v849
        %v851 = vpop.f32.mrb[0].mxu0
        %v852 = vpop.f32.mrb[0].mxu0
        %v853 = vadd.f32 0.0, %v852
        %v854 = vpop.f32.mrb[0].mxu0
        %855 = vmatprep.mubr.bf16.mxu0 0
        %856 = vmatmul.mubr.bf16.gmra.mrb[0].mxu0 %v799
        %v857 = vpop.f32.mrb[0].mxu0
        %v858 = vadd.f32 0.0, %v857
        %v859 = vpop.f32.mrb[0].mxu0
        %v860 = vpop.f32.mrb[0].mxu0
        %v861 = vadd.f32 0.0, %v860
        %v862 = vpop.f32.mrb[0].mxu0
        %863 = vmatprep.mubr.bf16.mxu0 0
        %864 = vmatmul.mubr.bf16.gmra.mrb[0].mxu0 %v802
        %v865 = vpop.f32.mrb[0].mxu0
        %v866 = vadd.f32 0.0, %v865
        %v867 = vpop.f32.mrb[0].mxu0
        %v868 = vpop.f32.mrb[0].mxu0
        %v869 = vadd.f32 0.0, %v868
        %v870 = vpop.f32.mrb[0].mxu0
        %871 = vdwg.mxu0
        %v872 = vadd.f32 %v776, %v842
        %v873 = vadd.f32 %v777, %v845
        %v874 = vadd.f32 %v778, %v850
        %v875 = vadd.f32 %v779, %v853
        %v876 = vadd.f32 %v780, %v858
        %v877 = vadd.f32 %v781, %v861
        %v878 = vadd.f32 %v782, %v866
        %v879 = vadd.f32 %v783, %v869
        %v881 = vshrl.u32 %v323, 16
        %v883 = vrot.slane %v881, 4
        %v884 = vshll.u32 %v323, 16
        %v886 = vrot.slane %v884, 5
        %v887 = vor.u32 %v883, %v886
        %v888 = vrot.slane %v887, 4
        %v890 = vshll.u32 %v324, 16
        %v892 = vrot.slane %v890, 5
        %v893 = vsel %vm330, %v888, %v892
        %s894 = scalar_lea.vmem %s3, 8
        %v895 = vld [vmem:[%s894] sm:$0x3]
        %v896 = vunpack.c.l.b16 %v893
        %v897 = vpack.c.b16 %v447, %v446
        %v898 = vpack.c.b16 %v449, %v448
        %v899 = vpack.c.b16 %v451, %v450
        %v900 = vpack.c.b16 %v896, %v452
        %v902 = vsel %vm457, %v897, 0
        %v905 = vsel %vm457, %v898, 0
        %v908 = vsel %vm457, %v899, 0
        %v911 = vsel %vm457, %v900, 0
        %v914 = vsel %vm470, %v895, 0
        %916 = vmatprep.subr.bf16.mxu0 0
        %917 = vmatpush1.bf16.msra.mxu0 %v914
        %918 = vmatprep.subr.bf16.mxu0 0
        %919 = vmatpush1.bf16.msra.mxu0 0
        %920 = vmatprep.subr.bf16.mxu0 0
        %921 = vmatpush1.bf16.msra.mxu0 0
        %922 = vmatprep.subr.bf16.mxu0 0
        %923 = vmatpush1.bf16.msra.mxu0 0
        %924 = vmatprep.subr.bf16.mxu0 0
        %925 = vmatpush1.bf16.msra.mxu0 0
        %926 = vmatprep.subr.bf16.mxu0 0
        %927 = vmatpush1.bf16.msra.mxu0 0
        %928 = vmatprep.subr.bf16.mxu0 0
        %929 = vmatpush1.bf16.msra.mxu0 0
        %930 = vmatprep.subr.bf16.mxu0 0
        %931 = vmatpush1.bf16.msra.mxu0 0
        %932 = vmatprep.subr.bf16.mxu0 0
        %933 = vmatpush1.bf16.msra.mxu0 0
        %934 = vmatprep.subr.bf16.mxu0 0
        %935 = vmatpush1.bf16.msra.mxu0 0
        %936 = vmatprep.subr.bf16.mxu0 0
        %937 = vmatpush1.bf16.msra.mxu0 0
        %938 = vmatprep.subr.bf16.mxu0 0
        %939 = vmatpush1.bf16.msra.mxu0 0
        %940 = vmatprep.subr.bf16.mxu0 0
        %941 = vmatpush1.bf16.msra.mxu0 0
        %942 = vmatprep.subr.bf16.mxu0 0
        %943 = vmatpush1.bf16.msra.mxu0 0
        %944 = vmatprep.subr.bf16.mxu0 0
        %945 = vmatpush1.bf16.msra.mxu0 0
        %946 = vmatprep.subr.bf16.mxu0 0
        %947 = vmatpush1.bf16.msra.mxu0 0
        %948 = vmatprep.mubr.bf16.mxu0 0
        %949 = vmatmul.mubr.bf16.gmra.mrb[0].mxu0 %v902
        %v950 = vpop.f32.mrb[0].mxu0
        %v951 = vadd.f32 0.0, %v950
        %v952 = vpop.f32.mrb[0].mxu0
        %v953 = vpop.f32.mrb[0].mxu0
        %v954 = vadd.f32 0.0, %v953
        %v955 = vpop.f32.mrb[0].mxu0
        %956 = vmatprep.mubr.bf16.mxu0 0
        %957 = vmatmul.mubr.bf16.gmra.mrb[0].mxu0 %v905
        %v958 = vpop.f32.mrb[0].mxu0
        %v959 = vadd.f32 0.0, %v958
        %v960 = vpop.f32.mrb[0].mxu0
        %v961 = vpop.f32.mrb[0].mxu0
        %v962 = vadd.f32 0.0, %v961
        %v963 = vpop.f32.mrb[0].mxu0
        %964 = vmatprep.mubr.bf16.mxu0 0
        %965 = vmatmul.mubr.bf16.gmra.mrb[0].mxu0 %v908
        %v966 = vpop.f32.mrb[0].mxu0
        %v967 = vadd.f32 0.0, %v966
        %v968 = vpop.f32.mrb[0].mxu0
        %v969 = vpop.f32.mrb[0].mxu0
        %v970 = vadd.f32 0.0, %v969
        %v971 = vpop.f32.mrb[0].mxu0
        %972 = vmatprep.mubr.bf16.mxu0 0
        %973 = vmatmul.mubr.bf16.gmra.mrb[0].mxu0 %v911
        %v974 = vpop.f32.mrb[0].mxu0
        %v975 = vadd.f32 0.0, %v974
        %v976 = vpop.f32.mrb[0].mxu0
        %v977 = vpop.f32.mrb[0].mxu0
        %v978 = vadd.f32 0.0, %v977
        %v979 = vpop.f32.mrb[0].mxu0
        %980 = vdwg.mxu0
        %v981 = vadd.f32 %v872, %v951
        %v982 = vadd.f32 %v873, %v954
        %v983 = vadd.f32 %v874, %v959
        %v984 = vadd.f32 %v875, %v962
        %v985 = vadd.f32 %v876, %v967
        %v986 = vadd.f32 %v877, %v970
        %v987 = vadd.f32 %v878, %v975
        %v988 = vadd.f32 %v879, %v978
        %v990 = vrot.slane %v323, 5
        %v991 = vrot.slane %v990, 4
        %v992 = vrot.slane %v324, 5
        %v993 = vsel %vm649, %v991, %v992
        %s994 = scalar_lea.vmem %s3, 10
        %v995 = vld [vmem:[%s994] sm:$0x3]
        %v996 = vunpack.c.l.b16 %v993
        %v997 = vpack.c.b16 %v686, %v685
        %v998 = vpack.c.b16 %v688, %v687
        %v999 = vpack.c.b16 %v690, %v689
        %v1000 = vpack.c.b16 %v996, %v691
        %v1002 = vsel %vm457, %v997, 0
        %v1005 = vsel %vm457, %v998, 0
        %v1008 = vsel %vm457, %v999, 0
        %v1011 = vsel %vm457, %v1000, 0
        %v1014 = vsel %vm470, %v995, 0
        %1016 = vmatprep.subr.bf16.mxu0 0
        %1017 = vmatpush1.bf16.msra.mxu0 %v1014
        %1018 = vmatprep.subr.bf16.mxu0 0
        %1019 = vmatpush1.bf16.msra.mxu0 0
        %1020 = vmatprep.subr.bf16.mxu0 0
        %1021 = vmatpush1.bf16.msra.mxu0 0
        %1022 = vmatprep.subr.bf16.mxu0 0
        %1023 = vmatpush1.bf16.msra.mxu0 0
        %1024 = vmatprep.subr.bf16.mxu0 0
        %1025 = vmatpush1.bf16.msra.mxu0 0
        %1026 = vmatprep.subr.bf16.mxu0 0
        %1027 = vmatpush1.bf16.msra.mxu0 0
        %1028 = vmatprep.subr.bf16.mxu0 0
        %1029 = vmatpush1.bf16.msra.mxu0 0
        %1030 = vmatprep.subr.bf16.mxu0 0
        %1031 = vmatpush1.bf16.msra.mxu0 0
        %1032 = vmatprep.subr.bf16.mxu0 0
        %1033 = vmatpush1.bf16.msra.mxu0 0
        %1034 = vmatprep.subr.bf16.mxu0 0
        %1035 = vmatpush1.bf16.msra.mxu0 0
        %1036 = vmatprep.subr.bf16.mxu0 0
        %1037 = vmatpush1.bf16.msra.mxu0 0
        %1038 = vmatprep.subr.bf16.mxu0 0
        %1039 = vmatpush1.bf16.msra.mxu0 0
        %1040 = vmatprep.subr.bf16.mxu0 0
        %1041 = vmatpush1.bf16.msra.mxu0 0
        %1042 = vmatprep.subr.bf16.mxu0 0
        %1043 = vmatpush1.bf16.msra.mxu0 0
        %1044 = vmatprep.subr.bf16.mxu0 0
        %1045 = vmatpush1.bf16.msra.mxu0 0
        %1046 = vmatprep.subr.bf16.mxu0 0
        %1047 = vmatpush1.bf16.msra.mxu0 0
        %1048 = vmatprep.mubr.bf16.mxu0 0
        %1049 = vmatmul.mubr.bf16.gmra.mrb[0].mxu0 %v1002
        %v1050 = vpop.f32.mrb[0].mxu0
        %v1051 = vadd.f32 0.0, %v1050
        %v1052 = vpop.f32.mrb[0].mxu0
        %v1053 = vpop.f32.mrb[0].mxu0
        %v1054 = vadd.f32 0.0, %v1053
        %v1055 = vpop.f32.mrb[0].mxu0
        %1056 = vmatprep.mubr.bf16.mxu0 0
        %1057 = vmatmul.mubr.bf16.gmra.mrb[0].mxu0 %v1005
        %v1058 = vpop.f32.mrb[0].mxu0
        %v1059 = vadd.f32 0.0, %v1058
        %v1060 = vpop.f32.mrb[0].mxu0
        %v1061 = vpop.f32.mrb[0].mxu0
        %v1062 = vadd.f32 0.0, %v1061
        %v1063 = vpop.f32.mrb[0].mxu0
        %1064 = vmatprep.mubr.bf16.mxu0 0
        %1065 = vmatmul.mubr.bf16.gmra.mrb[0].mxu0 %v1008
        %v1066 = vpop.f32.mrb[0].mxu0
        %v1067 = vadd.f32 0.0, %v1066
        %v1068 = vpop.f32.mrb[0].mxu0
        %v1069 = vpop.f32.mrb[0].mxu0
        %v1070 = vadd.f32 0.0, %v1069
        %v1071 = vpop.f32.mrb[0].mxu0
        %1072 = vmatprep.mubr.bf16.mxu0 0
        %1073 = vmatmul.mubr.bf16.gmra.mrb[0].mxu0 %v1011
        %v1074 = vpop.f32.mrb[0].mxu0
        %v1075 = vadd.f32 0.0, %v1074
        %v1076 = vpop.f32.mrb[0].mxu0
        %v1077 = vpop.f32.mrb[0].mxu0
        %v1078 = vadd.f32 0.0, %v1077
        %v1079 = vpop.f32.mrb[0].mxu0
        %1080 = vdwg.mxu0
        %v1081 = vadd.f32 %v981, %v1051
        %v1082 = vadd.f32 %v982, %v1054
        %v1083 = vadd.f32 %v983, %v1059
        %v1084 = vadd.f32 %v984, %v1062
        %v1085 = vadd.f32 %v985, %v1067
        %v1086 = vadd.f32 %v986, %v1070
        %v1087 = vadd.f32 %v987, %v1075
        %v1088 = vadd.f32 %v988, %v1078
        %s1089 = scalar_lea.vmem %s3, 12
        %v1090 = vld [vmem:[%s1089] sm:$0x3]
        %v1092 = vunpack.c.l.b16 %v325
        %v1093 = vpack.c.b16 %v1092, %v787
        %v1095 = vsel %vm457, %v1093, 0
        %v1098 = vsel %vm470, %v1090, 0
        %1100 = vmatprep.subr.bf16.mxu0 0
        %1101 = vmatpush1.bf16.msra.mxu0 %v1098
        %1102 = vmatprep.subr.bf16.mxu0 0
        %1103 = vmatpush1.bf16.msra.mxu0 0
        %1104 = vmatprep.subr.bf16.mxu0 0
        %1105 = vmatpush1.bf16.msra.mxu0 0
        %1106 = vmatprep.subr.bf16.mxu0 0
        %1107 = vmatpush1.bf16.msra.mxu0 0
        %1108 = vmatprep.subr.bf16.mxu0 0
        %1109 = vmatpush1.bf16.msra.mxu0 0
        %1110 = vmatprep.subr.bf16.mxu0 0
        %1111 = vmatpush1.bf16.msra.mxu0 0
        %1112 = vmatprep.subr.bf16.mxu0 0
        %1113 = vmatpush1.bf16.msra.mxu0 0
        %1114 = vmatprep.subr.bf16.mxu0 0
        %1115 = vmatpush1.bf16.msra.mxu0 0
        %1116 = vmatprep.subr.bf16.mxu0 0
        %1117 = vmatpush1.bf16.msra.mxu0 0
        %1118 = vmatprep.subr.bf16.mxu0 0
        %1119 = vmatpush1.bf16.msra.mxu0 0
        %1120 = vmatprep.subr.bf16.mxu0 0
        %1121 = vmatpush1.bf16.msra.mxu0 0
        %1122 = vmatprep.subr.bf16.mxu0 0
        %1123 = vmatpush1.bf16.msra.mxu0 0
        %1124 = vmatprep.subr.bf16.mxu0 0
        %1125 = vmatpush1.bf16.msra.mxu0 0
        %1126 = vmatprep.subr.bf16.mxu0 0
        %1127 = vmatpush1.bf16.msra.mxu0 0
        %1128 = vmatprep.subr.bf16.mxu0 0
        %1129 = vmatpush1.bf16.msra.mxu0 0
        %1130 = vmatprep.subr.bf16.mxu0 0
        %1131 = vmatpush1.bf16.msra.mxu0 0
        %1132 = vmatprep.mubr.bf16.mxu0 0
        %1133 = vmatmul.mubr.bf16.gmra.mrb[0].mxu0 %v563
        %v1134 = vpop.f32.mrb[0].mxu0
        %v1135 = vadd.f32 0.0, %v1134
        %v1136 = vpop.f32.mrb[0].mxu0
        %v1137 = vpop.f32.mrb[0].mxu0
        %v1138 = vadd.f32 0.0, %v1137
        %v1139 = vpop.f32.mrb[0].mxu0
        %1140 = vmatprep.mubr.bf16.mxu0 0
        %1141 = vmatmul.mubr.bf16.gmra.mrb[0].mxu0 %v566
        %v1142 = vpop.f32.mrb[0].mxu0
        %v1143 = vadd.f32 0.0, %v1142
        %v1144 = vpop.f32.mrb[0].mxu0
        %v1145 = vpop.f32.mrb[0].mxu0
        %v1146 = vadd.f32 0.0, %v1145
        %v1147 = vpop.f32.mrb[0].mxu0
        %1148 = vmatprep.mubr.bf16.mxu0 0
        %1149 = vmatmul.mubr.bf16.gmra.mrb[0].mxu0 %v569
        %v1150 = vpop.f32.mrb[0].mxu0
        %v1151 = vadd.f32 0.0, %v1150
        %v1152 = vpop.f32.mrb[0].mxu0
        %v1153 = vpop.f32.mrb[0].mxu0
        %v1154 = vadd.f32 0.0, %v1153
        %v1155 = vpop.f32.mrb[0].mxu0
        %1156 = vmatprep.mubr.bf16.mxu0 0
        %1157 = vmatmul.mubr.bf16.gmra.mrb[0].mxu0 %v1095
        %v1158 = vpop.f32.mrb[0].mxu0
        %v1159 = vadd.f32 0.0, %v1158
        %v1160 = vpop.f32.mrb[0].mxu0
        %v1161 = vpop.f32.mrb[0].mxu0
        %v1162 = vadd.f32 0.0, %v1161
        %v1163 = vpop.f32.mrb[0].mxu0
        %1164 = vdwg.mxu0
        %v1165 = vadd.f32 %v1081, %v1135
        %v1166 = vadd.f32 %v1082, %v1138
        %v1167 = vadd.f32 %v1083, %v1143
        %v1168 = vadd.f32 %v1084, %v1146
        %v1169 = vadd.f32 %v1085, %v1151
        %v1170 = vadd.f32 %v1086, %v1154
        %v1171 = vadd.f32 %v1087, %v1159
        %v1172 = vadd.f32 %v1088, %v1162
        %v1174 = vshrl.u32 %v325, 16
        %v1176 = vrot.slane %v1174, 4
        %v1177 = vshll.u32 %v325, 16
        %v1179 = vrot.slane %v1177, 5
        %v1180 = vor.u32 %v1176, %v1179
        %v1181 = vrot.slane %v1180, 4
        %v1183 = vshll.u32 %v326, 16
        %v1185 = vrot.slane %v1183, 5
        %v1186 = vsel %vm330, %v1181, %v1185
        %s1187 = scalar_lea.vmem %s3, 14
        %v1188 = vld [vmem:[%s1187] sm:$0x3]
        %v1189 = vunpack.c.l.b16 %v1186
        %v1190 = vpack.c.b16 %v1189, %v896
        %v1192 = vsel %vm457, %v1190, 0
        %v1195 = vsel %vm470, %v1188, 0
        %1197 = vmatprep.subr.bf16.mxu0 0
        %1198 = vmatpush1.bf16.msra.mxu0 %v1195
        %1199 = vmatprep.subr.bf16.mxu0 0
        %1200 = vmatpush1.bf16.msra.mxu0 0
        %1201 = vmatprep.subr.bf16.mxu0 0
        %1202 = vmatpush1.bf16.msra.mxu0 0
        %1203 = vmatprep.subr.bf16.mxu0 0
        %1204 = vmatpush1.bf16.msra.mxu0 0
        %1205 = vmatprep.subr.bf16.mxu0 0
        %1206 = vmatpush1.bf16.msra.mxu0 0
        %1207 = vmatprep.subr.bf16.mxu0 0
        %1208 = vmatpush1.bf16.msra.mxu0 0
        %1209 = vmatprep.subr.bf16.mxu0 0
        %1210 = vmatpush1.bf16.msra.mxu0 0
        %1211 = vmatprep.subr.bf16.mxu0 0
        %1212 = vmatpush1.bf16.msra.mxu0 0
        %1213 = vmatprep.subr.bf16.mxu0 0
        %1214 = vmatpush1.bf16.msra.mxu0 0
        %1215 = vmatprep.subr.bf16.mxu0 0
        %1216 = vmatpush1.bf16.msra.mxu0 0
        %1217 = vmatprep.subr.bf16.mxu0 0
        %1218 = vmatpush1.bf16.msra.mxu0 0
        %1219 = vmatprep.subr.bf16.mxu0 0
        %1220 = vmatpush1.bf16.msra.mxu0 0
        %1221 = vmatprep.subr.bf16.mxu0 0
        %1222 = vmatpush1.bf16.msra.mxu0 0
        %1223 = vmatprep.subr.bf16.mxu0 0
        %1224 = vmatpush1.bf16.msra.mxu0 0
        %1225 = vmatprep.subr.bf16.mxu0 0
        %1226 = vmatpush1.bf16.msra.mxu0 0
        %1227 = vmatprep.subr.bf16.mxu0 0
        %1228 = vmatpush1.bf16.msra.mxu0 0
        %1229 = vmatprep.mubr.bf16.mxu0 0
        %1230 = vmatmul.mubr.bf16.gmra.mrb[0].mxu0 %v462
        %v1231 = vpop.f32.mrb[0].mxu0
        %v1232 = vadd.f32 0.0, %v1231
        %v1233 = vpop.f32.mrb[0].mxu0
        %v1234 = vpop.f32.mrb[0].mxu0
        %v1235 = vadd.f32 0.0, %v1234
        %v1236 = vpop.f32.mrb[0].mxu0
        %1237 = vmatprep.mubr.bf16.mxu0 0
        %1238 = vmatmul.mubr.bf16.gmra.mrb[0].mxu0 %v465
        %v1239 = vpop.f32.mrb[0].mxu0
        %v1240 = vadd.f32 0.0, %v1239
        %v1241 = vpop.f32.mrb[0].mxu0
        %v1242 = vpop.f32.mrb[0].mxu0
        %v1243 = vadd.f32 0.0, %v1242
        %v1244 = vpop.f32.mrb[0].mxu0
        %1245 = vmatprep.mubr.bf16.mxu0 0
        %1246 = vmatmul.mubr.bf16.gmra.mrb[0].mxu0 %v468
        %v1247 = vpop.f32.mrb[0].mxu0
        %v1248 = vadd.f32 0.0, %v1247
        %v1249 = vpop.f32.mrb[0].mxu0
        %v1250 = vpop.f32.mrb[0].mxu0
        %v1251 = vadd.f32 0.0, %v1250
        %v1252 = vpop.f32.mrb[0].mxu0
        %1253 = vmatprep.mubr.bf16.mxu0 0
        %1254 = vmatmul.mubr.bf16.gmra.mrb[0].mxu0 %v1192
        %v1255 = vpop.f32.mrb[0].mxu0
        %v1256 = vadd.f32 0.0, %v1255
        %v1257 = vpop.f32.mrb[0].mxu0
        %v1258 = vpop.f32.mrb[0].mxu0
        %v1259 = vadd.f32 0.0, %v1258
        %v1260 = vpop.f32.mrb[0].mxu0
        %1261 = vdwg.mxu0
        %v1262 = vadd.f32 %v1165, %v1232
        %v1263 = vadd.f32 %v1166, %v1235
        %v1264 = vadd.f32 %v1167, %v1240
        %v1265 = vadd.f32 %v1168, %v1243
        %v1266 = vadd.f32 %v1169, %v1248
        %v1267 = vadd.f32 %v1170, %v1251
        %v1268 = vadd.f32 %v1171, %v1256
        %v1269 = vadd.f32 %v1172, %v1259
        %v1271 = vrot.slane %v325, 5
        %v1272 = vrot.slane %v1271, 4
        %v1273 = vrot.slane %v326, 5
        %v1274 = vsel %vm649, %v1272, %v1273
        %s1275 = scalar_lea.vmem %s3, 16
        %v1276 = vld [vmem:[%s1275] sm:$0x3]
        %v1277 = vunpack.c.l.b16 %v1274
        %v1278 = vpack.c.b16 %v1277, %v996
        %v1280 = vsel %vm457, %v1278, 0
        %v1283 = vsel %vm470, %v1276, 0
        %1285 = vmatprep.subr.bf16.mxu0 0
        %1286 = vmatpush1.bf16.msra.mxu0 %v1283
        %1287 = vmatprep.subr.bf16.mxu0 0
        %1288 = vmatpush1.bf16.msra.mxu0 0
        %1289 = vmatprep.subr.bf16.mxu0 0
        %1290 = vmatpush1.bf16.msra.mxu0 0
        %1291 = vmatprep.subr.bf16.mxu0 0
        %1292 = vmatpush1.bf16.msra.mxu0 0
        %1293 = vmatprep.subr.bf16.mxu0 0
        %1294 = vmatpush1.bf16.msra.mxu0 0
        %1295 = vmatprep.subr.bf16.mxu0 0
        %1296 = vmatpush1.bf16.msra.mxu0 0
        %1297 = vmatprep.subr.bf16.mxu0 0
        %1298 = vmatpush1.bf16.msra.mxu0 0
        %1299 = vmatprep.subr.bf16.mxu0 0
        %1300 = vmatpush1.bf16.msra.mxu0 0
        %1301 = vmatprep.subr.bf16.mxu0 0
        %1302 = vmatpush1.bf16.msra.mxu0 0
        %1303 = vmatprep.subr.bf16.mxu0 0
        %1304 = vmatpush1.bf16.msra.mxu0 0
        %1305 = vmatprep.subr.bf16.mxu0 0
        %1306 = vmatpush1.bf16.msra.mxu0 0
        %1307 = vmatprep.subr.bf16.mxu0 0
        %1308 = vmatpush1.bf16.msra.mxu0 0
        %1309 = vmatprep.subr.bf16.mxu0 0
        %1310 = vmatpush1.bf16.msra.mxu0 0
        %1311 = vmatprep.subr.bf16.mxu0 0
        %1312 = vmatpush1.bf16.msra.mxu0 0
        %1313 = vmatprep.subr.bf16.mxu0 0
        %1314 = vmatpush1.bf16.msra.mxu0 0
        %1315 = vmatprep.subr.bf16.mxu0 0
        %1316 = vmatpush1.bf16.msra.mxu0 0
        %1317 = vmatprep.mubr.bf16.mxu0 0
        %1318 = vmatmul.mubr.bf16.gmra.mrb[0].mxu0 %v700
        %v1319 = vpop.f32.mrb[0].mxu0
        %v1320 = vadd.f32 0.0, %v1319
        %v1321 = vpop.f32.mrb[0].mxu0
        %v1322 = vpop.f32.mrb[0].mxu0
        %v1323 = vadd.f32 0.0, %v1322
        %v1324 = vpop.f32.mrb[0].mxu0
        %1325 = vmatprep.mubr.bf16.mxu0 0
        %1326 = vmatmul.mubr.bf16.gmra.mrb[0].mxu0 %v703
        %v1327 = vpop.f32.mrb[0].mxu0
        %v1328 = vadd.f32 0.0, %v1327
        %v1329 = vpop.f32.mrb[0].mxu0
        %v1330 = vpop.f32.mrb[0].mxu0
        %v1331 = vadd.f32 0.0, %v1330
        %v1332 = vpop.f32.mrb[0].mxu0
        %1333 = vmatprep.mubr.bf16.mxu0 0
        %1334 = vmatmul.mubr.bf16.gmra.mrb[0].mxu0 %v706
        %v1335 = vpop.f32.mrb[0].mxu0
        %v1336 = vadd.f32 0.0, %v1335
        %v1337 = vpop.f32.mrb[0].mxu0
        %v1338 = vpop.f32.mrb[0].mxu0
        %v1339 = vadd.f32 0.0, %v1338
        %v1340 = vpop.f32.mrb[0].mxu0
        %1341 = vmatprep.mubr.bf16.mxu0 0
        %1342 = vmatmul.mubr.bf16.gmra.mrb[0].mxu0 %v1280
        %v1343 = vpop.f32.mrb[0].mxu0
        %v1344 = vadd.f32 0.0, %v1343
        %v1345 = vpop.f32.mrb[0].mxu0
        %v1346 = vpop.f32.mrb[0].mxu0
        %v1347 = vadd.f32 0.0, %v1346
        %v1348 = vpop.f32.mrb[0].mxu0
        %1349 = vdwg.mxu0
        %v1350 = vadd.f32 %v1262, %v1320
        %v1351 = vadd.f32 %v1263, %v1323
        %v1352 = vadd.f32 %v1264, %v1328
        %v1353 = vadd.f32 %v1265, %v1331
        %v1354 = vadd.f32 %v1266, %v1336
        %v1355 = vadd.f32 %v1267, %v1339
        %v1356 = vadd.f32 %v1268, %v1344
        %v1357 = vadd.f32 %v1269, %v1347
        %v1358 = vld [vmem:[%s293] sm:$0xf]
        %v1359 = vld [vmem:[%s293 + $0x4] sm:$0x1]
        %v1360 = vld [vmem:[%s293 + $0x8] sm:$0xf]
        %v1361 = vld [vmem:[%s293 + $0xc] sm:$0x1]
        %v1362 = vld [vmem:[%s293 + $0x10] sm:$0xf]
        %v1363 = vld [vmem:[%s293 + $0x14] sm:$0x1]
        %v1364 = vld [vmem:[%s293 + $0x18] sm:$0xf]
        %v1365 = vld [vmem:[%s293 + $0x1c] sm:$0x1]
        %v1366 = vld [vmem:[%s293 + $0x20] sm:$0xf]
        %v1367 = vld [vmem:[%s293 + $0x24] sm:$0x1]
        %v1368 = vld [vmem:[%s293 + $0x28] sm:$0xf]
        %v1369 = vld [vmem:[%s293 + $0x2c] sm:$0x1]
        %v1370 = vld [vmem:[%s293 + $0x30] sm:$0xf]
        %v1371 = vld [vmem:[%s293 + $0x34] sm:$0x1]
        %v1372 = vld [vmem:[%s293 + $0x38] sm:$0xf]
        %v1373 = vld [vmem:[%s293 + $0x3c] sm:$0x1]
        %v1374 = vld [vmem:[%s293 + $0x40] sm:$0xf]
        %v1375 = vld [vmem:[%s293 + $0x44] sm:$0x1]
        %v1376 = vld [vmem:[%s293 + $0x48] sm:$0xf]
        %v1377 = vld [vmem:[%s293 + $0x4c] sm:$0x1]
        %s1378 = scalar_lea.vmem %s3, 18
        %v1379 = vld [vmem:[%s1378] sm:$0x3]
        %v1388 = vunpack.c.l.b16 %v1358
        %v1389 = vunpack.c.l.b16 %v1360
        %v1390 = vunpack.c.l.b16 %v1362
        %v1391 = vunpack.c.l.b16 %v1364
        %v1392 = vunpack.c.l.b16 %v1366
        %v1393 = vunpack.c.l.b16 %v1368
        %v1394 = vunpack.c.l.b16 %v1370
        %v1395 = vunpack.c.l.b16 %v1372
        %v1396 = vpack.c.b16 %v1389, %v1388
        %v1397 = vpack.c.b16 %v1391, %v1390
        %v1398 = vpack.c.b16 %v1393, %v1392
        %v1399 = vpack.c.b16 %v1395, %v1394
        %v1401 = vsel %vm457, %v1396, 0
        %v1404 = vsel %vm457, %v1397, 0
        %v1407 = vsel %vm457, %v1398, 0
        %v1410 = vsel %vm457, %v1399, 0
        %v1413 = vsel %vm470, %v1379, 0
        %1415 = vmatprep.subr.bf16.mxu0 0
        %1416 = vmatpush1.bf16.msra.mxu0 %v1413
        %1417 = vmatprep.subr.bf16.mxu0 0
        %1418 = vmatpush1.bf16.msra.mxu0 0
        %1419 = vmatprep.subr.bf16.mxu0 0
        %1420 = vmatpush1.bf16.msra.mxu0 0
        %1421 = vmatprep.subr.bf16.mxu0 0
        %1422 = vmatpush1.bf16.msra.mxu0 0
        %1423 = vmatprep.subr.bf16.mxu0 0
        %1424 = vmatpush1.bf16.msra.mxu0 0
        %1425 = vmatprep.subr.bf16.mxu0 0
        %1426 = vmatpush1.bf16.msra.mxu0 0
        %1427 = vmatprep.subr.bf16.mxu0 0
        %1428 = vmatpush1.bf16.msra.mxu0 0
        %1429 = vmatprep.subr.bf16.mxu0 0
        %1430 = vmatpush1.bf16.msra.mxu0 0
        %1431 = vmatprep.subr.bf16.mxu0 0
        %1432 = vmatpush1.bf16.msra.mxu0 0
        %1433 = vmatprep.subr.bf16.mxu0 0
        %1434 = vmatpush1.bf16.msra.mxu0 0
        %1435 = vmatprep.subr.bf16.mxu0 0
        %1436 = vmatpush1.bf16.msra.mxu0 0
        %1437 = vmatprep.subr.bf16.mxu0 0
        %1438 = vmatpush1.bf16.msra.mxu0 0
        %1439 = vmatprep.subr.bf16.mxu0 0
        %1440 = vmatpush1.bf16.msra.mxu0 0
        %1441 = vmatprep.subr.bf16.mxu0 0
        %1442 = vmatpush1.bf16.msra.mxu0 0
        %1443 = vmatprep.subr.bf16.mxu0 0
        %1444 = vmatpush1.bf16.msra.mxu0 0
        %1445 = vmatprep.subr.bf16.mxu0 0
        %1446 = vmatpush1.bf16.msra.mxu0 0
        %1447 = vmatprep.mubr.bf16.mxu0 0
        %1448 = vmatmul.mubr.bf16.gmra.mrb[0].mxu0 %v1401
        %v1449 = vpop.f32.mrb[0].mxu0
        %v1450 = vadd.f32 0.0, %v1449
        %v1451 = vpop.f32.mrb[0].mxu0
        %v1452 = vpop.f32.mrb[0].mxu0
        %v1453 = vadd.f32 0.0, %v1452
        %v1454 = vpop.f32.mrb[0].mxu0
        %1455 = vmatprep.mubr.bf16.mxu0 0
        %1456 = vmatmul.mubr.bf16.gmra.mrb[0].mxu0 %v1404
        %v1457 = vpop.f32.mrb[0].mxu0
        %v1458 = vadd.f32 0.0, %v1457
        %v1459 = vpop.f32.mrb[0].mxu0
        %v1460 = vpop.f32.mrb[0].mxu0
        %v1461 = vadd.f32 0.0, %v1460
        %v1462 = vpop.f32.mrb[0].mxu0
        %1463 = vmatprep.mubr.bf16.mxu0 0
        %1464 = vmatmul.mubr.bf16.gmra.mrb[0].mxu0 %v1407
        %v1465 = vpop.f32.mrb[0].mxu0
        %v1466 = vadd.f32 0.0, %v1465
        %v1467 = vpop.f32.mrb[0].mxu0
        %v1468 = vpop.f32.mrb[0].mxu0
        %v1469 = vadd.f32 0.0, %v1468
        %v1470 = vpop.f32.mrb[0].mxu0
        %1471 = vmatprep.mubr.bf16.mxu0 0
        %1472 = vmatmul.mubr.bf16.gmra.mrb[0].mxu0 %v1410
        %v1473 = vpop.f32.mrb[0].mxu0
        %v1474 = vadd.f32 0.0, %v1473
        %v1475 = vpop.f32.mrb[0].mxu0
        %v1476 = vpop.f32.mrb[0].mxu0
        %v1477 = vadd.f32 0.0, %v1476
        %v1478 = vpop.f32.mrb[0].mxu0
        %1479 = vdwg.mxu0
        %v1480 = vadd.f32 %v1350, %v1450
        %v1481 = vadd.f32 %v1351, %v1453
        %v1482 = vadd.f32 %v1352, %v1458
        %v1483 = vadd.f32 %v1353, %v1461
        %v1484 = vadd.f32 %v1354, %v1466
        %v1485 = vadd.f32 %v1355, %v1469
        %v1486 = vadd.f32 %v1356, %v1474
        %v1487 = vadd.f32 %v1357, %v1477
        %v1489 = vshrl.u32 %v1358, 16
        %v1491 = vrot.slane %v1489, 4
        %v1492 = vshll.u32 %v1358, 16
        %v1494 = vrot.slane %v1492, 5
        %v1495 = vor.u32 %v1491, %v1494
        %v1496 = vrot.slane %v1495, 4
        %v1498 = vshll.u32 %v1359, 16
        %v1500 = vrot.slane %v1498, 5
        %v1501 = vsel %vm330, %v1496, %v1500
        %v1503 = vshrl.u32 %v1360, 16
        %v1505 = vrot.slane %v1503, 4
        %v1506 = vshll.u32 %v1360, 16
        %v1508 = vrot.slane %v1506, 5
        %v1509 = vor.u32 %v1505, %v1508
        %v1510 = vrot.slane %v1509, 4
        %v1512 = vshll.u32 %v1361, 16
        %v1514 = vrot.slane %v1512, 5
        %v1515 = vsel %vm330, %v1510, %v1514
        %v1517 = vshrl.u32 %v1362, 16
        %v1519 = vrot.slane %v1517, 4
        %v1520 = vshll.u32 %v1362, 16
        %v1522 = vrot.slane %v1520, 5
        %v1523 = vor.u32 %v1519, %v1522
        %v1524 = vrot.slane %v1523, 4
        %v1526 = vshll.u32 %v1363, 16
        %v1528 = vrot.slane %v1526, 5
        %v1529 = vsel %vm330, %v1524, %v1528
        %v1531 = vshrl.u32 %v1364, 16
        %v1533 = vrot.slane %v1531, 4
        %v1534 = vshll.u32 %v1364, 16
        %v1536 = vrot.slane %v1534, 5
        %v1537 = vor.u32 %v1533, %v1536
        %v1538 = vrot.slane %v1537, 4
        %v1540 = vshll.u32 %v1365, 16
        %v1542 = vrot.slane %v1540, 5
        %v1543 = vsel %vm330, %v1538, %v1542
        %v1545 = vshrl.u32 %v1366, 16
        %v1547 = vrot.slane %v1545, 4
        %v1548 = vshll.u32 %v1366, 16
        %v1550 = vrot.slane %v1548, 5
        %v1551 = vor.u32 %v1547, %v1550
        %v1552 = vrot.slane %v1551, 4
        %v1554 = vshll.u32 %v1367, 16
        %v1556 = vrot.slane %v1554, 5
        %v1557 = vsel %vm330, %v1552, %v1556
        %v1559 = vshrl.u32 %v1368, 16
        %v1561 = vrot.slane %v1559, 4
        %v1562 = vshll.u32 %v1368, 16
        %v1564 = vrot.slane %v1562, 5
        %v1565 = vor.u32 %v1561, %v1564
        %v1566 = vrot.slane %v1565, 4
        %v1568 = vshll.u32 %v1369, 16
        %v1570 = vrot.slane %v1568, 5
        %v1571 = vsel %vm330, %v1566, %v1570
        %v1573 = vshrl.u32 %v1370, 16
        %v1575 = vrot.slane %v1573, 4
        %v1576 = vshll.u32 %v1370, 16
        %v1578 = vrot.slane %v1576, 5
        %v1579 = vor.u32 %v1575, %v1578
        %v1580 = vrot.slane %v1579, 4
        %v1582 = vshll.u32 %v1371, 16
        %v1584 = vrot.slane %v1582, 5
        %v1585 = vsel %vm330, %v1580, %v1584
        %v1587 = vshrl.u32 %v1372, 16
        %v1589 = vrot.slane %v1587, 4
        %v1590 = vshll.u32 %v1372, 16
        %v1592 = vrot.slane %v1590, 5
        %v1593 = vor.u32 %v1589, %v1592
        %v1594 = vrot.slane %v1593, 4
        %v1596 = vshll.u32 %v1373, 16
        %v1598 = vrot.slane %v1596, 5
        %v1599 = vsel %vm330, %v1594, %v1598
        %s1600 = scalar_lea.vmem %s3, 20
        %v1601 = vld [vmem:[%s1600] sm:$0x3]
        %v1602 = vunpack.c.l.b16 %v1501
        %v1603 = vunpack.c.l.b16 %v1515
        %v1604 = vunpack.c.l.b16 %v1529
        %v1605 = vunpack.c.l.b16 %v1543
        %v1606 = vunpack.c.l.b16 %v1557
        %v1607 = vunpack.c.l.b16 %v1571
        %v1608 = vunpack.c.l.b16 %v1585
        %v1609 = vunpack.c.l.b16 %v1599
        %v1610 = vpack.c.b16 %v1603, %v1602
        %v1611 = vpack.c.b16 %v1605, %v1604
        %v1612 = vpack.c.b16 %v1607, %v1606
        %v1613 = vpack.c.b16 %v1609, %v1608
        %v1615 = vsel %vm457, %v1610, 0
        %v1618 = vsel %vm457, %v1611, 0
        %v1621 = vsel %vm457, %v1612, 0
        %v1624 = vsel %vm457, %v1613, 0
        %v1627 = vsel %vm470, %v1601, 0
        %1629 = vmatprep.subr.bf16.mxu0 0
        %1630 = vmatpush1.bf16.msra.mxu0 %v1627
        %1631 = vmatprep.subr.bf16.mxu0 0
        %1632 = vmatpush1.bf16.msra.mxu0 0
        %1633 = vmatprep.subr.bf16.mxu0 0
        %1634 = vmatpush1.bf16.msra.mxu0 0
        %1635 = vmatprep.subr.bf16.mxu0 0
        %1636 = vmatpush1.bf16.msra.mxu0 0
        %1637 = vmatprep.subr.bf16.mxu0 0
        %1638 = vmatpush1.bf16.msra.mxu0 0
        %1639 = vmatprep.subr.bf16.mxu0 0
        %1640 = vmatpush1.bf16.msra.mxu0 0
        %1641 = vmatprep.subr.bf16.mxu0 0
        %1642 = vmatpush1.bf16.msra.mxu0 0
        %1643 = vmatprep.subr.bf16.mxu0 0
        %1644 = vmatpush1.bf16.msra.mxu0 0
        %1645 = vmatprep.subr.bf16.mxu0 0
        %1646 = vmatpush1.bf16.msra.mxu0 0
        %1647 = vmatprep.subr.bf16.mxu0 0
        %1648 = vmatpush1.bf16.msra.mxu0 0
        %1649 = vmatprep.subr.bf16.mxu0 0
        %1650 = vmatpush1.bf16.msra.mxu0 0
        %1651 = vmatprep.subr.bf16.mxu0 0
        %1652 = vmatpush1.bf16.msra.mxu0 0
        %1653 = vmatprep.subr.bf16.mxu0 0
        %1654 = vmatpush1.bf16.msra.mxu0 0
        %1655 = vmatprep.subr.bf16.mxu0 0
        %1656 = vmatpush1.bf16.msra.mxu0 0
        %1657 = vmatprep.subr.bf16.mxu0 0
        %1658 = vmatpush1.bf16.msra.mxu0 0
        %1659 = vmatprep.subr.bf16.mxu0 0
        %1660 = vmatpush1.bf16.msra.mxu0 0
        %1661 = vmatprep.mubr.bf16.mxu0 0
        %1662 = vmatmul.mubr.bf16.gmra.mrb[0].mxu0 %v1615
        %v1663 = vpop.f32.mrb[0].mxu0
        %v1664 = vadd.f32 0.0, %v1663
        %v1665 = vpop.f32.mrb[0].mxu0
        %v1666 = vpop.f32.mrb[0].mxu0
        %v1667 = vadd.f32 0.0, %v1666
        %v1668 = vpop.f32.mrb[0].mxu0
        %1669 = vmatprep.mubr.bf16.mxu0 0
        %1670 = vmatmul.mubr.bf16.gmra.mrb[0].mxu0 %v1618
        %v1671 = vpop.f32.mrb[0].mxu0
        %v1672 = vadd.f32 0.0, %v1671
        %v1673 = vpop.f32.mrb[0].mxu0
        %v1674 = vpop.f32.mrb[0].mxu0
        %v1675 = vadd.f32 0.0, %v1674
        %v1676 = vpop.f32.mrb[0].mxu0
        %1677 = vmatprep.mubr.bf16.mxu0 0
        %1678 = vmatmul.mubr.bf16.gmra.mrb[0].mxu0 %v1621
        %v1679 = vpop.f32.mrb[0].mxu0
        %v1680 = vadd.f32 0.0, %v1679
        %v1681 = vpop.f32.mrb[0].mxu0
        %v1682 = vpop.f32.mrb[0].mxu0
        %v1683 = vadd.f32 0.0, %v1682
        %v1684 = vpop.f32.mrb[0].mxu0
        %1685 = vmatprep.mubr.bf16.mxu0 0
        %1686 = vmatmul.mubr.bf16.gmra.mrb[0].mxu0 %v1624
        %v1687 = vpop.f32.mrb[0].mxu0
        %v1688 = vadd.f32 0.0, %v1687
        %v1689 = vpop.f32.mrb[0].mxu0
        %v1690 = vpop.f32.mrb[0].mxu0
        %v1691 = vadd.f32 0.0, %v1690
        %v1692 = vpop.f32.mrb[0].mxu0
        %1693 = vdwg.mxu0
        %v1694 = vadd.f32 %v1480, %v1664
        %v1695 = vadd.f32 %v1481, %v1667
        %v1696 = vadd.f32 %v1482, %v1672
        %v1697 = vadd.f32 %v1483, %v1675
        %v1698 = vadd.f32 %v1484, %v1680
        %v1699 = vadd.f32 %v1485, %v1683
        %v1700 = vadd.f32 %v1486, %v1688
        %v1701 = vadd.f32 %v1487, %v1691
        %v1710 = vrot.slane %v1358, 5
        %v1711 = vrot.slane %v1710, 4
        %v1712 = vrot.slane %v1359, 5
        %v1713 = vsel %vm649, %v1711, %v1712
        %v1714 = vrot.slane %v1360, 5
        %v1715 = vrot.slane %v1714, 4
        %v1716 = vrot.slane %v1361, 5
        %v1717 = vsel %vm649, %v1715, %v1716
        %v1718 = vrot.slane %v1362, 5
        %v1719 = vrot.slane %v1718, 4
        %v1720 = vrot.slane %v1363, 5
        %v1721 = vsel %vm649, %v1719, %v1720
        %v1722 = vrot.slane %v1364, 5
        %v1723 = vrot.slane %v1722, 4
        %v1724 = vrot.slane %v1365, 5
        %v1725 = vsel %vm649, %v1723, %v1724
        %v1726 = vrot.slane %v1366, 5
        %v1727 = vrot.slane %v1726, 4
        %v1728 = vrot.slane %v1367, 5
        %v1729 = vsel %vm649, %v1727, %v1728
        %v1730 = vrot.slane %v1368, 5
        %v1731 = vrot.slane %v1730, 4
        %v1732 = vrot.slane %v1369, 5
        %v1733 = vsel %vm649, %v1731, %v1732
        %v1734 = vrot.slane %v1370, 5
        %v1735 = vrot.slane %v1734, 4
        %v1736 = vrot.slane %v1371, 5
        %v1737 = vsel %vm649, %v1735, %v1736
        %v1738 = vrot.slane %v1372, 5
        %v1739 = vrot.slane %v1738, 4
        %v1740 = vrot.slane %v1373, 5
        %v1741 = vsel %vm649, %v1739, %v1740
        %s1742 = scalar_lea.vmem %s3, 22
        %v1743 = vld [vmem:[%s1742] sm:$0x3]
        %v1744 = vunpack.c.l.b16 %v1713
        %v1745 = vunpack.c.l.b16 %v1717
        %v1746 = vunpack.c.l.b16 %v1721
        %v1747 = vunpack.c.l.b16 %v1725
        %v1748 = vunpack.c.l.b16 %v1729
        %v1749 = vunpack.c.l.b16 %v1733
        %v1750 = vunpack.c.l.b16 %v1737
        %v1751 = vunpack.c.l.b16 %v1741
        %v1752 = vpack.c.b16 %v1745, %v1744
        %v1753 = vpack.c.b16 %v1747, %v1746
        %v1754 = vpack.c.b16 %v1749, %v1748
        %v1755 = vpack.c.b16 %v1751, %v1750
        %v1757 = vsel %vm457, %v1752, 0
        %v1760 = vsel %vm457, %v1753, 0
        %v1763 = vsel %vm457, %v1754, 0
        %v1766 = vsel %vm457, %v1755, 0
        %v1769 = vsel %vm470, %v1743, 0
        %1771 = vmatprep.subr.bf16.mxu0 0
        %1772 = vmatpush1.bf16.msra.mxu0 %v1769
        %1773 = vmatprep.subr.bf16.mxu0 0
        %1774 = vmatpush1.bf16.msra.mxu0 0
        %1775 = vmatprep.subr.bf16.mxu0 0
        %1776 = vmatpush1.bf16.msra.mxu0 0
        %1777 = vmatprep.subr.bf16.mxu0 0
        %1778 = vmatpush1.bf16.msra.mxu0 0
        %1779 = vmatprep.subr.bf16.mxu0 0
        %1780 = vmatpush1.bf16.msra.mxu0 0
        %1781 = vmatprep.subr.bf16.mxu0 0
        %1782 = vmatpush1.bf16.msra.mxu0 0
        %1783 = vmatprep.subr.bf16.mxu0 0
        %1784 = vmatpush1.bf16.msra.mxu0 0
        %1785 = vmatprep.subr.bf16.mxu0 0
        %1786 = vmatpush1.bf16.msra.mxu0 0
        %1787 = vmatprep.subr.bf16.mxu0 0
        %1788 = vmatpush1.bf16.msra.mxu0 0
        %1789 = vmatprep.subr.bf16.mxu0 0
        %1790 = vmatpush1.bf16.msra.mxu0 0
        %1791 = vmatprep.subr.bf16.mxu0 0
        %1792 = vmatpush1.bf16.msra.mxu0 0
        %1793 = vmatprep.subr.bf16.mxu0 0
        %1794 = vmatpush1.bf16.msra.mxu0 0
        %1795 = vmatprep.subr.bf16.mxu0 0
        %1796 = vmatpush1.bf16.msra.mxu0 0
        %1797 = vmatprep.subr.bf16.mxu0 0
        %1798 = vmatpush1.bf16.msra.mxu0 0
        %1799 = vmatprep.subr.bf16.mxu0 0
        %1800 = vmatpush1.bf16.msra.mxu0 0
        %1801 = vmatprep.subr.bf16.mxu0 0
        %1802 = vmatpush1.bf16.msra.mxu0 0
        %1803 = vmatprep.mubr.bf16.mxu0 0
        %1804 = vmatmul.mubr.bf16.gmra.mrb[0].mxu0 %v1757
        %v1805 = vpop.f32.mrb[0].mxu0
        %v1806 = vadd.f32 0.0, %v1805
        %v1807 = vpop.f32.mrb[0].mxu0
        %v1808 = vpop.f32.mrb[0].mxu0
        %v1809 = vadd.f32 0.0, %v1808
        %v1810 = vpop.f32.mrb[0].mxu0
        %1811 = vmatprep.mubr.bf16.mxu0 0
        %1812 = vmatmul.mubr.bf16.gmra.mrb[0].mxu0 %v1760
        %v1813 = vpop.f32.mrb[0].mxu0
        %v1814 = vadd.f32 0.0, %v1813
        %v1815 = vpop.f32.mrb[0].mxu0
        %v1816 = vpop.f32.mrb[0].mxu0
        %v1817 = vadd.f32 0.0, %v1816
        %v1818 = vpop.f32.mrb[0].mxu0
        %1819 = vmatprep.mubr.bf16.mxu0 0
        %1820 = vmatmul.mubr.bf16.gmra.mrb[0].mxu0 %v1763
        %v1821 = vpop.f32.mrb[0].mxu0
        %v1822 = vadd.f32 0.0, %v1821
        %v1823 = vpop.f32.mrb[0].mxu0
        %v1824 = vpop.f32.mrb[0].mxu0
        %v1825 = vadd.f32 0.0, %v1824
        %v1826 = vpop.f32.mrb[0].mxu0
        %1827 = vmatprep.mubr.bf16.mxu0 0
        %1828 = vmatmul.mubr.bf16.gmra.mrb[0].mxu0 %v1766
        %v1829 = vpop.f32.mrb[0].mxu0
        %v1830 = vadd.f32 0.0, %v1829
        %v1831 = vpop.f32.mrb[0].mxu0
        %v1832 = vpop.f32.mrb[0].mxu0
        %v1833 = vadd.f32 0.0, %v1832
        %v1834 = vpop.f32.mrb[0].mxu0
        %1835 = vdwg.mxu0
        %v1836 = vadd.f32 %v1694, %v1806
        %v1837 = vadd.f32 %v1695, %v1809
        %v1838 = vadd.f32 %v1696, %v1814
        %v1839 = vadd.f32 %v1697, %v1817
        %v1840 = vadd.f32 %v1698, %v1822
        %v1841 = vadd.f32 %v1699, %v1825
        %v1842 = vadd.f32 %v1700, %v1830
        %v1843 = vadd.f32 %v1701, %v1833
        %s1844 = scalar_lea.vmem %s3, 24
        %v1845 = vld [vmem:[%s1844] sm:$0x3]
        %v1847 = vunpack.c.l.b16 %v1374
        %v1848 = vpack.c.b16 %v1390, %v1389
        %v1849 = vpack.c.b16 %v1392, %v1391
        %v1850 = vpack.c.b16 %v1394, %v1393
        %v1851 = vpack.c.b16 %v1847, %v1395
        %v1853 = vsel %vm457, %v1848, 0
        %v1856 = vsel %vm457, %v1849, 0
        %v1859 = vsel %vm457, %v1850, 0
        %v1862 = vsel %vm457, %v1851, 0
        %v1865 = vsel %vm470, %v1845, 0
        %1867 = vmatprep.subr.bf16.mxu0 0
        %1868 = vmatpush1.bf16.msra.mxu0 %v1865
        %1869 = vmatprep.subr.bf16.mxu0 0
        %1870 = vmatpush1.bf16.msra.mxu0 0
        %1871 = vmatprep.subr.bf16.mxu0 0
        %1872 = vmatpush1.bf16.msra.mxu0 0
        %1873 = vmatprep.subr.bf16.mxu0 0
        %1874 = vmatpush1.bf16.msra.mxu0 0
        %1875 = vmatprep.subr.bf16.mxu0 0
        %1876 = vmatpush1.bf16.msra.mxu0 0
        %1877 = vmatprep.subr.bf16.mxu0 0
        %1878 = vmatpush1.bf16.msra.mxu0 0
        %1879 = vmatprep.subr.bf16.mxu0 0
        %1880 = vmatpush1.bf16.msra.mxu0 0
        %1881 = vmatprep.subr.bf16.mxu0 0
        %1882 = vmatpush1.bf16.msra.mxu0 0
        %1883 = vmatprep.subr.bf16.mxu0 0
        %1884 = vmatpush1.bf16.msra.mxu0 0
        %1885 = vmatprep.subr.bf16.mxu0 0
        %1886 = vmatpush1.bf16.msra.mxu0 0
        %1887 = vmatprep.subr.bf16.mxu0 0
        %1888 = vmatpush1.bf16.msra.mxu0 0
        %1889 = vmatprep.subr.bf16.mxu0 0
        %1890 = vmatpush1.bf16.msra.mxu0 0
        %1891 = vmatprep.subr.bf16.mxu0 0
        %1892 = vmatpush1.bf16.msra.mxu0 0
        %1893 = vmatprep.subr.bf16.mxu0 0
        %1894 = vmatpush1.bf16.msra.mxu0 0
        %1895 = vmatprep.subr.bf16.mxu0 0
        %1896 = vmatpush1.bf16.msra.mxu0 0
        %1897 = vmatprep.subr.bf16.mxu0 0
        %1898 = vmatpush1.bf16.msra.mxu0 0
        %1899 = vmatprep.mubr.bf16.mxu0 0
        %1900 = vmatmul.mubr.bf16.gmra.mrb[0].mxu0 %v1853
        %v1901 = vpop.f32.mrb[0].mxu0
        %v1902 = vadd.f32 0.0, %v1901
        %v1903 = vpop.f32.mrb[0].mxu0
        %v1904 = vpop.f32.mrb[0].mxu0
        %v1905 = vadd.f32 0.0, %v1904
        %v1906 = vpop.f32.mrb[0].mxu0
        %1907 = vmatprep.mubr.bf16.mxu0 0
        %1908 = vmatmul.mubr.bf16.gmra.mrb[0].mxu0 %v1856
        %v1909 = vpop.f32.mrb[0].mxu0
        %v1910 = vadd.f32 0.0, %v1909
        %v1911 = vpop.f32.mrb[0].mxu0
        %v1912 = vpop.f32.mrb[0].mxu0
        %v1913 = vadd.f32 0.0, %v1912
        %v1914 = vpop.f32.mrb[0].mxu0
        %1915 = vmatprep.mubr.bf16.mxu0 0
        %1916 = vmatmul.mubr.bf16.gmra.mrb[0].mxu0 %v1859
        %v1917 = vpop.f32.mrb[0].mxu0
        %v1918 = vadd.f32 0.0, %v1917
        %v1919 = vpop.f32.mrb[0].mxu0
        %v1920 = vpop.f32.mrb[0].mxu0
        %v1921 = vadd.f32 0.0, %v1920
        %v1922 = vpop.f32.mrb[0].mxu0
        %1923 = vmatprep.mubr.bf16.mxu0 0
        %1924 = vmatmul.mubr.bf16.gmra.mrb[0].mxu0 %v1862
        %v1925 = vpop.f32.mrb[0].mxu0
        %v1926 = vadd.f32 0.0, %v1925
        %v1927 = vpop.f32.mrb[0].mxu0
        %v1928 = vpop.f32.mrb[0].mxu0
        %v1929 = vadd.f32 0.0, %v1928
        %v1930 = vpop.f32.mrb[0].mxu0
        %1931 = vdwg.mxu0
        %v1932 = vadd.f32 %v1836, %v1902
        %v1933 = vadd.f32 %v1837, %v1905
        %v1934 = vadd.f32 %v1838, %v1910
        %v1935 = vadd.f32 %v1839, %v1913
        %v1936 = vadd.f32 %v1840, %v1918
        %v1937 = vadd.f32 %v1841, %v1921
        %v1938 = vadd.f32 %v1842, %v1926
        %v1939 = vadd.f32 %v1843, %v1929
        %v1941 = vshrl.u32 %v1374, 16
        %v1943 = vrot.slane %v1941, 4
        %v1944 = vshll.u32 %v1374, 16
        %v1946 = vrot.slane %v1944, 5
        %v1947 = vor.u32 %v1943, %v1946
        %v1948 = vrot.slane %v1947, 4
        %v1950 = vshll.u32 %v1375, 16
        %v1952 = vrot.slane %v1950, 5
        %v1953 = vsel %vm330, %v1948, %v1952
        %s1954 = scalar_lea.vmem %s3, 26
        %v1955 = vld [vmem:[%s1954] sm:$0x3]
        %v1956 = vunpack.c.l.b16 %v1953
        %v1957 = vpack.c.b16 %v1604, %v1603
        %v1958 = vpack.c.b16 %v1606, %v1605
        %v1959 = vpack.c.b16 %v1608, %v1607
        %v1960 = vpack.c.b16 %v1956, %v1609
        %v1962 = vsel %vm457, %v1957, 0
        %v1965 = vsel %vm457, %v1958, 0
        %v1968 = vsel %vm457, %v1959, 0
        %v1971 = vsel %vm457, %v1960, 0
        %v1974 = vsel %vm470, %v1955, 0
        %1976 = vmatprep.subr.bf16.mxu0 0
        %1977 = vmatpush1.bf16.msra.mxu0 %v1974
        %1978 = vmatprep.subr.bf16.mxu0 0
        %1979 = vmatpush1.bf16.msra.mxu0 0
        %1980 = vmatprep.subr.bf16.mxu0 0
        %1981 = vmatpush1.bf16.msra.mxu0 0
        %1982 = vmatprep.subr.bf16.mxu0 0
        %1983 = vmatpush1.bf16.msra.mxu0 0
        %1984 = vmatprep.subr.bf16.mxu0 0
        %1985 = vmatpush1.bf16.msra.mxu0 0
        %1986 = vmatprep.subr.bf16.mxu0 0
        %1987 = vmatpush1.bf16.msra.mxu0 0
        %1988 = vmatprep.subr.bf16.mxu0 0
        %1989 = vmatpush1.bf16.msra.mxu0 0
        %1990 = vmatprep.subr.bf16.mxu0 0
        %1991 = vmatpush1.bf16.msra.mxu0 0
        %1992 = vmatprep.subr.bf16.mxu0 0
        %1993 = vmatpush1.bf16.msra.mxu0 0
        %1994 = vmatprep.subr.bf16.mxu0 0
        %1995 = vmatpush1.bf16.msra.mxu0 0
        %1996 = vmatprep.subr.bf16.mxu0 0
        %1997 = vmatpush1.bf16.msra.mxu0 0
        %1998 = vmatprep.subr.bf16.mxu0 0
        %1999 = vmatpush1.bf16.msra.mxu0 0
        %2000 = vmatprep.subr.bf16.mxu0 0
        %2001 = vmatpush1.bf16.msra.mxu0 0
        %2002 = vmatprep.subr.bf16.mxu0 0
        %2003 = vmatpush1.bf16.msra.mxu0 0
        %2004 = vmatprep.subr.bf16.mxu0 0
        %2005 = vmatpush1.bf16.msra.mxu0 0
        %2006 = vmatprep.subr.bf16.mxu0 0
        %2007 = vmatpush1.bf16.msra.mxu0 0
        %2008 = vmatprep.mubr.bf16.mxu0 0
        %2009 = vmatmul.mubr.bf16.gmra.mrb[0].mxu0 %v1962
        %v2010 = vpop.f32.mrb[0].mxu0
        %v2011 = vadd.f32 0.0, %v2010
        %v2012 = vpop.f32.mrb[0].mxu0
        %v2013 = vpop.f32.mrb[0].mxu0
        %v2014 = vadd.f32 0.0, %v2013
        %v2015 = vpop.f32.mrb[0].mxu0
        %2016 = vmatprep.mubr.bf16.mxu0 0
        %2017 = vmatmul.mubr.bf16.gmra.mrb[0].mxu0 %v1965
        %v2018 = vpop.f32.mrb[0].mxu0
        %v2019 = vadd.f32 0.0, %v2018
        %v2020 = vpop.f32.mrb[0].mxu0
        %v2021 = vpop.f32.mrb[0].mxu0
        %v2022 = vadd.f32 0.0, %v2021
        %v2023 = vpop.f32.mrb[0].mxu0
        %2024 = vmatprep.mubr.bf16.mxu0 0
        %2025 = vmatmul.mubr.bf16.gmra.mrb[0].mxu0 %v1968
        %v2026 = vpop.f32.mrb[0].mxu0
        %v2027 = vadd.f32 0.0, %v2026
        %v2028 = vpop.f32.mrb[0].mxu0
        %v2029 = vpop.f32.mrb[0].mxu0
        %v2030 = vadd.f32 0.0, %v2029
        %v2031 = vpop.f32.mrb[0].mxu0
        %2032 = vmatprep.mubr.bf16.mxu0 0
        %2033 = vmatmul.mubr.bf16.gmra.mrb[0].mxu0 %v1971
        %v2034 = vpop.f32.mrb[0].mxu0
        %v2035 = vadd.f32 0.0, %v2034
        %v2036 = vpop.f32.mrb[0].mxu0
        %v2037 = vpop.f32.mrb[0].mxu0
        %v2038 = vadd.f32 0.0, %v2037
        %v2039 = vpop.f32.mrb[0].mxu0
        %2040 = vdwg.mxu0
        %v2041 = vadd.f32 %v1932, %v2011
        %v2042 = vadd.f32 %v1933, %v2014
        %v2043 = vadd.f32 %v1934, %v2019
        %v2044 = vadd.f32 %v1935, %v2022
        %v2045 = vadd.f32 %v1936, %v2027
        %v2046 = vadd.f32 %v1937, %v2030
        %v2047 = vadd.f32 %v1938, %v2035
        %v2048 = vadd.f32 %v1939, %v2038
        %v2050 = vrot.slane %v1374, 5
        %v2051 = vrot.slane %v2050, 4
        %v2052 = vrot.slane %v1375, 5
        %v2053 = vsel %vm649, %v2051, %v2052
        %s2054 = scalar_lea.vmem %s3, 28
        %v2055 = vld [vmem:[%s2054] sm:$0x3]
        %v2056 = vunpack.c.l.b16 %v2053
        %v2057 = vpack.c.b16 %v1746, %v1745
        %v2058 = vpack.c.b16 %v1748, %v1747
        %v2059 = vpack.c.b16 %v1750, %v1749
        %v2060 = vpack.c.b16 %v2056, %v1751
        %v2062 = vsel %vm457, %v2057, 0
        %v2065 = vsel %vm457, %v2058, 0
        %v2068 = vsel %vm457, %v2059, 0
        %v2071 = vsel %vm457, %v2060, 0
        %v2074 = vsel %vm470, %v2055, 0
        %2076 = vmatprep.subr.bf16.mxu0 0
        %2077 = vmatpush1.bf16.msra.mxu0 %v2074
        %2078 = vmatprep.subr.bf16.mxu0 0
        %2079 = vmatpush1.bf16.msra.mxu0 0
        %2080 = vmatprep.subr.bf16.mxu0 0
        %2081 = vmatpush1.bf16.msra.mxu0 0
        %2082 = vmatprep.subr.bf16.mxu0 0
        %2083 = vmatpush1.bf16.msra.mxu0 0
        %2084 = vmatprep.subr.bf16.mxu0 0
        %2085 = vmatpush1.bf16.msra.mxu0 0
        %2086 = vmatprep.subr.bf16.mxu0 0
        %2087 = vmatpush1.bf16.msra.mxu0 0
        %2088 = vmatprep.subr.bf16.mxu0 0
        %2089 = vmatpush1.bf16.msra.mxu0 0
        %2090 = vmatprep.subr.bf16.mxu0 0
        %2091 = vmatpush1.bf16.msra.mxu0 0
        %2092 = vmatprep.subr.bf16.mxu0 0
        %2093 = vmatpush1.bf16.msra.mxu0 0
        %2094 = vmatprep.subr.bf16.mxu0 0
        %2095 = vmatpush1.bf16.msra.mxu0 0
        %2096 = vmatprep.subr.bf16.mxu0 0
        %2097 = vmatpush1.bf16.msra.mxu0 0
        %2098 = vmatprep.subr.bf16.mxu0 0
        %2099 = vmatpush1.bf16.msra.mxu0 0
        %2100 = vmatprep.subr.bf16.mxu0 0
        %2101 = vmatpush1.bf16.msra.mxu0 0
        %2102 = vmatprep.subr.bf16.mxu0 0
        %2103 = vmatpush1.bf16.msra.mxu0 0
        %2104 = vmatprep.subr.bf16.mxu0 0
        %2105 = vmatpush1.bf16.msra.mxu0 0
        %2106 = vmatprep.subr.bf16.mxu0 0
        %2107 = vmatpush1.bf16.msra.mxu0 0
        %2108 = vmatprep.mubr.bf16.mxu0 0
        %2109 = vmatmul.mubr.bf16.gmra.mrb[0].mxu0 %v2062
        %v2110 = vpop.f32.mrb[0].mxu0
        %v2111 = vadd.f32 0.0, %v2110
        %v2112 = vpop.f32.mrb[0].mxu0
        %v2113 = vpop.f32.mrb[0].mxu0
        %v2114 = vadd.f32 0.0, %v2113
        %v2115 = vpop.f32.mrb[0].mxu0
        %2116 = vmatprep.mubr.bf16.mxu0 0
        %2117 = vmatmul.mubr.bf16.gmra.mrb[0].mxu0 %v2065
        %v2118 = vpop.f32.mrb[0].mxu0
        %v2119 = vadd.f32 0.0, %v2118
        %v2120 = vpop.f32.mrb[0].mxu0
        %v2121 = vpop.f32.mrb[0].mxu0
        %v2122 = vadd.f32 0.0, %v2121
        %v2123 = vpop.f32.mrb[0].mxu0
        %2124 = vmatprep.mubr.bf16.mxu0 0
        %2125 = vmatmul.mubr.bf16.gmra.mrb[0].mxu0 %v2068
        %v2126 = vpop.f32.mrb[0].mxu0
        %v2127 = vadd.f32 0.0, %v2126
        %v2128 = vpop.f32.mrb[0].mxu0
        %v2129 = vpop.f32.mrb[0].mxu0
        %v2130 = vadd.f32 0.0, %v2129
        %v2131 = vpop.f32.mrb[0].mxu0
        %2132 = vmatprep.mubr.bf16.mxu0 0
        %2133 = vmatmul.mubr.bf16.gmra.mrb[0].mxu0 %v2071
        %v2134 = vpop.f32.mrb[0].mxu0
        %v2135 = vadd.f32 0.0, %v2134
        %v2136 = vpop.f32.mrb[0].mxu0
        %v2137 = vpop.f32.mrb[0].mxu0
        %v2138 = vadd.f32 0.0, %v2137
        %v2139 = vpop.f32.mrb[0].mxu0
        %2140 = vdwg.mxu0
        %v2141 = vadd.f32 %v2041, %v2111
        %v2142 = vadd.f32 %v2042, %v2114
        %v2143 = vadd.f32 %v2043, %v2119
        %v2144 = vadd.f32 %v2044, %v2122
        %v2145 = vadd.f32 %v2045, %v2127
        %v2146 = vadd.f32 %v2046, %v2130
        %v2147 = vadd.f32 %v2047, %v2135
        %v2148 = vadd.f32 %v2048, %v2138
        %s2149 = scalar_lea.vmem %s3, 30
        %v2150 = vld [vmem:[%s2149] sm:$0x3]
        %v2152 = vunpack.c.l.b16 %v1376
        %v2153 = vpack.c.b16 %v2152, %v1847
        %v2155 = vsel %vm457, %v2153, 0
        %v2158 = vsel %vm470, %v2150, 0
        %2160 = vmatprep.subr.bf16.mxu0 0
        %2161 = vmatpush1.bf16.msra.mxu0 %v2158
        %2162 = vmatprep.subr.bf16.mxu0 0
        %2163 = vmatpush1.bf16.msra.mxu0 0
        %2164 = vmatprep.subr.bf16.mxu0 0
        %2165 = vmatpush1.bf16.msra.mxu0 0
        %2166 = vmatprep.subr.bf16.mxu0 0
        %2167 = vmatpush1.bf16.msra.mxu0 0
        %2168 = vmatprep.subr.bf16.mxu0 0
        %2169 = vmatpush1.bf16.msra.mxu0 0
        %2170 = vmatprep.subr.bf16.mxu0 0
        %2171 = vmatpush1.bf16.msra.mxu0 0
        %2172 = vmatprep.subr.bf16.mxu0 0
        %2173 = vmatpush1.bf16.msra.mxu0 0
        %2174 = vmatprep.subr.bf16.mxu0 0
        %2175 = vmatpush1.bf16.msra.mxu0 0
        %2176 = vmatprep.subr.bf16.mxu0 0
        %2177 = vmatpush1.bf16.msra.mxu0 0
        %2178 = vmatprep.subr.bf16.mxu0 0
        %2179 = vmatpush1.bf16.msra.mxu0 0
        %2180 = vmatprep.subr.bf16.mxu0 0
        %2181 = vmatpush1.bf16.msra.mxu0 0
        %2182 = vmatprep.subr.bf16.mxu0 0
        %2183 = vmatpush1.bf16.msra.mxu0 0
        %2184 = vmatprep.subr.bf16.mxu0 0
        %2185 = vmatpush1.bf16.msra.mxu0 0
        %2186 = vmatprep.subr.bf16.mxu0 0
        %2187 = vmatpush1.bf16.msra.mxu0 0
        %2188 = vmatprep.subr.bf16.mxu0 0
        %2189 = vmatpush1.bf16.msra.mxu0 0
        %2190 = vmatprep.subr.bf16.mxu0 0
        %2191 = vmatpush1.bf16.msra.mxu0 0
        %2192 = vmatprep.mubr.bf16.mxu0 0
        %2193 = vmatmul.mubr.bf16.gmra.mrb[0].mxu0 %v1404
        %v2194 = vpop.f32.mrb[0].mxu0
        %v2195 = vadd.f32 0.0, %v2194
        %v2196 = vpop.f32.mrb[0].mxu0
        %v2197 = vpop.f32.mrb[0].mxu0
        %v2198 = vadd.f32 0.0, %v2197
        %v2199 = vpop.f32.mrb[0].mxu0
        %2200 = vmatprep.mubr.bf16.mxu0 0
        %2201 = vmatmul.mubr.bf16.gmra.mrb[0].mxu0 %v1407
        %v2202 = vpop.f32.mrb[0].mxu0
        %v2203 = vadd.f32 0.0, %v2202
        %v2204 = vpop.f32.mrb[0].mxu0
        %v2205 = vpop.f32.mrb[0].mxu0
        %v2206 = vadd.f32 0.0, %v2205
        %v2207 = vpop.f32.mrb[0].mxu0
        %2208 = vmatprep.mubr.bf16.mxu0 0
        %2209 = vmatmul.mubr.bf16.gmra.mrb[0].mxu0 %v1410
        %v2210 = vpop.f32.mrb[0].mxu0
        %v2211 = vadd.f32 0.0, %v2210
        %v2212 = vpop.f32.mrb[0].mxu0
        %v2213 = vpop.f32.mrb[0].mxu0
        %v2214 = vadd.f32 0.0, %v2213
        %v2215 = vpop.f32.mrb[0].mxu0
        %2216 = vmatprep.mubr.bf16.mxu0 0
        %2217 = vmatmul.mubr.bf16.gmra.mrb[0].mxu0 %v2155
        %v2218 = vpop.f32.mrb[0].mxu0
        %v2219 = vadd.f32 0.0, %v2218
        %v2220 = vpop.f32.mrb[0].mxu0
        %v2221 = vpop.f32.mrb[0].mxu0
        %v2222 = vadd.f32 0.0, %v2221
        %v2223 = vpop.f32.mrb[0].mxu0
        %2224 = vdwg.mxu0
        %v2225 = vadd.f32 %v2141, %v2195
        %v2226 = vadd.f32 %v2142, %v2198
        %v2227 = vadd.f32 %v2143, %v2203
        %v2228 = vadd.f32 %v2144, %v2206
        %v2229 = vadd.f32 %v2145, %v2211
        %v2230 = vadd.f32 %v2146, %v2214
        %v2231 = vadd.f32 %v2147, %v2219
        %v2232 = vadd.f32 %v2148, %v2222
        %v2234 = vshrl.u32 %v1376, 16
        %v2236 = vrot.slane %v2234, 4
        %v2237 = vshll.u32 %v1376, 16
        %v2239 = vrot.slane %v2237, 5
        %v2240 = vor.u32 %v2236, %v2239
        %v2241 = vrot.slane %v2240, 4
        %v2243 = vshll.u32 %v1377, 16
        %v2245 = vrot.slane %v2243, 5
        %v2246 = vsel %vm330, %v2241, %v2245
        %s2247 = scalar_lea.vmem %s3, 32
        %v2248 = vld [vmem:[%s2247] sm:$0x3]
        %v2249 = vunpack.c.l.b16 %v2246
        %v2250 = vpack.c.b16 %v2249, %v1956
        %v2252 = vsel %vm457, %v2250, 0
        %v2255 = vsel %vm470, %v2248, 0
        %2257 = vmatprep.subr.bf16.mxu0 0
        %2258 = vmatpush1.bf16.msra.mxu0 %v2255
        %2259 = vmatprep.subr.bf16.mxu0 0
        %2260 = vmatpush1.bf16.msra.mxu0 0
        %2261 = vmatprep.subr.bf16.mxu0 0
        %2262 = vmatpush1.bf16.msra.mxu0 0
        %2263 = vmatprep.subr.bf16.mxu0 0
        %2264 = vmatpush1.bf16.msra.mxu0 0
        %2265 = vmatprep.subr.bf16.mxu0 0
        %2266 = vmatpush1.bf16.msra.mxu0 0
        %2267 = vmatprep.subr.bf16.mxu0 0
        %2268 = vmatpush1.bf16.msra.mxu0 0
        %2269 = vmatprep.subr.bf16.mxu0 0
        %2270 = vmatpush1.bf16.msra.mxu0 0
        %2271 = vmatprep.subr.bf16.mxu0 0
        %2272 = vmatpush1.bf16.msra.mxu0 0
        %2273 = vmatprep.subr.bf16.mxu0 0
        %2274 = vmatpush1.bf16.msra.mxu0 0
        %2275 = vmatprep.subr.bf16.mxu0 0
        %2276 = vmatpush1.bf16.msra.mxu0 0
        %2277 = vmatprep.subr.bf16.mxu0 0
        %2278 = vmatpush1.bf16.msra.mxu0 0
        %2279 = vmatprep.subr.bf16.mxu0 0
        %2280 = vmatpush1.bf16.msra.mxu0 0
        %2281 = vmatprep.subr.bf16.mxu0 0
        %2282 = vmatpush1.bf16.msra.mxu0 0
        %2283 = vmatprep.subr.bf16.mxu0 0
        %2284 = vmatpush1.bf16.msra.mxu0 0
        %2285 = vmatprep.subr.bf16.mxu0 0
        %2286 = vmatpush1.bf16.msra.mxu0 0
        %2287 = vmatprep.subr.bf16.mxu0 0
        %2288 = vmatpush1.bf16.msra.mxu0 0
        %2289 = vmatprep.mubr.bf16.mxu0 0
        %2290 = vmatmul.mubr.bf16.gmra.mrb[0].mxu0 %v1618
        %v2291 = vpop.f32.mrb[0].mxu0
        %v2292 = vadd.f32 0.0, %v2291
        %v2293 = vpop.f32.mrb[0].mxu0
        %v2294 = vpop.f32.mrb[0].mxu0
        %v2295 = vadd.f32 0.0, %v2294
        %v2296 = vpop.f32.mrb[0].mxu0
        %2297 = vmatprep.mubr.bf16.mxu0 0
        %2298 = vmatmul.mubr.bf16.gmra.mrb[0].mxu0 %v1621
        %v2299 = vpop.f32.mrb[0].mxu0
        %v2300 = vadd.f32 0.0, %v2299
        %v2301 = vpop.f32.mrb[0].mxu0
        %v2302 = vpop.f32.mrb[0].mxu0
        %v2303 = vadd.f32 0.0, %v2302
        %v2304 = vpop.f32.mrb[0].mxu0
        %2305 = vmatprep.mubr.bf16.mxu0 0
        %2306 = vmatmul.mubr.bf16.gmra.mrb[0].mxu0 %v1624
        %v2307 = vpop.f32.mrb[0].mxu0
        %v2308 = vadd.f32 0.0, %v2307
        %v2309 = vpop.f32.mrb[0].mxu0
        %v2310 = vpop.f32.mrb[0].mxu0
        %v2311 = vadd.f32 0.0, %v2310
        %v2312 = vpop.f32.mrb[0].mxu0
        %2313 = vmatprep.mubr.bf16.mxu0 0
        %2314 = vmatmul.mubr.bf16.gmra.mrb[0].mxu0 %v2252
        %v2315 = vpop.f32.mrb[0].mxu0
        %v2316 = vadd.f32 0.0, %v2315
        %v2317 = vpop.f32.mrb[0].mxu0
        %v2318 = vpop.f32.mrb[0].mxu0
        %v2319 = vadd.f32 0.0, %v2318
        %v2320 = vpop.f32.mrb[0].mxu0
        %2321 = vdwg.mxu0
        %v2322 = vadd.f32 %v2225, %v2292
        %v2323 = vadd.f32 %v2226, %v2295
        %v2324 = vadd.f32 %v2227, %v2300
        %v2325 = vadd.f32 %v2228, %v2303
        %v2326 = vadd.f32 %v2229, %v2308
        %v2327 = vadd.f32 %v2230, %v2311
        %v2328 = vadd.f32 %v2231, %v2316
        %v2329 = vadd.f32 %v2232, %v2319
        %v2331 = vrot.slane %v1376, 5
        %v2332 = vrot.slane %v2331, 4
        %v2333 = vrot.slane %v1377, 5
        %v2334 = vsel %vm649, %v2332, %v2333
        %s2335 = scalar_lea.vmem %s3, 34
        %v2336 = vld [vmem:[%s2335] sm:$0x3]
        %v2337 = vunpack.c.l.b16 %v2334
        %v2338 = vpack.c.b16 %v2337, %v2056
        %v2340 = vsel %vm457, %v2338, 0
        %v2343 = vsel %vm470, %v2336, 0
        %2345 = vmatprep.subr.bf16.mxu0 0
        %2346 = vmatpush1.bf16.msra.mxu0 %v2343
        %2347 = vmatprep.subr.bf16.mxu0 0
        %2348 = vmatpush1.bf16.msra.mxu0 0
        %2349 = vmatprep.subr.bf16.mxu0 0
        %2350 = vmatpush1.bf16.msra.mxu0 0
        %2351 = vmatprep.subr.bf16.mxu0 0
        %2352 = vmatpush1.bf16.msra.mxu0 0
        %2353 = vmatprep.subr.bf16.mxu0 0
        %2354 = vmatpush1.bf16.msra.mxu0 0
        %2355 = vmatprep.subr.bf16.mxu0 0
        %2356 = vmatpush1.bf16.msra.mxu0 0
        %2357 = vmatprep.subr.bf16.mxu0 0
        %2358 = vmatpush1.bf16.msra.mxu0 0
        %2359 = vmatprep.subr.bf16.mxu0 0
        %2360 = vmatpush1.bf16.msra.mxu0 0
        %2361 = vmatprep.subr.bf16.mxu0 0
        %2362 = vmatpush1.bf16.msra.mxu0 0
        %2363 = vmatprep.subr.bf16.mxu0 0
        %2364 = vmatpush1.bf16.msra.mxu0 0
        %2365 = vmatprep.subr.bf16.mxu0 0
        %2366 = vmatpush1.bf16.msra.mxu0 0
        %2367 = vmatprep.subr.bf16.mxu0 0
        %2368 = vmatpush1.bf16.msra.mxu0 0
        %2369 = vmatprep.subr.bf16.mxu0 0
        %2370 = vmatpush1.bf16.msra.mxu0 0
        %2371 = vmatprep.subr.bf16.mxu0 0
        %2372 = vmatpush1.bf16.msra.mxu0 0
        %2373 = vmatprep.subr.bf16.mxu0 0
        %2374 = vmatpush1.bf16.msra.mxu0 0
        %2375 = vmatprep.subr.bf16.mxu0 0
        %2376 = vmatpush1.bf16.msra.mxu0 0
        %2377 = vmatprep.mubr.bf16.mxu0 0
        %2378 = vmatmul.mubr.bf16.gmra.mrb[0].mxu0 %v1760
        %v2379 = vpop.f32.mrb[0].mxu0
        %v2380 = vadd.f32 0.0, %v2379
        %v2381 = vpop.f32.mrb[0].mxu0
        %v2382 = vpop.f32.mrb[0].mxu0
        %v2383 = vadd.f32 0.0, %v2382
        %v2384 = vpop.f32.mrb[0].mxu0
        %2385 = vmatprep.mubr.bf16.mxu0 0
        %2386 = vmatmul.mubr.bf16.gmra.mrb[0].mxu0 %v1763
        %v2387 = vpop.f32.mrb[0].mxu0
        %v2388 = vadd.f32 0.0, %v2387
        %v2389 = vpop.f32.mrb[0].mxu0
        %v2390 = vpop.f32.mrb[0].mxu0
        %v2391 = vadd.f32 0.0, %v2390
        %v2392 = vpop.f32.mrb[0].mxu0
        %2393 = vmatprep.mubr.bf16.mxu0 0
        %2394 = vmatmul.mubr.bf16.gmra.mrb[0].mxu0 %v1766
        %v2395 = vpop.f32.mrb[0].mxu0
        %v2396 = vadd.f32 0.0, %v2395
        %v2397 = vpop.f32.mrb[0].mxu0
        %v2398 = vpop.f32.mrb[0].mxu0
        %v2399 = vadd.f32 0.0, %v2398
        %v2400 = vpop.f32.mrb[0].mxu0
        %2401 = vmatprep.mubr.bf16.mxu0 0
        %2402 = vmatmul.mubr.bf16.gmra.mrb[0].mxu0 %v2340
        %v2403 = vpop.f32.mrb[0].mxu0
        %v2404 = vadd.f32 0.0, %v2403
        %v2405 = vpop.f32.mrb[0].mxu0
        %v2406 = vpop.f32.mrb[0].mxu0
        %v2407 = vadd.f32 0.0, %v2406
        %v2408 = vpop.f32.mrb[0].mxu0
        %2409 = vdwg.mxu0
        %v2410 = vadd.f32 %v2322, %v2380
        %v2411 = vadd.f32 %v2323, %v2383
        %v2412 = vadd.f32 %v2324, %v2388
        %v2413 = vadd.f32 %v2325, %v2391
        %v2414 = vadd.f32 %v2326, %v2396
        %v2415 = vadd.f32 %v2327, %v2399
        %v2416 = vadd.f32 %v2328, %v2404
        %v2417 = vadd.f32 %v2329, %v2407
        %v2418 = vld [vmem:[%s304] sm:$0xf]
        %v2419 = vld [vmem:[%s304 + $0x4] sm:$0x1]
        %v2420 = vld [vmem:[%s304 + $0x8] sm:$0xf]
        %v2421 = vld [vmem:[%s304 + $0xc] sm:$0x1]
        %v2422 = vld [vmem:[%s304 + $0x10] sm:$0xf]
        %v2423 = vld [vmem:[%s304 + $0x14] sm:$0x1]
        %v2424 = vld [vmem:[%s304 + $0x18] sm:$0xf]
        %v2425 = vld [vmem:[%s304 + $0x1c] sm:$0x1]
        %v2426 = vld [vmem:[%s304 + $0x20] sm:$0xf]
        %v2427 = vld [vmem:[%s304 + $0x24] sm:$0x1]
        %v2428 = vld [vmem:[%s304 + $0x28] sm:$0xf]
        %v2429 = vld [vmem:[%s304 + $0x2c] sm:$0x1]
        %v2430 = vld [vmem:[%s304 + $0x30] sm:$0xf]
        %v2431 = vld [vmem:[%s304 + $0x34] sm:$0x1]
        %v2432 = vld [vmem:[%s304 + $0x38] sm:$0xf]
        %v2433 = vld [vmem:[%s304 + $0x3c] sm:$0x1]
        %v2434 = vld [vmem:[%s304 + $0x40] sm:$0xf]
        %v2435 = vld [vmem:[%s304 + $0x44] sm:$0x1]
        %v2436 = vld [vmem:[%s304 + $0x48] sm:$0xf]
        %v2437 = vld [vmem:[%s304 + $0x4c] sm:$0x1]
        %s2438 = scalar_lea.vmem %s3, 36
        %v2439 = vld [vmem:[%s2438] sm:$0x3]
        %v2448 = vunpack.c.l.b16 %v2418
        %v2449 = vunpack.c.l.b16 %v2420
        %v2450 = vunpack.c.l.b16 %v2422
        %v2451 = vunpack.c.l.b16 %v2424
        %v2452 = vunpack.c.l.b16 %v2426
        %v2453 = vunpack.c.l.b16 %v2428
        %v2454 = vunpack.c.l.b16 %v2430
        %v2455 = vunpack.c.l.b16 %v2432
        %v2456 = vpack.c.b16 %v2449, %v2448
        %v2457 = vpack.c.b16 %v2451, %v2450
        %v2458 = vpack.c.b16 %v2453, %v2452
        %v2459 = vpack.c.b16 %v2455, %v2454
        %v2461 = vsel %vm457, %v2456, 0
        %v2464 = vsel %vm457, %v2457, 0
        %v2467 = vsel %vm457, %v2458, 0
        %v2470 = vsel %vm457, %v2459, 0
        %v2473 = vsel %vm470, %v2439, 0
        %2475 = vmatprep.subr.bf16.mxu0 0
        %2476 = vmatpush1.bf16.msra.mxu0 %v2473
        %2477 = vmatprep.subr.bf16.mxu0 0
        %2478 = vmatpush1.bf16.msra.mxu0 0
        %2479 = vmatprep.subr.bf16.mxu0 0
        %2480 = vmatpush1.bf16.msra.mxu0 0
        %2481 = vmatprep.subr.bf16.mxu0 0
        %2482 = vmatpush1.bf16.msra.mxu0 0
        %2483 = vmatprep.subr.bf16.mxu0 0
        %2484 = vmatpush1.bf16.msra.mxu0 0
        %2485 = vmatprep.subr.bf16.mxu0 0
        %2486 = vmatpush1.bf16.msra.mxu0 0
        %2487 = vmatprep.subr.bf16.mxu0 0
        %2488 = vmatpush1.bf16.msra.mxu0 0
        %2489 = vmatprep.subr.bf16.mxu0 0
        %2490 = vmatpush1.bf16.msra.mxu0 0
        %2491 = vmatprep.subr.bf16.mxu0 0
        %2492 = vmatpush1.bf16.msra.mxu0 0
        %2493 = vmatprep.subr.bf16.mxu0 0
        %2494 = vmatpush1.bf16.msra.mxu0 0
        %2495 = vmatprep.subr.bf16.mxu0 0
        %2496 = vmatpush1.bf16.msra.mxu0 0
        %2497 = vmatprep.subr.bf16.mxu0 0
        %2498 = vmatpush1.bf16.msra.mxu0 0
        %2499 = vmatprep.subr.bf16.mxu0 0
        %2500 = vmatpush1.bf16.msra.mxu0 0
        %2501 = vmatprep.subr.bf16.mxu0 0
        %2502 = vmatpush1.bf16.msra.mxu0 0
        %2503 = vmatprep.subr.bf16.mxu0 0
        %2504 = vmatpush1.bf16.msra.mxu0 0
        %2505 = vmatprep.subr.bf16.mxu0 0
        %2506 = vmatpush1.bf16.msra.mxu0 0
        %2507 = vmatprep.mubr.bf16.mxu0 0
        %2508 = vmatmul.mubr.bf16.gmra.mrb[0].mxu0 %v2461
        %v2509 = vpop.f32.mrb[0].mxu0
        %v2510 = vadd.f32 0.0, %v2509
        %v2511 = vpop.f32.mrb[0].mxu0
        %v2512 = vpop.f32.mrb[0].mxu0
        %v2513 = vadd.f32 0.0, %v2512
        %v2514 = vpop.f32.mrb[0].mxu0
        %2515 = vmatprep.mubr.bf16.mxu0 0
        %2516 = vmatmul.mubr.bf16.gmra.mrb[0].mxu0 %v2464
        %v2517 = vpop.f32.mrb[0].mxu0
        %v2518 = vadd.f32 0.0, %v2517
        %v2519 = vpop.f32.mrb[0].mxu0
        %v2520 = vpop.f32.mrb[0].mxu0
        %v2521 = vadd.f32 0.0, %v2520
        %v2522 = vpop.f32.mrb[0].mxu0
        %2523 = vmatprep.mubr.bf16.mxu0 0
        %2524 = vmatmul.mubr.bf16.gmra.mrb[0].mxu0 %v2467
        %v2525 = vpop.f32.mrb[0].mxu0
        %v2526 = vadd.f32 0.0, %v2525
        %v2527 = vpop.f32.mrb[0].mxu0
        %v2528 = vpop.f32.mrb[0].mxu0
        %v2529 = vadd.f32 0.0, %v2528
        %v2530 = vpop.f32.mrb[0].mxu0
        %2531 = vmatprep.mubr.bf16.mxu0 0
        %2532 = vmatmul.mubr.bf16.gmra.mrb[0].mxu0 %v2470
        %v2533 = vpop.f32.mrb[0].mxu0
        %v2534 = vadd.f32 0.0, %v2533
        %v2535 = vpop.f32.mrb[0].mxu0
        %v2536 = vpop.f32.mrb[0].mxu0
        %v2537 = vadd.f32 0.0, %v2536
        %v2538 = vpop.f32.mrb[0].mxu0
        %2539 = vdwg.mxu0
        %v2540 = vadd.f32 %v2410, %v2510
        %v2541 = vadd.f32 %v2411, %v2513
        %v2542 = vadd.f32 %v2412, %v2518
        %v2543 = vadd.f32 %v2413, %v2521
        %v2544 = vadd.f32 %v2414, %v2526
        %v2545 = vadd.f32 %v2415, %v2529
        %v2546 = vadd.f32 %v2416, %v2534
        %v2547 = vadd.f32 %v2417, %v2537
        %v2549 = vshrl.u32 %v2418, 16
        %v2551 = vrot.slane %v2549, 4
        %v2552 = vshll.u32 %v2418, 16
        %v2554 = vrot.slane %v2552, 5
        %v2555 = vor.u32 %v2551, %v2554
        %v2556 = vrot.slane %v2555, 4
        %v2558 = vshll.u32 %v2419, 16
        %v2560 = vrot.slane %v2558, 5
        %v2561 = vsel %vm330, %v2556, %v2560
        %v2563 = vshrl.u32 %v2420, 16
        %v2565 = vrot.slane %v2563, 4
        %v2566 = vshll.u32 %v2420, 16
        %v2568 = vrot.slane %v2566, 5
        %v2569 = vor.u32 %v2565, %v2568
        %v2570 = vrot.slane %v2569, 4
        %v2572 = vshll.u32 %v2421, 16
        %v2574 = vrot.slane %v2572, 5
        %v2575 = vsel %vm330, %v2570, %v2574
        %v2577 = vshrl.u32 %v2422, 16
        %v2579 = vrot.slane %v2577, 4
        %v2580 = vshll.u32 %v2422, 16
        %v2582 = vrot.slane %v2580, 5
        %v2583 = vor.u32 %v2579, %v2582
        %v2584 = vrot.slane %v2583, 4
        %v2586 = vshll.u32 %v2423, 16
        %v2588 = vrot.slane %v2586, 5
        %v2589 = vsel %vm330, %v2584, %v2588
        %v2591 = vshrl.u32 %v2424, 16
        %v2593 = vrot.slane %v2591, 4
        %v2594 = vshll.u32 %v2424, 16
        %v2596 = vrot.slane %v2594, 5
        %v2597 = vor.u32 %v2593, %v2596
        %v2598 = vrot.slane %v2597, 4
        %v2600 = vshll.u32 %v2425, 16
        %v2602 = vrot.slane %v2600, 5
        %v2603 = vsel %vm330, %v2598, %v2602
        %v2605 = vshrl.u32 %v2426, 16
        %v2607 = vrot.slane %v2605, 4
        %v2608 = vshll.u32 %v2426, 16
        %v2610 = vrot.slane %v2608, 5
        %v2611 = vor.u32 %v2607, %v2610
        %v2612 = vrot.slane %v2611, 4
        %v2614 = vshll.u32 %v2427, 16
        %v2616 = vrot.slane %v2614, 5
        %v2617 = vsel %vm330, %v2612, %v2616
        %v2619 = vshrl.u32 %v2428, 16
        %v2621 = vrot.slane %v2619, 4
        %v2622 = vshll.u32 %v2428, 16
        %v2624 = vrot.slane %v2622, 5
        %v2625 = vor.u32 %v2621, %v2624
        %v2626 = vrot.slane %v2625, 4
        %v2628 = vshll.u32 %v2429, 16
        %v2630 = vrot.slane %v2628, 5
        %v2631 = vsel %vm330, %v2626, %v2630
        %v2633 = vshrl.u32 %v2430, 16
        %v2635 = vrot.slane %v2633, 4
        %v2636 = vshll.u32 %v2430, 16
        %v2638 = vrot.slane %v2636, 5
        %v2639 = vor.u32 %v2635, %v2638
        %v2640 = vrot.slane %v2639, 4
        %v2642 = vshll.u32 %v2431, 16
        %v2644 = vrot.slane %v2642, 5
        %v2645 = vsel %vm330, %v2640, %v2644
        %v2647 = vshrl.u32 %v2432, 16
        %v2649 = vrot.slane %v2647, 4
        %v2650 = vshll.u32 %v2432, 16
        %v2652 = vrot.slane %v2650, 5
        %v2653 = vor.u32 %v2649, %v2652
        %v2654 = vrot.slane %v2653, 4
        %v2656 = vshll.u32 %v2433, 16
        %v2658 = vrot.slane %v2656, 5
        %v2659 = vsel %vm330, %v2654, %v2658
        %s2660 = scalar_lea.vmem %s3, 38
        %v2661 = vld [vmem:[%s2660] sm:$0x3]
        %v2662 = vunpack.c.l.b16 %v2561
        %v2663 = vunpack.c.l.b16 %v2575
        %v2664 = vunpack.c.l.b16 %v2589
        %v2665 = vunpack.c.l.b16 %v2603
        %v2666 = vunpack.c.l.b16 %v2617
        %v2667 = vunpack.c.l.b16 %v2631
        %v2668 = vunpack.c.l.b16 %v2645
        %v2669 = vunpack.c.l.b16 %v2659
        %v2670 = vpack.c.b16 %v2663, %v2662
        %v2671 = vpack.c.b16 %v2665, %v2664
        %v2672 = vpack.c.b16 %v2667, %v2666
        %v2673 = vpack.c.b16 %v2669, %v2668
        %v2675 = vsel %vm457, %v2670, 0
        %v2678 = vsel %vm457, %v2671, 0
        %v2681 = vsel %vm457, %v2672, 0
        %v2684 = vsel %vm457, %v2673, 0
        %v2687 = vsel %vm470, %v2661, 0
        %2689 = vmatprep.subr.bf16.mxu0 0
        %2690 = vmatpush1.bf16.msra.mxu0 %v2687
        %2691 = vmatprep.subr.bf16.mxu0 0
        %2692 = vmatpush1.bf16.msra.mxu0 0
        %2693 = vmatprep.subr.bf16.mxu0 0
        %2694 = vmatpush1.bf16.msra.mxu0 0
        %2695 = vmatprep.subr.bf16.mxu0 0
        %2696 = vmatpush1.bf16.msra.mxu0 0
        %2697 = vmatprep.subr.bf16.mxu0 0
        %2698 = vmatpush1.bf16.msra.mxu0 0
        %2699 = vmatprep.subr.bf16.mxu0 0
        %2700 = vmatpush1.bf16.msra.mxu0 0
        %2701 = vmatprep.subr.bf16.mxu0 0
        %2702 = vmatpush1.bf16.msra.mxu0 0
        %2703 = vmatprep.subr.bf16.mxu0 0
        %2704 = vmatpush1.bf16.msra.mxu0 0
        %2705 = vmatprep.subr.bf16.mxu0 0
        %2706 = vmatpush1.bf16.msra.mxu0 0
        %2707 = vmatprep.subr.bf16.mxu0 0
        %2708 = vmatpush1.bf16.msra.mxu0 0
        %2709 = vmatprep.subr.bf16.mxu0 0
        %2710 = vmatpush1.bf16.msra.mxu0 0
        %2711 = vmatprep.subr.bf16.mxu0 0
        %2712 = vmatpush1.bf16.msra.mxu0 0
        %2713 = vmatprep.subr.bf16.mxu0 0
        %2714 = vmatpush1.bf16.msra.mxu0 0
        %2715 = vmatprep.subr.bf16.mxu0 0
        %2716 = vmatpush1.bf16.msra.mxu0 0
        %2717 = vmatprep.subr.bf16.mxu0 0
        %2718 = vmatpush1.bf16.msra.mxu0 0
        %2719 = vmatprep.subr.bf16.mxu0 0
        %2720 = vmatpush1.bf16.msra.mxu0 0
        %2721 = vmatprep.mubr.bf16.mxu0 0
        %2722 = vmatmul.mubr.bf16.gmra.mrb[0].mxu0 %v2675
        %v2723 = vpop.f32.mrb[0].mxu0
        %v2724 = vadd.f32 0.0, %v2723
        %v2725 = vpop.f32.mrb[0].mxu0
        %v2726 = vpop.f32.mrb[0].mxu0
        %v2727 = vadd.f32 0.0, %v2726
        %v2728 = vpop.f32.mrb[0].mxu0
        %2729 = vmatprep.mubr.bf16.mxu0 0
        %2730 = vmatmul.mubr.bf16.gmra.mrb[0].mxu0 %v2678
        %v2731 = vpop.f32.mrb[0].mxu0
        %v2732 = vadd.f32 0.0, %v2731
        %v2733 = vpop.f32.mrb[0].mxu0
        %v2734 = vpop.f32.mrb[0].mxu0
        %v2735 = vadd.f32 0.0, %v2734
        %v2736 = vpop.f32.mrb[0].mxu0
        %2737 = vmatprep.mubr.bf16.mxu0 0
        %2738 = vmatmul.mubr.bf16.gmra.mrb[0].mxu0 %v2681
        %v2739 = vpop.f32.mrb[0].mxu0
        %v2740 = vadd.f32 0.0, %v2739
        %v2741 = vpop.f32.mrb[0].mxu0
        %v2742 = vpop.f32.mrb[0].mxu0
        %v2743 = vadd.f32 0.0, %v2742
        %v2744 = vpop.f32.mrb[0].mxu0
        %2745 = vmatprep.mubr.bf16.mxu0 0
        %2746 = vmatmul.mubr.bf16.gmra.mrb[0].mxu0 %v2684
        %v2747 = vpop.f32.mrb[0].mxu0
        %v2748 = vadd.f32 0.0, %v2747
        %v2749 = vpop.f32.mrb[0].mxu0
        %v2750 = vpop.f32.mrb[0].mxu0
        %v2751 = vadd.f32 0.0, %v2750
        %v2752 = vpop.f32.mrb[0].mxu0
        %2753 = vdwg.mxu0
        %v2754 = vadd.f32 %v2540, %v2724
        %v2755 = vadd.f32 %v2541, %v2727
        %v2756 = vadd.f32 %v2542, %v2732
        %v2757 = vadd.f32 %v2543, %v2735
        %v2758 = vadd.f32 %v2544, %v2740
        %v2759 = vadd.f32 %v2545, %v2743
        %v2760 = vadd.f32 %v2546, %v2748
        %v2761 = vadd.f32 %v2547, %v2751
        %v2770 = vrot.slane %v2418, 5
        %v2771 = vrot.slane %v2770, 4
        %v2772 = vrot.slane %v2419, 5
        %v2773 = vsel %vm649, %v2771, %v2772
        %v2774 = vrot.slane %v2420, 5
        %v2775 = vrot.slane %v2774, 4
        %v2776 = vrot.slane %v2421, 5
        %v2777 = vsel %vm649, %v2775, %v2776
        %v2778 = vrot.slane %v2422, 5
        %v2779 = vrot.slane %v2778, 4
        %v2780 = vrot.slane %v2423, 5
        %v2781 = vsel %vm649, %v2779, %v2780
        %v2782 = vrot.slane %v2424, 5
        %v2783 = vrot.slane %v2782, 4
        %v2784 = vrot.slane %v2425, 5
        %v2785 = vsel %vm649, %v2783, %v2784
        %v2786 = vrot.slane %v2426, 5
        %v2787 = vrot.slane %v2786, 4
        %v2788 = vrot.slane %v2427, 5
        %v2789 = vsel %vm649, %v2787, %v2788
        %v2790 = vrot.slane %v2428, 5
        %v2791 = vrot.slane %v2790, 4
        %v2792 = vrot.slane %v2429, 5
        %v2793 = vsel %vm649, %v2791, %v2792
        %v2794 = vrot.slane %v2430, 5
        %v2795 = vrot.slane %v2794, 4
        %v2796 = vrot.slane %v2431, 5
        %v2797 = vsel %vm649, %v2795, %v2796
        %v2798 = vrot.slane %v2432, 5
        %v2799 = vrot.slane %v2798, 4
        %v2800 = vrot.slane %v2433, 5
        %v2801 = vsel %vm649, %v2799, %v2800
        %s2802 = scalar_lea.vmem %s3, 40
        %v2803 = vld [vmem:[%s2802] sm:$0x3]
        %v2804 = vunpack.c.l.b16 %v2773
        %v2805 = vunpack.c.l.b16 %v2777
        %v2806 = vunpack.c.l.b16 %v2781
        %v2807 = vunpack.c.l.b16 %v2785
        %v2808 = vunpack.c.l.b16 %v2789
        %v2809 = vunpack.c.l.b16 %v2793
        %v2810 = vunpack.c.l.b16 %v2797
        %v2811 = vunpack.c.l.b16 %v2801
        %v2812 = vpack.c.b16 %v2805, %v2804
        %v2813 = vpack.c.b16 %v2807, %v2806
        %v2814 = vpack.c.b16 %v2809, %v2808
        %v2815 = vpack.c.b16 %v2811, %v2810
        %v2817 = vsel %vm457, %v2812, 0
        %v2820 = vsel %vm457, %v2813, 0
        %v2823 = vsel %vm457, %v2814, 0
        %v2826 = vsel %vm457, %v2815, 0
        %v2829 = vsel %vm470, %v2803, 0
        %2831 = vmatprep.subr.bf16.mxu0 0
        %2832 = vmatpush1.bf16.msra.mxu0 %v2829
        %2833 = vmatprep.subr.bf16.mxu0 0
        %2834 = vmatpush1.bf16.msra.mxu0 0
        %2835 = vmatprep.subr.bf16.mxu0 0
        %2836 = vmatpush1.bf16.msra.mxu0 0
        %2837 = vmatprep.subr.bf16.mxu0 0
        %2838 = vmatpush1.bf16.msra.mxu0 0
        %2839 = vmatprep.subr.bf16.mxu0 0
        %2840 = vmatpush1.bf16.msra.mxu0 0
        %2841 = vmatprep.subr.bf16.mxu0 0
        %2842 = vmatpush1.bf16.msra.mxu0 0
        %2843 = vmatprep.subr.bf16.mxu0 0
        %2844 = vmatpush1.bf16.msra.mxu0 0
        %2845 = vmatprep.subr.bf16.mxu0 0
        %2846 = vmatpush1.bf16.msra.mxu0 0
        %2847 = vmatprep.subr.bf16.mxu0 0
        %2848 = vmatpush1.bf16.msra.mxu0 0
        %2849 = vmatprep.subr.bf16.mxu0 0
        %2850 = vmatpush1.bf16.msra.mxu0 0
        %2851 = vmatprep.subr.bf16.mxu0 0
        %2852 = vmatpush1.bf16.msra.mxu0 0
        %2853 = vmatprep.subr.bf16.mxu0 0
        %2854 = vmatpush1.bf16.msra.mxu0 0
        %2855 = vmatprep.subr.bf16.mxu0 0
        %2856 = vmatpush1.bf16.msra.mxu0 0
        %2857 = vmatprep.subr.bf16.mxu0 0
        %2858 = vmatpush1.bf16.msra.mxu0 0
        %2859 = vmatprep.subr.bf16.mxu0 0
        %2860 = vmatpush1.bf16.msra.mxu0 0
        %2861 = vmatprep.subr.bf16.mxu0 0
        %2862 = vmatpush1.bf16.msra.mxu0 0
        %2863 = vmatprep.mubr.bf16.mxu0 0
        %2864 = vmatmul.mubr.bf16.gmra.mrb[0].mxu0 %v2817
        %v2865 = vpop.f32.mrb[0].mxu0
        %v2866 = vadd.f32 0.0, %v2865
        %v2867 = vpop.f32.mrb[0].mxu0
        %v2868 = vpop.f32.mrb[0].mxu0
        %v2869 = vadd.f32 0.0, %v2868
        %v2870 = vpop.f32.mrb[0].mxu0
        %2871 = vmatprep.mubr.bf16.mxu0 0
        %2872 = vmatmul.mubr.bf16.gmra.mrb[0].mxu0 %v2820
        %v2873 = vpop.f32.mrb[0].mxu0
        %v2874 = vadd.f32 0.0, %v2873
        %v2875 = vpop.f32.mrb[0].mxu0
        %v2876 = vpop.f32.mrb[0].mxu0
        %v2877 = vadd.f32 0.0, %v2876
        %v2878 = vpop.f32.mrb[0].mxu0
        %2879 = vmatprep.mubr.bf16.mxu0 0
        %2880 = vmatmul.mubr.bf16.gmra.mrb[0].mxu0 %v2823
        %v2881 = vpop.f32.mrb[0].mxu0
        %v2882 = vadd.f32 0.0, %v2881
        %v2883 = vpop.f32.mrb[0].mxu0
        %v2884 = vpop.f32.mrb[0].mxu0
        %v2885 = vadd.f32 0.0, %v2884
        %v2886 = vpop.f32.mrb[0].mxu0
        %2887 = vmatprep.mubr.bf16.mxu0 0
        %2888 = vmatmul.mubr.bf16.gmra.mrb[0].mxu0 %v2826
        %v2889 = vpop.f32.mrb[0].mxu0
        %v2890 = vadd.f32 0.0, %v2889
        %v2891 = vpop.f32.mrb[0].mxu0
        %v2892 = vpop.f32.mrb[0].mxu0
        %v2893 = vadd.f32 0.0, %v2892
        %v2894 = vpop.f32.mrb[0].mxu0
        %2895 = vdwg.mxu0
        %v2896 = vadd.f32 %v2754, %v2866
        %v2897 = vadd.f32 %v2755, %v2869
        %v2898 = vadd.f32 %v2756, %v2874
        %v2899 = vadd.f32 %v2757, %v2877
        %v2900 = vadd.f32 %v2758, %v2882
        %v2901 = vadd.f32 %v2759, %v2885
        %v2902 = vadd.f32 %v2760, %v2890
        %v2903 = vadd.f32 %v2761, %v2893
        %s2904 = scalar_lea.vmem %s3, 42
        %v2905 = vld [vmem:[%s2904] sm:$0x3]
        %v2907 = vunpack.c.l.b16 %v2434
        %v2908 = vpack.c.b16 %v2450, %v2449
        %v2909 = vpack.c.b16 %v2452, %v2451
        %v2910 = vpack.c.b16 %v2454, %v2453
        %v2911 = vpack.c.b16 %v2907, %v2455
        %v2913 = vsel %vm457, %v2908, 0
        %v2916 = vsel %vm457, %v2909, 0
        %v2919 = vsel %vm457, %v2910, 0
        %v2922 = vsel %vm457, %v2911, 0
        %v2925 = vsel %vm470, %v2905, 0
        %2927 = vmatprep.subr.bf16.mxu0 0
        %2928 = vmatpush1.bf16.msra.mxu0 %v2925
        %2929 = vmatprep.subr.bf16.mxu0 0
        %2930 = vmatpush1.bf16.msra.mxu0 0
        %2931 = vmatprep.subr.bf16.mxu0 0
        %2932 = vmatpush1.bf16.msra.mxu0 0
        %2933 = vmatprep.subr.bf16.mxu0 0
        %2934 = vmatpush1.bf16.msra.mxu0 0
        %2935 = vmatprep.subr.bf16.mxu0 0
        %2936 = vmatpush1.bf16.msra.mxu0 0
        %2937 = vmatprep.subr.bf16.mxu0 0
        %2938 = vmatpush1.bf16.msra.mxu0 0
        %2939 = vmatprep.subr.bf16.mxu0 0
        %2940 = vmatpush1.bf16.msra.mxu0 0
        %2941 = vmatprep.subr.bf16.mxu0 0
        %2942 = vmatpush1.bf16.msra.mxu0 0
        %2943 = vmatprep.subr.bf16.mxu0 0
        %2944 = vmatpush1.bf16.msra.mxu0 0
        %2945 = vmatprep.subr.bf16.mxu0 0
        %2946 = vmatpush1.bf16.msra.mxu0 0
        %2947 = vmatprep.subr.bf16.mxu0 0
        %2948 = vmatpush1.bf16.msra.mxu0 0
        %2949 = vmatprep.subr.bf16.mxu0 0
        %2950 = vmatpush1.bf16.msra.mxu0 0
        %2951 = vmatprep.subr.bf16.mxu0 0
        %2952 = vmatpush1.bf16.msra.mxu0 0
        %2953 = vmatprep.subr.bf16.mxu0 0
        %2954 = vmatpush1.bf16.msra.mxu0 0
        %2955 = vmatprep.subr.bf16.mxu0 0
        %2956 = vmatpush1.bf16.msra.mxu0 0
        %2957 = vmatprep.subr.bf16.mxu0 0
        %2958 = vmatpush1.bf16.msra.mxu0 0
        %2959 = vmatprep.mubr.bf16.mxu0 0
        %2960 = vmatmul.mubr.bf16.gmra.mrb[0].mxu0 %v2913
        %v2961 = vpop.f32.mrb[0].mxu0
        %v2962 = vadd.f32 0.0, %v2961
        %v2963 = vpop.f32.mrb[0].mxu0
        %v2964 = vpop.f32.mrb[0].mxu0
        %v2965 = vadd.f32 0.0, %v2964
        %v2966 = vpop.f32.mrb[0].mxu0
        %2967 = vmatprep.mubr.bf16.mxu0 0
        %2968 = vmatmul.mubr.bf16.gmra.mrb[0].mxu0 %v2916
        %v2969 = vpop.f32.mrb[0].mxu0
        %v2970 = vadd.f32 0.0, %v2969
        %v2971 = vpop.f32.mrb[0].mxu0
        %v2972 = vpop.f32.mrb[0].mxu0
        %v2973 = vadd.f32 0.0, %v2972
        %v2974 = vpop.f32.mrb[0].mxu0
        %2975 = vmatprep.mubr.bf16.mxu0 0
        %2976 = vmatmul.mubr.bf16.gmra.mrb[0].mxu0 %v2919
        %v2977 = vpop.f32.mrb[0].mxu0
        %v2978 = vadd.f32 0.0, %v2977
        %v2979 = vpop.f32.mrb[0].mxu0
        %v2980 = vpop.f32.mrb[0].mxu0
        %v2981 = vadd.f32 0.0, %v2980
        %v2982 = vpop.f32.mrb[0].mxu0
        %2983 = vmatprep.mubr.bf16.mxu0 0
        %2984 = vmatmul.mubr.bf16.gmra.mrb[0].mxu0 %v2922
        %v2985 = vpop.f32.mrb[0].mxu0
        %v2986 = vadd.f32 0.0, %v2985
        %v2987 = vpop.f32.mrb[0].mxu0
        %v2988 = vpop.f32.mrb[0].mxu0
        %v2989 = vadd.f32 0.0, %v2988
        %v2990 = vpop.f32.mrb[0].mxu0
        %2991 = vdwg.mxu0
        %v2992 = vadd.f32 %v2896, %v2962
        %v2993 = vadd.f32 %v2897, %v2965
        %v2994 = vadd.f32 %v2898, %v2970
        %v2995 = vadd.f32 %v2899, %v2973
        %v2996 = vadd.f32 %v2900, %v2978
        %v2997 = vadd.f32 %v2901, %v2981
        %v2998 = vadd.f32 %v2902, %v2986
        %v2999 = vadd.f32 %v2903, %v2989
        %v3001 = vshrl.u32 %v2434, 16
        %v3003 = vrot.slane %v3001, 4
        %v3004 = vshll.u32 %v2434, 16
        %v3006 = vrot.slane %v3004, 5
        %v3007 = vor.u32 %v3003, %v3006
        %v3008 = vrot.slane %v3007, 4
        %v3010 = vshll.u32 %v2435, 16
        %v3012 = vrot.slane %v3010, 5
        %v3013 = vsel %vm330, %v3008, %v3012
        %s3014 = scalar_lea.vmem %s3, 44
        %v3015 = vld [vmem:[%s3014] sm:$0x3]
        %v3016 = vunpack.c.l.b16 %v3013
        %v3017 = vpack.c.b16 %v2664, %v2663
        %v3018 = vpack.c.b16 %v2666, %v2665
        %v3019 = vpack.c.b16 %v2668, %v2667
        %v3020 = vpack.c.b16 %v3016, %v2669
        %v3022 = vsel %vm457, %v3017, 0
        %v3025 = vsel %vm457, %v3018, 0
        %v3028 = vsel %vm457, %v3019, 0
        %v3031 = vsel %vm457, %v3020, 0
        %v3034 = vsel %vm470, %v3015, 0
        %3036 = vmatprep.subr.bf16.mxu0 0
        %3037 = vmatpush1.bf16.msra.mxu0 %v3034
        %3038 = vmatprep.subr.bf16.mxu0 0
        %3039 = vmatpush1.bf16.msra.mxu0 0
        %3040 = vmatprep.subr.bf16.mxu0 0
        %3041 = vmatpush1.bf16.msra.mxu0 0
        %3042 = vmatprep.subr.bf16.mxu0 0
        %3043 = vmatpush1.bf16.msra.mxu0 0
        %3044 = vmatprep.subr.bf16.mxu0 0
        %3045 = vmatpush1.bf16.msra.mxu0 0
        %3046 = vmatprep.subr.bf16.mxu0 0
        %3047 = vmatpush1.bf16.msra.mxu0 0
        %3048 = vmatprep.subr.bf16.mxu0 0
        %3049 = vmatpush1.bf16.msra.mxu0 0
        %3050 = vmatprep.subr.bf16.mxu0 0
        %3051 = vmatpush1.bf16.msra.mxu0 0
        %3052 = vmatprep.subr.bf16.mxu0 0
        %3053 = vmatpush1.bf16.msra.mxu0 0
        %3054 = vmatprep.subr.bf16.mxu0 0
        %3055 = vmatpush1.bf16.msra.mxu0 0
        %3056 = vmatprep.subr.bf16.mxu0 0
        %3057 = vmatpush1.bf16.msra.mxu0 0
        %3058 = vmatprep.subr.bf16.mxu0 0
        %3059 = vmatpush1.bf16.msra.mxu0 0
        %3060 = vmatprep.subr.bf16.mxu0 0
        %3061 = vmatpush1.bf16.msra.mxu0 0
        %3062 = vmatprep.subr.bf16.mxu0 0
        %3063 = vmatpush1.bf16.msra.mxu0 0
        %3064 = vmatprep.subr.bf16.mxu0 0
        %3065 = vmatpush1.bf16.msra.mxu0 0
        %3066 = vmatprep.subr.bf16.mxu0 0
        %3067 = vmatpush1.bf16.msra.mxu0 0
        %3068 = vmatprep.mubr.bf16.mxu0 0
        %3069 = vmatmul.mubr.bf16.gmra.mrb[0].mxu0 %v3022
        %v3070 = vpop.f32.mrb[0].mxu0
        %v3071 = vadd.f32 0.0, %v3070
        %v3072 = vpop.f32.mrb[0].mxu0
        %v3073 = vpop.f32.mrb[0].mxu0
        %v3074 = vadd.f32 0.0, %v3073
        %v3075 = vpop.f32.mrb[0].mxu0
        %3076 = vmatprep.mubr.bf16.mxu0 0
        %3077 = vmatmul.mubr.bf16.gmra.mrb[0].mxu0 %v3025
        %v3078 = vpop.f32.mrb[0].mxu0
        %v3079 = vadd.f32 0.0, %v3078
        %v3080 = vpop.f32.mrb[0].mxu0
        %v3081 = vpop.f32.mrb[0].mxu0
        %v3082 = vadd.f32 0.0, %v3081
        %v3083 = vpop.f32.mrb[0].mxu0
        %3084 = vmatprep.mubr.bf16.mxu0 0
        %3085 = vmatmul.mubr.bf16.gmra.mrb[0].mxu0 %v3028
        %v3086 = vpop.f32.mrb[0].mxu0
        %v3087 = vadd.f32 0.0, %v3086
        %v3088 = vpop.f32.mrb[0].mxu0
        %v3089 = vpop.f32.mrb[0].mxu0
        %v3090 = vadd.f32 0.0, %v3089
        %v3091 = vpop.f32.mrb[0].mxu0
        %3092 = vmatprep.mubr.bf16.mxu0 0
        %3093 = vmatmul.mubr.bf16.gmra.mrb[0].mxu0 %v3031
        %v3094 = vpop.f32.mrb[0].mxu0
        %v3095 = vadd.f32 0.0, %v3094
        %v3096 = vpop.f32.mrb[0].mxu0
        %v3097 = vpop.f32.mrb[0].mxu0
        %v3098 = vadd.f32 0.0, %v3097
        %v3099 = vpop.f32.mrb[0].mxu0
        %3100 = vdwg.mxu0
        %v3101 = vadd.f32 %v2992, %v3071
        %v3102 = vadd.f32 %v2993, %v3074
        %v3103 = vadd.f32 %v2994, %v3079
        %v3104 = vadd.f32 %v2995, %v3082
        %v3105 = vadd.f32 %v2996, %v3087
        %v3106 = vadd.f32 %v2997, %v3090
        %v3107 = vadd.f32 %v2998, %v3095
        %v3108 = vadd.f32 %v2999, %v3098
        %v3110 = vrot.slane %v2434, 5
        %v3111 = vrot.slane %v3110, 4
        %v3112 = vrot.slane %v2435, 5
        %v3113 = vsel %vm649, %v3111, %v3112
        %s3114 = scalar_lea.vmem %s3, 46
        %v3115 = vld [vmem:[%s3114] sm:$0x3]
        %v3116 = vunpack.c.l.b16 %v3113
        %v3117 = vpack.c.b16 %v2806, %v2805
        %v3118 = vpack.c.b16 %v2808, %v2807
        %v3119 = vpack.c.b16 %v2810, %v2809
        %v3120 = vpack.c.b16 %v3116, %v2811
        %v3122 = vsel %vm457, %v3117, 0
        %v3125 = vsel %vm457, %v3118, 0
        %v3128 = vsel %vm457, %v3119, 0
        %v3131 = vsel %vm457, %v3120, 0
        %v3134 = vsel %vm470, %v3115, 0
        %3136 = vmatprep.subr.bf16.mxu0 0
        %3137 = vmatpush1.bf16.msra.mxu0 %v3134
        %3138 = vmatprep.subr.bf16.mxu0 0
        %3139 = vmatpush1.bf16.msra.mxu0 0
        %3140 = vmatprep.subr.bf16.mxu0 0
        %3141 = vmatpush1.bf16.msra.mxu0 0
        %3142 = vmatprep.subr.bf16.mxu0 0
        %3143 = vmatpush1.bf16.msra.mxu0 0
        %3144 = vmatprep.subr.bf16.mxu0 0
        %3145 = vmatpush1.bf16.msra.mxu0 0
        %3146 = vmatprep.subr.bf16.mxu0 0
        %3147 = vmatpush1.bf16.msra.mxu0 0
        %3148 = vmatprep.subr.bf16.mxu0 0
        %3149 = vmatpush1.bf16.msra.mxu0 0
        %3150 = vmatprep.subr.bf16.mxu0 0
        %3151 = vmatpush1.bf16.msra.mxu0 0
        %3152 = vmatprep.subr.bf16.mxu0 0
        %3153 = vmatpush1.bf16.msra.mxu0 0
        %3154 = vmatprep.subr.bf16.mxu0 0
        %3155 = vmatpush1.bf16.msra.mxu0 0
        %3156 = vmatprep.subr.bf16.mxu0 0
        %3157 = vmatpush1.bf16.msra.mxu0 0
        %3158 = vmatprep.subr.bf16.mxu0 0
        %3159 = vmatpush1.bf16.msra.mxu0 0
        %3160 = vmatprep.subr.bf16.mxu0 0
        %3161 = vmatpush1.bf16.msra.mxu0 0
        %3162 = vmatprep.subr.bf16.mxu0 0
        %3163 = vmatpush1.bf16.msra.mxu0 0
        %3164 = vmatprep.subr.bf16.mxu0 0
        %3165 = vmatpush1.bf16.msra.mxu0 0
        %3166 = vmatprep.subr.bf16.mxu0 0
        %3167 = vmatpush1.bf16.msra.mxu0 0
        %3168 = vmatprep.mubr.bf16.mxu0 0
        %3169 = vmatmul.mubr.bf16.gmra.mrb[0].mxu0 %v3122
        %v3170 = vpop.f32.mrb[0].mxu0
        %v3171 = vadd.f32 0.0, %v3170
        %v3172 = vpop.f32.mrb[0].mxu0
        %v3173 = vpop.f32.mrb[0].mxu0
        %v3174 = vadd.f32 0.0, %v3173
        %v3175 = vpop.f32.mrb[0].mxu0
        %3176 = vmatprep.mubr.bf16.mxu0 0
        %3177 = vmatmul.mubr.bf16.gmra.mrb[0].mxu0 %v3125
        %v3178 = vpop.f32.mrb[0].mxu0
        %v3179 = vadd.f32 0.0, %v3178
        %v3180 = vpop.f32.mrb[0].mxu0
        %v3181 = vpop.f32.mrb[0].mxu0
        %v3182 = vadd.f32 0.0, %v3181
        %v3183 = vpop.f32.mrb[0].mxu0
        %3184 = vmatprep.mubr.bf16.mxu0 0
        %3185 = vmatmul.mubr.bf16.gmra.mrb[0].mxu0 %v3128
        %v3186 = vpop.f32.mrb[0].mxu0
        %v3187 = vadd.f32 0.0, %v3186
        %v3188 = vpop.f32.mrb[0].mxu0
        %v3189 = vpop.f32.mrb[0].mxu0
        %v3190 = vadd.f32 0.0, %v3189
        %v3191 = vpop.f32.mrb[0].mxu0
        %3192 = vmatprep.mubr.bf16.mxu0 0
        %3193 = vmatmul.mubr.bf16.gmra.mrb[0].mxu0 %v3131
        %v3194 = vpop.f32.mrb[0].mxu0
        %v3195 = vadd.f32 0.0, %v3194
        %v3196 = vpop.f32.mrb[0].mxu0
        %v3197 = vpop.f32.mrb[0].mxu0
        %v3198 = vadd.f32 0.0, %v3197
        %v3199 = vpop.f32.mrb[0].mxu0
        %3200 = vdwg.mxu0
        %v3201 = vadd.f32 %v3101, %v3171
        %v3202 = vadd.f32 %v3102, %v3174
        %v3203 = vadd.f32 %v3103, %v3179
        %v3204 = vadd.f32 %v3104, %v3182
        %v3205 = vadd.f32 %v3105, %v3187
        %v3206 = vadd.f32 %v3106, %v3190
        %v3207 = vadd.f32 %v3107, %v3195
        %v3208 = vadd.f32 %v3108, %v3198
        %s3209 = scalar_lea.vmem %s3, 48
        %v3210 = vld [vmem:[%s3209] sm:$0x3]
        %v3212 = vunpack.c.l.b16 %v2436
        %v3213 = vpack.c.b16 %v3212, %v2907
        %v3215 = vsel %vm457, %v3213, 0
        %v3218 = vsel %vm470, %v3210, 0
        %3220 = vmatprep.subr.bf16.mxu0 0
        %3221 = vmatpush1.bf16.msra.mxu0 %v3218
        %3222 = vmatprep.subr.bf16.mxu0 0
        %3223 = vmatpush1.bf16.msra.mxu0 0
        %3224 = vmatprep.subr.bf16.mxu0 0
        %3225 = vmatpush1.bf16.msra.mxu0 0
        %3226 = vmatprep.subr.bf16.mxu0 0
        %3227 = vmatpush1.bf16.msra.mxu0 0
        %3228 = vmatprep.subr.bf16.mxu0 0
        %3229 = vmatpush1.bf16.msra.mxu0 0
        %3230 = vmatprep.subr.bf16.mxu0 0
        %3231 = vmatpush1.bf16.msra.mxu0 0
        %3232 = vmatprep.subr.bf16.mxu0 0
        %3233 = vmatpush1.bf16.msra.mxu0 0
        %3234 = vmatprep.subr.bf16.mxu0 0
        %3235 = vmatpush1.bf16.msra.mxu0 0
        %3236 = vmatprep.subr.bf16.mxu0 0
        %3237 = vmatpush1.bf16.msra.mxu0 0
        %3238 = vmatprep.subr.bf16.mxu0 0
        %3239 = vmatpush1.bf16.msra.mxu0 0
        %3240 = vmatprep.subr.bf16.mxu0 0
        %3241 = vmatpush1.bf16.msra.mxu0 0
        %3242 = vmatprep.subr.bf16.mxu0 0
        %3243 = vmatpush1.bf16.msra.mxu0 0
        %3244 = vmatprep.subr.bf16.mxu0 0
        %3245 = vmatpush1.bf16.msra.mxu0 0
        %3246 = vmatprep.subr.bf16.mxu0 0
        %3247 = vmatpush1.bf16.msra.mxu0 0
        %3248 = vmatprep.subr.bf16.mxu0 0
        %3249 = vmatpush1.bf16.msra.mxu0 0
        %3250 = vmatprep.subr.bf16.mxu0 0
        %3251 = vmatpush1.bf16.msra.mxu0 0
        %3252 = vmatprep.mubr.bf16.mxu0 0
        %3253 = vmatmul.mubr.bf16.gmra.mrb[0].mxu0 %v2464
        %v3254 = vpop.f32.mrb[0].mxu0
        %v3255 = vadd.f32 0.0, %v3254
        %v3256 = vpop.f32.mrb[0].mxu0
        %v3257 = vpop.f32.mrb[0].mxu0
        %v3258 = vadd.f32 0.0, %v3257
        %v3259 = vpop.f32.mrb[0].mxu0
        %3260 = vmatprep.mubr.bf16.mxu0 0
        %3261 = vmatmul.mubr.bf16.gmra.mrb[0].mxu0 %v2467
        %v3262 = vpop.f32.mrb[0].mxu0
        %v3263 = vadd.f32 0.0, %v3262
        %v3264 = vpop.f32.mrb[0].mxu0
        %v3265 = vpop.f32.mrb[0].mxu0
        %v3266 = vadd.f32 0.0, %v3265
        %v3267 = vpop.f32.mrb[0].mxu0
        %3268 = vmatprep.mubr.bf16.mxu0 0
        %3269 = vmatmul.mubr.bf16.gmra.mrb[0].mxu0 %v2470
        %v3270 = vpop.f32.mrb[0].mxu0
        %v3271 = vadd.f32 0.0, %v3270
        %v3272 = vpop.f32.mrb[0].mxu0
        %v3273 = vpop.f32.mrb[0].mxu0
        %v3274 = vadd.f32 0.0, %v3273
        %v3275 = vpop.f32.mrb[0].mxu0
        %3276 = vmatprep.mubr.bf16.mxu0 0
        %3277 = vmatmul.mubr.bf16.gmra.mrb[0].mxu0 %v3215
        %v3278 = vpop.f32.mrb[0].mxu0
        %v3279 = vadd.f32 0.0, %v3278
        %v3280 = vpop.f32.mrb[0].mxu0
        %v3281 = vpop.f32.mrb[0].mxu0
        %v3282 = vadd.f32 0.0, %v3281
        %v3283 = vpop.f32.mrb[0].mxu0
        %3284 = vdwg.mxu0
        %v3285 = vadd.f32 %v3201, %v3255
        %v3286 = vadd.f32 %v3202, %v3258
        %v3287 = vadd.f32 %v3203, %v3263
        %v3288 = vadd.f32 %v3204, %v3266
        %v3289 = vadd.f32 %v3205, %v3271
        %v3290 = vadd.f32 %v3206, %v3274
        %v3291 = vadd.f32 %v3207, %v3279
        %v3292 = vadd.f32 %v3208, %v3282
        %v3294 = vshrl.u32 %v2436, 16
        %v3296 = vrot.slane %v3294, 4
        %v3297 = vshll.u32 %v2436, 16
        %v3299 = vrot.slane %v3297, 5
        %v3300 = vor.u32 %v3296, %v3299
        %v3301 = vrot.slane %v3300, 4
        %v3303 = vshll.u32 %v2437, 16
        %v3305 = vrot.slane %v3303, 5
        %v3306 = vsel %vm330, %v3301, %v3305
        %s3307 = scalar_lea.vmem %s3, 50
        %v3308 = vld [vmem:[%s3307] sm:$0x3]
        %v3309 = vunpack.c.l.b16 %v3306
        %v3310 = vpack.c.b16 %v3309, %v3016
        %v3312 = vsel %vm457, %v3310, 0
        %v3315 = vsel %vm470, %v3308, 0
        %3317 = vmatprep.subr.bf16.mxu0 0
        %3318 = vmatpush1.bf16.msra.mxu0 %v3315
        %3319 = vmatprep.subr.bf16.mxu0 0
        %3320 = vmatpush1.bf16.msra.mxu0 0
        %3321 = vmatprep.subr.bf16.mxu0 0
        %3322 = vmatpush1.bf16.msra.mxu0 0
        %3323 = vmatprep.subr.bf16.mxu0 0
        %3324 = vmatpush1.bf16.msra.mxu0 0
        %3325 = vmatprep.subr.bf16.mxu0 0
        %3326 = vmatpush1.bf16.msra.mxu0 0
        %3327 = vmatprep.subr.bf16.mxu0 0
        %3328 = vmatpush1.bf16.msra.mxu0 0
        %3329 = vmatprep.subr.bf16.mxu0 0
        %3330 = vmatpush1.bf16.msra.mxu0 0
        %3331 = vmatprep.subr.bf16.mxu0 0
        %3332 = vmatpush1.bf16.msra.mxu0 0
        %3333 = vmatprep.subr.bf16.mxu0 0
        %3334 = vmatpush1.bf16.msra.mxu0 0
        %3335 = vmatprep.subr.bf16.mxu0 0
        %3336 = vmatpush1.bf16.msra.mxu0 0
        %3337 = vmatprep.subr.bf16.mxu0 0
        %3338 = vmatpush1.bf16.msra.mxu0 0
        %3339 = vmatprep.subr.bf16.mxu0 0
        %3340 = vmatpush1.bf16.msra.mxu0 0
        %3341 = vmatprep.subr.bf16.mxu0 0
        %3342 = vmatpush1.bf16.msra.mxu0 0
        %3343 = vmatprep.subr.bf16.mxu0 0
        %3344 = vmatpush1.bf16.msra.mxu0 0
        %3345 = vmatprep.subr.bf16.mxu0 0
        %3346 = vmatpush1.bf16.msra.mxu0 0
        %3347 = vmatprep.subr.bf16.mxu0 0
        %3348 = vmatpush1.bf16.msra.mxu0 0
        %3349 = vmatprep.mubr.bf16.mxu0 0
        %3350 = vmatmul.mubr.bf16.gmra.mrb[0].mxu0 %v2678
        %v3351 = vpop.f32.mrb[0].mxu0
        %v3352 = vadd.f32 0.0, %v3351
        %v3353 = vpop.f32.mrb[0].mxu0
        %v3354 = vpop.f32.mrb[0].mxu0
        %v3355 = vadd.f32 0.0, %v3354
        %v3356 = vpop.f32.mrb[0].mxu0
        %3357 = vmatprep.mubr.bf16.mxu0 0
        %3358 = vmatmul.mubr.bf16.gmra.mrb[0].mxu0 %v2681
        %v3359 = vpop.f32.mrb[0].mxu0
        %v3360 = vadd.f32 0.0, %v3359
        %v3361 = vpop.f32.mrb[0].mxu0
        %v3362 = vpop.f32.mrb[0].mxu0
        %v3363 = vadd.f32 0.0, %v3362
        %v3364 = vpop.f32.mrb[0].mxu0
        %3365 = vmatprep.mubr.bf16.mxu0 0
        %3366 = vmatmul.mubr.bf16.gmra.mrb[0].mxu0 %v2684
        %v3367 = vpop.f32.mrb[0].mxu0
        %v3368 = vadd.f32 0.0, %v3367
        %v3369 = vpop.f32.mrb[0].mxu0
        %v3370 = vpop.f32.mrb[0].mxu0
        %v3371 = vadd.f32 0.0, %v3370
        %v3372 = vpop.f32.mrb[0].mxu0
        %3373 = vmatprep.mubr.bf16.mxu0 0
        %3374 = vmatmul.mubr.bf16.gmra.mrb[0].mxu0 %v3312
        %v3375 = vpop.f32.mrb[0].mxu0
        %v3376 = vadd.f32 0.0, %v3375
        %v3377 = vpop.f32.mrb[0].mxu0
        %v3378 = vpop.f32.mrb[0].mxu0
        %v3379 = vadd.f32 0.0, %v3378
        %v3380 = vpop.f32.mrb[0].mxu0
        %3381 = vdwg.mxu0
        %v3382 = vadd.f32 %v3285, %v3352
        %v3383 = vadd.f32 %v3286, %v3355
        %v3384 = vadd.f32 %v3287, %v3360
        %v3385 = vadd.f32 %v3288, %v3363
        %v3386 = vadd.f32 %v3289, %v3368
        %v3387 = vadd.f32 %v3290, %v3371
        %v3388 = vadd.f32 %v3291, %v3376
        %v3389 = vadd.f32 %v3292, %v3379
        %v3391 = vrot.slane %v2436, 5
        %v3392 = vrot.slane %v3391, 4
        %v3393 = vrot.slane %v2437, 5
        %v3394 = vsel %vm649, %v3392, %v3393
        %s3395 = scalar_lea.vmem %s3, 52
        %v3396 = vld [vmem:[%s3395] sm:$0x3]
        %v3397 = vunpack.c.l.b16 %v3394
        %v3398 = vpack.c.b16 %v3397, %v3116
        %v3400 = vsel %vm457, %v3398, 0
        %v3403 = vsel %vm470, %v3396, 0
        %3405 = vmatprep.subr.bf16.mxu0 0
        %3406 = vmatpush1.bf16.msra.mxu0 %v3403
        %3407 = vmatprep.subr.bf16.mxu0 0
        %3408 = vmatpush1.bf16.msra.mxu0 0
        %3409 = vmatprep.subr.bf16.mxu0 0
        %3410 = vmatpush1.bf16.msra.mxu0 0
        %3411 = vmatprep.subr.bf16.mxu0 0
        %3412 = vmatpush1.bf16.msra.mxu0 0
        %3413 = vmatprep.subr.bf16.mxu0 0
        %3414 = vmatpush1.bf16.msra.mxu0 0
        %3415 = vmatprep.subr.bf16.mxu0 0
        %3416 = vmatpush1.bf16.msra.mxu0 0
        %3417 = vmatprep.subr.bf16.mxu0 0
        %3418 = vmatpush1.bf16.msra.mxu0 0
        %3419 = vmatprep.subr.bf16.mxu0 0
        %3420 = vmatpush1.bf16.msra.mxu0 0
        %3421 = vmatprep.subr.bf16.mxu0 0
        %3422 = vmatpush1.bf16.msra.mxu0 0
        %3423 = vmatprep.subr.bf16.mxu0 0
        %3424 = vmatpush1.bf16.msra.mxu0 0
        %3425 = vmatprep.subr.bf16.mxu0 0
        %3426 = vmatpush1.bf16.msra.mxu0 0
        %3427 = vmatprep.subr.bf16.mxu0 0
        %3428 = vmatpush1.bf16.msra.mxu0 0
        %3429 = vmatprep.subr.bf16.mxu0 0
        %3430 = vmatpush1.bf16.msra.mxu0 0
        %3431 = vmatprep.subr.bf16.mxu0 0
        %3432 = vmatpush1.bf16.msra.mxu0 0
        %3433 = vmatprep.subr.bf16.mxu0 0
        %3434 = vmatpush1.bf16.msra.mxu0 0
        %3435 = vmatprep.subr.bf16.mxu0 0
        %3436 = vmatpush1.bf16.msra.mxu0 0
        %3437 = vmatprep.mubr.bf16.mxu0 0
        %3438 = vmatmul.mubr.bf16.gmra.mrb[0].mxu0 %v2820
        %v3439 = vpop.f32.mrb[0].mxu0
        %v3440 = vadd.f32 0.0, %v3439
        %v3441 = vpop.f32.mrb[0].mxu0
        %v3442 = vpop.f32.mrb[0].mxu0
        %v3443 = vadd.f32 0.0, %v3442
        %v3444 = vpop.f32.mrb[0].mxu0
        %3445 = vmatprep.mubr.bf16.mxu0 0
        %3446 = vmatmul.mubr.bf16.gmra.mrb[0].mxu0 %v2823
        %v3447 = vpop.f32.mrb[0].mxu0
        %v3448 = vadd.f32 0.0, %v3447
        %v3449 = vpop.f32.mrb[0].mxu0
        %v3450 = vpop.f32.mrb[0].mxu0
        %v3451 = vadd.f32 0.0, %v3450
        %v3452 = vpop.f32.mrb[0].mxu0
        %3453 = vmatprep.mubr.bf16.mxu0 0
        %3454 = vmatmul.mubr.bf16.gmra.mrb[0].mxu0 %v2826
        %v3455 = vpop.f32.mrb[0].mxu0
        %v3456 = vadd.f32 0.0, %v3455
        %v3457 = vpop.f32.mrb[0].mxu0
        %v3458 = vpop.f32.mrb[0].mxu0
        %v3459 = vadd.f32 0.0, %v3458
        %v3460 = vpop.f32.mrb[0].mxu0
        %3461 = vmatprep.mubr.bf16.mxu0 0
        %3462 = vmatmul.mubr.bf16.gmra.mrb[0].mxu0 %v3400
        %v3463 = vpop.f32.mrb[0].mxu0
        %v3464 = vadd.f32 0.0, %v3463
        %v3465 = vpop.f32.mrb[0].mxu0
        %v3466 = vpop.f32.mrb[0].mxu0
        %v3467 = vadd.f32 0.0, %v3466
        %v3468 = vpop.f32.mrb[0].mxu0
        %3469 = vdwg.mxu0
        %v3470 = vadd.f32 %v3382, %v3440
        %v3471 = vadd.f32 %v3383, %v3443
        %v3472 = vadd.f32 %v3384, %v3448
        %v3473 = vadd.f32 %v3385, %v3451
        %v3474 = vadd.f32 %v3386, %v3456
        %v3475 = vadd.f32 %v3387, %v3459
        %v3476 = vadd.f32 %v3388, %v3464
        %v3477 = vadd.f32 %v3389, %v3467
        %vm3478 = vcmask 64512
        %3479 = vst.msk [vmem:[%s274] sm:$0xff] %vm3478, %v3470
        %3480 = vst.msk [vmem:[%s274 + $0x8] sm:$0xff] %vm3478, %v3471
        %3481 = vst.msk [vmem:[%s274 + $0x10] sm:$0xff] %vm3478, %v3472
        %3482 = vst.msk [vmem:[%s274 + $0x18] sm:$0xff] %vm3478, %v3473
        %3483 = vst.msk [vmem:[%s274 + $0x20] sm:$0xff] %vm3478, %v3474
        %3484 = vst.msk [vmem:[%s274 + $0x28] sm:$0xff] %vm3478, %v3475
        %3485 = vst.msk [vmem:[%s274 + $0x30] sm:$0xff] %vm3478, %v3476
        %3486 = vst.msk [vmem:[%s274 + $0x38] sm:$0xff] %vm3478, %v3477
        %s3487 = sand.u32 %s149, 1
        %s3488 = scalar_lea.sflag [#allocation3], %s3487
        %s3489 = sand.u32 %s149, 1
        %s3490 = smul.addr %s3489, 64
        %s3491 = scalar_lea.vmem [#allocation2], %s3490
        // Predicated region
        $region37: #{conv3d_same.1} parent=35 // pred_check
          %p3492 = pneg %p159
        $region38: #{conv3d_same.1} parent=35 // pred_check_branch
          %3494 = sbr.rel (%p3492) target = $region40
        $region39: #{conv3d_same.1} parent=35 // pred_region
          %s3496 = ssub.s32 1024, 1024
          %3497 = vsyncadd %s3488, %s3496
          %s3498 = smul.addr %s23, 8
          %s3499 = smul.addr %s22, 64
          %s3500 = sadd.s32 %s3498, %s3499
          %s3501 = smul.addr %s3500, 128
          %s3502 = scalar_lea.hbm %s4, %s3501
          %s3503 = sshll.u32 %s3491, 4
          %s3504 = int_to_ptr.vmem [resolvable:$true] %s3503
          %3509 = dma.vmem_to_hbm [thread:$0]  %s3504, 1024, %s3502, %s3488, 128, 128, 8
        $region40: #{conv3d_same.1} parent=35 // pred_fallthru
          _
      $region36: #{conv3d_same.1} parent=5 // pred_fallthru
        _
      %p3510 = scmp.le.s32.totalorder 2, %s13
      // Predicated region
      $region41: #{conv3d_same.1} parent=5 // pred_check
        %p3511 = pneg %p3510
      $region42: #{conv3d_same.1} parent=5 // pred_check_branch
        %3513 = sbr.rel (%p3511) target = $region44
      $region43: #{conv3d_same.1} parent=5 // pred_region
        %s3514 = ssub.s32 %s13, 2
        // Predicated region
        $region45: #{conv3d_same.1} parent=43 // pred_check
          %p3515 = pneg %p165
        $region46: #{conv3d_same.1} parent=43 // pred_check_branch
          %3517 = sbr.rel (%p3515) target = $region48
        $region47: #{conv3d_same.1} parent=43 // pred_region
          %s3518 = sand.u32 %s150, 1
          %s3519 = scalar_lea.sflag [#allocation3], %s3518
          %s3520 = sand.u32 %s150, 1
          %s3521 = smul.addr %s3520, 64
          %s3522 = scalar_lea.vmem [#allocation2], %s3521
          %3523 = dma.done %s3519, 1024
        $region48: #{conv3d_same.1} parent=43 // pred_fallthru
          _
      $region44: #{conv3d_same.1} parent=5 // pred_fallthru
        _
    $region6: #{conv3d_same.1} parent=1 // loop_footer
      %s17 = sadd.s32 1, %s13
    $region7: #{conv3d_same.1} parent=1 // loop_footer_branch
      %12 = sbr.rel target = $region3
    $region8: #{conv3d_same.1} parent=1 // loop_exit
      _
    %3524 = vsyncpa [#allocation3], 1
    %s3525 = scalar_lea.sflag [#allocation3], 1
    %3526 = vsyncpa %s3525, 1

</llo_original>
